<compile_context>
chip_gen: v7x
topology: tpu7x:2x2x1
jax: 0.10.0
libtpu: 0.0.40
codegen_flags: <defaults>
</compile_context>

<pallas_src>
import functools

import jax
import jax.numpy as jnp
from jax import lax
from jax.experimental import pallas as pl
from jax.experimental.pallas import tpu as pltpu


# ------------------------------------------------------------------
# Pallas kernel: grid = (batch, HW tile).  Pixel branch + logits + softmax.
# ------------------------------------------------------------------
def _prr_kernel(x_ref, key_ref, w1_ref, b1_ref, w2_ref, b2_ref, mask_ref,
                o_ref, *, inv_sqrt_kc):
    # Pixel tile arrives channels-major (C, TQ) straight from the NCHW input;
    # the f32 -> bf16 cast happens in-register (no wrapper-side cast pass).
    x = x_ref[0].astype(jnp.bfloat16)                                  # (C, TQ)

    # 1x1 conv == matmul over channels (BN scale already folded into w).
    # Contract dim 0 (channels) of the tile against dim 0 of the weight
    # directly -> no materialized transpose; MXU handles either orientation.
    h = lax.dot_general(x, w1_ref[...],
                        dimension_numbers=(((0,), (0,)), ((), ())),
                        preferred_element_type=jnp.float32)            # (TQ, kc)
    h = jnp.maximum(h + b1_ref[...], 0.0)
    h = jnp.dot(h.astype(jnp.bfloat16), w2_ref[...],
                preferred_element_type=jnp.float32)                    # (TQ, kc)
    q = jnp.maximum(h + b2_ref[...], 0.0).astype(jnp.bfloat16)

    # Relation logits against the precomputed key features (contract last
    # dims, no transpose), then the additive class-padding mask (-1e30 on
    # padded lanes, 0 on real classes).
    logits = lax.dot_general(q, key_ref[0],
                             dimension_numbers=(((1,), (1,)), ((), ())),
                             preferred_element_type=jnp.float32)       # (TQ, K_pad)
    logits = logits * inv_sqrt_kc + mask_ref[...]

    m = jnp.max(logits, axis=-1, keepdims=True)
    e = jnp.exp(logits - m)
    denom = jnp.sum(e, axis=-1, keepdims=True)
    # approx reciprocal runs on the EUP slot; rows sum to 1 only to ~1e-3.
    o_ref[0] = (e * pl.reciprocal(denom, approx=True)).astype(o_ref.dtype)


# ------------------------------------------------------------------
# Wrapper helpers.
# ------------------------------------------------------------------
def _key_branch(r, w1, b1, w2, b2):
    """Region/key branch in plain JAX (tiny: (B, K, C) work)."""
    h = jnp.dot(r.astype(jnp.bfloat16), w1, preferred_element_type=jnp.float32)
    h = jnp.maximum(h + b1, 0.0)
    h = jnp.dot(h.astype(jnp.bfloat16), w2, preferred_element_type=jnp.float32)
    return jnp.maximum(h + b2, 0.0)


def _choose_tile(hw, target):
    """Spatial tile: full HW if small, else a multiple-of-128 tile."""
    target = max(128, (target // 128) * 128)
    if hw <= target:
        return hw, 1
    return target, pl.cdiv(hw, target)


def _vmem_limit_bytes(C, TQ, kc, K_pad, out_itemsize):
    """Scoped-VMEM limit from the actual tile footprint (capped for v7x)."""
    x_tile = 2 * C * TQ * 4                      # double-buffered f32 pixel tile
    out_tile = 2 * TQ * K_pad * out_itemsize     # double-buffered output tile
    consts = (C * kc + kc * kc + K_pad * kc) * 2 + 2 * kc * 4 + K_pad * 4
    interm = TQ * kc * 4 * 2 + TQ * K_pad * 4 * 2  # f32 intermediates / logits
    want = 2 * (x_tile + out_tile + consts + interm)
    return int(min(max(want, 16 * 1024 * 1024), 48 * 1024 * 1024))


def pixel_region_relation(pixel_rep_nchw, obj_reg_rep_nck1, params, key_channels,
                          *, tq_target=1024, out_dtype=jnp.bfloat16,
                          trim_output=True):
    """pixel_rep: (B, C, H, W); obj_reg_rep: (B, C, K, 1) -> (B, H*W, K)."""
    B, C, H, W = pixel_rep_nchw.shape
    _, _, K, _ = obj_reg_rep_nck1.shape
    HW = H * W
    kc = key_channels
    K_pad = ((max(K, 1) + 127) // 128) * 128      # lane-dense output stores

    TQ, num_tiles = _choose_tile(HW, tq_target)

    (w1p, s1p, b1p, w2p, s2p, b2p,
     w1r, s1r, b1r, w2r, s2r, b2r) = params

    # Fold BN scale into the conv weight columns; keep only the bias (f32).
    w1p = (w1p * s1p).astype(jnp.bfloat16)
    w2p = (w2p * s2p).astype(jnp.bfloat16)
    b1p = b1p.astype(jnp.float32)
    b2p = b2p.astype(jnp.float32)

    # Key / region branch hoisted out of the kernel (tiny), padded & bf16.
    r = jnp.transpose(obj_reg_rep_nck1[..., 0], (0, 2, 1))            # (B, K, C)
    key = _key_branch(r,
                      (w1r * s1r).astype(jnp.bfloat16), b1r.astype(jnp.float32),
                      (w2r * s2r).astype(jnp.bfloat16), b2r.astype(jnp.float32))
    key = jnp.pad(key, ((0, 0), (0, K_pad - K), (0, 0))).astype(jnp.bfloat16)

    # Additive class mask row: 0 for real classes, -1e30 on lane padding.
    mask = jnp.where(jnp.arange(K_pad) < K, 0.0, -1e30)
    mask = mask.astype(jnp.float32).reshape(1, K_pad)

    # Pixel input stays in its native NCHW layout; (B,C,H,W)->(B,C,HW) is a
    # free reshape.  No transpose / pad / cast pass over the big activation.
    x = pixel_rep_nchw.reshape(B, C, HW)

    kernel = functools.partial(_prr_kernel, inv_sqrt_kc=float(kc) ** -0.5)

    def build(single_buffer_consts):
        def const_spec(shape):
            idx = lambda b, t: (0,) * len(shape)
            if single_buffer_consts:
                # Constant-index operands never change block index;
                # single-buffering them recovers VMEM headroom (v7x).
                return pl.BlockSpec(shape, idx, pipeline_mode=pl.Buffered(1))
            return pl.BlockSpec(shape, idx)

        return pl.pallas_call(
            kernel,
            out_shape=jax.ShapeDtypeStruct((B, HW, K_pad), out_dtype),
            grid_spec=pltpu.PrefetchScalarGridSpec(
                num_scalar_prefetch=0,
                grid=(B, num_tiles),
                in_specs=[
                    pl.BlockSpec((1, C, TQ), lambda b, t: (b, 0, t)),      # pixels
                    pl.BlockSpec((1, K_pad, kc), lambda b, t: (b, 0, 0)),  # key feats
                    const_spec((C, kc)), const_spec((1, kc)),              # stage 1
                    const_spec((kc, kc)), const_spec((1, kc)),             # stage 2
                    const_spec((1, K_pad)),                                # class mask
                ],
                out_specs=pl.BlockSpec((1, TQ, K_pad), lambda b, t: (b, t, 0)),
            ),
            compiler_params=pltpu.CompilerParams(
                # No cross-tile state -> both axes parallel (v7x 2-TC sharding).
                dimension_semantics=("parallel", "parallel"),
                vmem_limit_bytes=_vmem_limit_bytes(
                    C, TQ, kc, K_pad, jnp.dtype(out_dtype).itemsize),
            ),
        )

    try:
        out = build(True)(x, key, w1p, b1p, w2p, b2p, mask)
    except Exception:
        # Fallback for jax versions without BlockSpec(pipeline_mode=...)
        # or single-buffer support; functionally identical.
        out = build(False)(x, key, w1p, b1p, w2p, b2p, mask)

    if trim_output:
        # TODO(synk): fuse the downstream OCRNet step (sim_map @ region feats)
        # into this kernel so the (B, HW, K) map / this slice never hits HBM;
        # consumers that can read a padded buffer should pass trim_output=False.
        return out[:, :, :K]
    return out  # (B, HW, K_pad); columns >= K are padding.


# ------------------------------------------------------------------
# Deterministic parameter construction (conv weights + BN scale/bias).
# BN is folded in inference form (running statistics).
# ------------------------------------------------------------------
def make_branch_params(key, in_channels, key_channels, eps=1e-5):
    ks = jax.random.split(key, 10)

    def fold_bn(kg, kb, km, kv, ch):
        gamma = jax.random.uniform(kg, (ch,), minval=0.5, maxval=1.5)
        beta = 0.1 * jax.random.normal(kb, (ch,))
        rmean = 0.1 * jax.random.normal(km, (ch,))
        rvar = jax.random.uniform(kv, (ch,), minval=0.5, maxval=1.5)
        scale = gamma / jnp.sqrt(rvar + eps)
        bias = beta - rmean * scale
        return (scale.reshape(1, ch).astype(jnp.float32),
                bias.reshape(1, ch).astype(jnp.float32))

    # conv weights stored already-transposed: (in, out), so y = x @ W
    w1 = (0.1 * jax.random.normal(ks[0], (in_channels, key_channels))).astype(jnp.float32)
    s1, b1 = fold_bn(ks[1], ks[2], ks[3], ks[4], key_channels)
    w2 = (0.1 * jax.random.normal(ks[5], (key_channels, key_channels))).astype(jnp.float32)
    s2, b2 = fold_bn(ks[6], ks[7], ks[8], ks[9], key_channels)
    return w1, s1, b1, w2, s2, b2


# ------------------------------------------------------------------
# Plain-JAX reference with the same bf16-matmul / f32-accumulate recipe.
# ------------------------------------------------------------------
def reference(pixel_rep, obj_reg_rep, params, key_channels):
    B, C, H, W = pixel_rep.shape
    x = jnp.transpose(pixel_rep, (0, 2, 3, 1)).reshape(B, H * W, C)
    r = jnp.transpose(obj_reg_rep[..., 0], (0, 2, 1))
    (w1p, s1p, b1p, w2p, s2p, b2p, w1r, s1r, b1r, w2r, s2r, b2r) = params

    def branch(t, w1, s1, b1, w2, s2, b2):
        w1 = (w1 * s1).astype(jnp.bfloat16)
        w2 = (w2 * s2).astype(jnp.bfloat16)
        h = jnp.dot(t.astype(jnp.bfloat16), w1, preferred_element_type=jnp.float32)
        h = jnp.maximum(h + b1, 0.0)
        h = jnp.dot(h.astype(jnp.bfloat16), w2, preferred_element_type=jnp.float32)
        return jnp.maximum(h + b2, 0.0)

    q = branch(x, w1p, s1p, b1p, w2p, s2p, b2p).astype(jnp.bfloat16)
    k = branch(r, w1r, s1r, b1r, w2r, s2r, b2r).astype(jnp.bfloat16)
    logits = jnp.einsum("bqc,bkc->bqk", q, k,
                        preferred_element_type=jnp.float32) * (key_channels ** -0.5)
    return jax.nn.softmax(logits, axis=-1)


if __name__ == "__main__":
    # Small shapes consistent with the module's forward.
    B, C_in, KC, H, W, NUM_CLASSES = 2, 32, 32, 16, 16, 8

    root = jax.random.PRNGKey(0)
    k_x, k_r, k_pix, k_reg = jax.random.split(root, 4)

    pixel_rep = jax.random.normal(k_x, (B, C_in, H, W), dtype=jnp.float32)
    obj_reg_rep = jax.random.normal(k_r, (B, C_in, NUM_CLASSES, 1), dtype=jnp.float32)

    params = make_branch_params(k_pix, C_in, KC) + make_branch_params(k_reg, C_in, KC)

    out = pixel_region_relation(pixel_rep, obj_reg_rep, params, KC)
    out = jax.block_until_ready(out)

    ref = reference(pixel_rep, obj_reg_rep, params, KC)
    assert out.shape == (B, H * W, NUM_CLASSES)
    out_f32 = out.astype(jnp.float32)
    # bf16 matmuls in both paths; kernel adds approx-reciprocal softmax + bf16 store.
    assert jnp.allclose(out_f32, ref, atol=1e-2, rtol=1e-2)
    # rows of the relation matrix sum to ~1 after softmax
    assert jnp.allclose(jnp.sum(out_f32, axis=-1), 1.0, atol=3e-2)

    print("KERNEL_OK")
</pallas_src>

<mosaic_0001>
module attributes {stable_mosaic.version = 11 : i64} {
  func.func @_prr_kernel(%arg0: i32, %arg1: i32, %arg2: memref<1x32x256xf32, #tpu.memory_space<vmem>>, %arg3: memref<1x128x32xbf16, #tpu.memory_space<vmem>>, %arg4: memref<32x32xbf16, #tpu.memory_space<vmem>>, %arg5: memref<1x32xf32, #tpu.memory_space<vmem>>, %arg6: memref<32x32xbf16, #tpu.memory_space<vmem>>, %arg7: memref<1x32xf32, #tpu.memory_space<vmem>>, %arg8: memref<1x128xf32, #tpu.memory_space<vmem>>, %arg9: memref<1x256x128xbf16, #tpu.memory_space<vmem>>) attributes {dimension_semantics = [#tpu.dimension_semantics<parallel>, #tpu.dimension_semantics<parallel>], iteration_bounds = array<i64: 2, 1>, scalar_prefetch = 0 : i64, scratch_operands = 0 : i64, tpu.core_type = #tpu.core_type<tc>, window_params = [{transform_indices = @transform_0, window_bounds = array<i64: 1, 32, 256>}, {transform_indices = @transform_1, window_bounds = array<i64: 1, 128, 32>}, {pipeline_mode = #tpu.pipeline_mode<synchronous>, transform_indices = @transform_2, window_bounds = array<i64: 32, 32>}, {pipeline_mode = #tpu.pipeline_mode<synchronous>, transform_indices = @transform_3, window_bounds = array<i64: 1, 32>}, {pipeline_mode = #tpu.pipeline_mode<synchronous>, transform_indices = @transform_4, window_bounds = array<i64: 32, 32>}, {pipeline_mode = #tpu.pipeline_mode<synchronous>, transform_indices = @transform_5, window_bounds = array<i64: 1, 32>}, {pipeline_mode = #tpu.pipeline_mode<synchronous>, transform_indices = @transform_6, window_bounds = array<i64: 1, 128>}, {transform_indices = @transform_7, window_bounds = array<i64: 1, 256, 128>}]} {
    %c0 = arith.constant 0 : index
    %c0_0 = arith.constant 0 : index
    %c0_1 = arith.constant 0 : index
    %0 = vector.load %arg2[%c0, %c0_0, %c0_1] : memref<1x32x256xf32, #tpu.memory_space<vmem>>, vector<1x32x256xf32>
    %1 = vector.shape_cast %0 : vector<1x32x256xf32> to vector<32x256xf32>
    %2 = arith.truncf %1 : vector<32x256xf32> to vector<32x256xbf16>
    %c0_2 = arith.constant 0 : index
    %c0_3 = arith.constant 0 : index
    %3 = vector.load %arg4[%c0_2, %c0_3] : memref<32x32xbf16, #tpu.memory_space<vmem>>, vector<32x32xbf16>
    %cst = arith.constant dense<0.000000e+00> : vector<256x32xf32>
    %4 = tpu.matmul %2, %3, %cst {dimension_numbers = #tpu.dot_dimension_numbers<[0], [0], [1], [1], [0, 1, 1, 1], [], []>} : vector<32x256xbf16>, vector<32x32xbf16>, vector<256x32xf32> -> vector<256x32xf32>
    %c0_4 = arith.constant 0 : index
    %c0_5 = arith.constant 0 : index
    %5 = vector.load %arg5[%c0_4, %c0_5] : memref<1x32xf32, #tpu.memory_space<vmem>>, vector<1x32xf32>
    %6 = vector.broadcast %5 : vector<1x32xf32> to vector<256x32xf32>
    %7 = arith.addf %4, %6 : vector<256x32xf32>
    %cst_6 = arith.constant 0.000000e+00 : f32
    %8 = vector.broadcast %cst_6 : f32 to vector<256x32xf32>
    %9 = arith.maximumf %7, %8 : vector<256x32xf32>
    %10 = arith.truncf %9 : vector<256x32xf32> to vector<256x32xbf16>
    %c0_7 = arith.constant 0 : index
    %c0_8 = arith.constant 0 : index
    %11 = vector.load %arg6[%c0_7, %c0_8] : memref<32x32xbf16, #tpu.memory_space<vmem>>, vector<32x32xbf16>
    %cst_9 = arith.constant dense<0.000000e+00> : vector<256x32xf32>
    %12 = tpu.matmul %10, %11, %cst_9 {dimension_numbers = #tpu.dot_dimension_numbers<[1], [0], [0], [1], [0, 0, 1, 1], [], []>} : vector<256x32xbf16>, vector<32x32xbf16>, vector<256x32xf32> -> vector<256x32xf32>
    %c0_10 = arith.constant 0 : index
    %c0_11 = arith.constant 0 : index
    %13 = vector.load %arg7[%c0_10, %c0_11] : memref<1x32xf32, #tpu.memory_space<vmem>>, vector<1x32xf32>
    %14 = vector.broadcast %13 : vector<1x32xf32> to vector<256x32xf32>
    %15 = arith.addf %12, %14 : vector<256x32xf32>
    %cst_12 = arith.constant 0.000000e+00 : f32
    %16 = vector.broadcast %cst_12 : f32 to vector<256x32xf32>
    %17 = arith.maximumf %15, %16 : vector<256x32xf32>
    %18 = arith.truncf %17 : vector<256x32xf32> to vector<256x32xbf16>
    %c0_13 = arith.constant 0 : index
    %c0_14 = arith.constant 0 : index
    %c0_15 = arith.constant 0 : index
    %19 = vector.load %arg3[%c0_13, %c0_14, %c0_15] : memref<1x128x32xbf16, #tpu.memory_space<vmem>>, vector<1x128x32xbf16>
    %20 = vector.shape_cast %19 : vector<1x128x32xbf16> to vector<128x32xbf16>
    %cst_16 = arith.constant dense<0.000000e+00> : vector<256x128xf32>
    %21 = tpu.matmul %18, %20, %cst_16 {dimension_numbers = #tpu.dot_dimension_numbers<[1], [1], [0], [0], [0, 0, 1, 0], [], []>} : vector<256x32xbf16>, vector<128x32xbf16>, vector<256x128xf32> -> vector<256x128xf32>
    %cst_17 = arith.constant 0.176776692 : f32
    %22 = vector.broadcast %cst_17 : f32 to vector<256x128xf32>
    %23 = arith.mulf %21, %22 : vector<256x128xf32>
    %c0_18 = arith.constant 0 : index
    %c0_19 = arith.constant 0 : index
    %24 = vector.load %arg8[%c0_18, %c0_19] : memref<1x128xf32, #tpu.memory_space<vmem>>, vector<1x128xf32>
    %25 = vector.broadcast %24 : vector<1x128xf32> to vector<256x128xf32>
    %26 = arith.addf %23, %25 : vector<256x128xf32>
    %cst_20 = arith.constant dense<0xFF800000> : vector<256xf32>
    %27 = vector.multi_reduction <maximumf>, %26, %cst_20 [1] : vector<256x128xf32> to vector<256xf32>
    %28 = vector.shape_cast %27 : vector<256xf32> to vector<256x1xf32>
    %29 = vector.broadcast %28 : vector<256x1xf32> to vector<256x128xf32>
    %30 = arith.subf %26, %29 : vector<256x128xf32>
    %31 = math.exp %30 : vector<256x128xf32>
    %cst_21 = arith.constant dense<0.000000e+00> : vector<256xf32>
    %32 = vector.multi_reduction <add>, %31, %cst_21 [1] : vector<256x128xf32> to vector<256xf32>
    %33 = vector.shape_cast %32 : vector<256xf32> to vector<256x1xf32>
    %34 = tpu.reciprocal %33 {approx = true} : vector<256x1xf32> -> vector<256x1xf32>
    %35 = vector.broadcast %34 : vector<256x1xf32> to vector<256x128xf32>
    %36 = arith.mulf %31, %35 : vector<256x128xf32>
    %37 = arith.truncf %36 : vector<256x128xf32> to vector<256x128xbf16>
    %c0_22 = arith.constant 0 : index
    %c0_23 = arith.constant 0 : index
    %c0_24 = arith.constant 0 : index
    %38 = vector.load %arg9[%c0_22, %c0_23, %c0_24] : memref<1x256x128xbf16, #tpu.memory_space<vmem>>, vector<1x256x128xbf16>
    %39 = vector.shape_cast %38 : vector<1x256x128xbf16> to vector<256x128xbf16>
    %40 = vector.shape_cast %37 : vector<256x128xbf16> to vector<1x256x128xbf16>
    tpu.vector_store %arg9[%c0_22, %c0_23, %c0_24], %40 {strides = array<i32>} : memref<1x256x128xbf16, #tpu.memory_space<vmem>>, vector<1x256x128xbf16>,
    return
  }
  func.func @transform_0(%arg0: i32, %arg1: i32) -> (i32, i32, i32) {
    %c0_i32 = arith.constant 0 : i32
    %c0_i32_0 = arith.constant 0 : i32
    return %arg0, %c0_i32, %arg1 : i32, i32, i32
  }
  func.func @transform_1(%arg0: i32, %arg1: i32) -> (i32, i32, i32) {
    %c0_i32 = arith.constant 0 : i32
    %c0_i32_0 = arith.constant 0 : i32
    %c0_i32_1 = arith.constant 0 : i32
    return %arg0, %c0_i32, %c0_i32_0 : i32, i32, i32
  }
  func.func @transform_2(%arg0: i32, %arg1: i32) -> (i32, i32) {
    %c0_i32 = arith.constant 0 : i32
    %c0_i32_0 = arith.constant 0 : i32
    %c0_i32_1 = arith.constant 0 : i32
    return %c0_i32, %c0_i32_0 : i32, i32
  }
  func.func @transform_3(%arg0: i32, %arg1: i32) -> (i32, i32) {
    %c0_i32 = arith.constant 0 : i32
    %c0_i32_0 = arith.constant 0 : i32
    %c0_i32_1 = arith.constant 0 : i32
    return %c0_i32, %c0_i32_0 : i32, i32
  }
  func.func @transform_4(%arg0: i32, %arg1: i32) -> (i32, i32) {
    %c0_i32 = arith.constant 0 : i32
    %c0_i32_0 = arith.constant 0 : i32
    %c0_i32_1 = arith.constant 0 : i32
    return %c0_i32, %c0_i32_0 : i32, i32
  }
  func.func @transform_5(%arg0: i32, %arg1: i32) -> (i32, i32) {
    %c0_i32 = arith.constant 0 : i32
    %c0_i32_0 = arith.constant 0 : i32
    %c0_i32_1 = arith.constant 0 : i32
    return %c0_i32, %c0_i32_0 : i32, i32
  }
  func.func @transform_6(%arg0: i32, %arg1: i32) -> (i32, i32) {
    %c0_i32 = arith.constant 0 : i32
    %c0_i32_0 = arith.constant 0 : i32
    %c0_i32_1 = arith.constant 0 : i32
    return %c0_i32, %c0_i32_0 : i32, i32
  }
  func.func @transform_7(%arg0: i32, %arg1: i32) -> (i32, i32, i32) {
    %c0_i32 = arith.constant 0 : i32
    %c0_i32_0 = arith.constant 0 : i32
    return %arg0, %arg1, %c0_i32 : i32, i32, i32
  }
}

module attributes {stable_mosaic.version = 11 : i64} {
  func.func @_prr_kernel(%arg0: i32, %arg1: i32, %arg2: memref<1x32x256xf32, #tpu.memory_space<vmem>>, %arg3: memref<1x128x32xbf16, #tpu.memory_space<vmem>>, %arg4: memref<32x32xbf16, #tpu.memory_space<vmem>>, %arg5: memref<1x32xf32, #tpu.memory_space<vmem>>, %arg6: memref<32x32xbf16, #tpu.memory_space<vmem>>, %arg7: memref<1x32xf32, #tpu.memory_space<vmem>>, %arg8: memref<1x128xf32, #tpu.memory_space<vmem>>, %arg9: memref<1x256x128xbf16, #tpu.memory_space<vmem>>) attributes {dimension_semantics = [#tpu.dimension_semantics<parallel>, #tpu.dimension_semantics<parallel>], iteration_bounds = array<i64: 2, 1>, scalar_prefetch = 0 : i64, scratch_operands = 0 : i64, tpu.core_type = #tpu.core_type<tc>, window_params = [{transform_indices = @transform_0, window_bounds = array<i64: 1, 32, 256>}, {transform_indices = @transform_1, window_bounds = array<i64: 1, 128, 32>}, {pipeline_mode = #tpu.pipeline_mode<synchronous>, transform_indices = @transform_2, window_bounds = array<i64: 32, 32>}, {pipeline_mode = #tpu.pipeline_mode<synchronous>, transform_indices = @transform_3, window_bounds = array<i64: 1, 32>}, {pipeline_mode = #tpu.pipeline_mode<synchronous>, transform_indices = @transform_4, window_bounds = array<i64: 32, 32>}, {pipeline_mode = #tpu.pipeline_mode<synchronous>, transform_indices = @transform_5, window_bounds = array<i64: 1, 32>}, {pipeline_mode = #tpu.pipeline_mode<synchronous>, transform_indices = @transform_6, window_bounds = array<i64: 1, 128>}, {transform_indices = @transform_7, window_bounds = array<i64: 1, 256, 128>}]} {
    %c0 = arith.constant 0 : index
    %c0_0 = arith.constant 0 : index
    %c0_1 = arith.constant 0 : index
    %0 = vector.load %arg2[%c0, %c0_0, %c0_1] : memref<1x32x256xf32, #tpu.memory_space<vmem>>, vector<1x32x256xf32>
    %1 = vector.shape_cast %0 : vector<1x32x256xf32> to vector<32x256xf32>
    %2 = arith.truncf %1 : vector<32x256xf32> to vector<32x256xbf16>
    %c0_2 = arith.constant 0 : index
    %c0_3 = arith.constant 0 : index
    %3 = vector.load %arg4[%c0_2, %c0_3] : memref<32x32xbf16, #tpu.memory_space<vmem>>, vector<32x32xbf16>
    %cst = arith.constant dense<0.000000e+00> : vector<256x32xf32>
    %4 = tpu.matmul %2, %3, %cst {dimension_numbers = #tpu.dot_dimension_numbers<[0], [0], [1], [1], [0, 1, 1, 1], [], []>} : vector<32x256xbf16>, vector<32x32xbf16>, vector<256x32xf32> -> vector<256x32xf32>
    %c0_4 = arith.constant 0 : index
    %c0_5 = arith.constant 0 : index
    %5 = vector.load %arg5[%c0_4, %c0_5] : memref<1x32xf32, #tpu.memory_space<vmem>>, vector<1x32xf32>
    %6 = vector.broadcast %5 : vector<1x32xf32> to vector<256x32xf32>
    %7 = arith.addf %4, %6 : vector<256x32xf32>
    %cst_6 = arith.constant 0.000000e+00 : f32
    %8 = vector.broadcast %cst_6 : f32 to vector<256x32xf32>
    %9 = arith.maximumf %7, %8 : vector<256x32xf32>
    %10 = arith.truncf %9 : vector<256x32xf32> to vector<256x32xbf16>
    %c0_7 = arith.constant 0 : index
    %c0_8 = arith.constant 0 : index
    %11 = vector.load %arg6[%c0_7, %c0_8] : memref<32x32xbf16, #tpu.memory_space<vmem>>, vector<32x32xbf16>
    %cst_9 = arith.constant dense<0.000000e+00> : vector<256x32xf32>
    %12 = tpu.matmul %10, %11, %cst_9 {dimension_numbers = #tpu.dot_dimension_numbers<[1], [0], [0], [1], [0, 0, 1, 1], [], []>} : vector<256x32xbf16>, vector<32x32xbf16>, vector<256x32xf32> -> vector<256x32xf32>
    %c0_10 = arith.constant 0 : index
    %c0_11 = arith.constant 0 : index
    %13 = vector.load %arg7[%c0_10, %c0_11] : memref<1x32xf32, #tpu.memory_space<vmem>>, vector<1x32xf32>
    %14 = vector.broadcast %13 : vector<1x32xf32> to vector<256x32xf32>
    %15 = arith.addf %12, %14 : vector<256x32xf32>
    %cst_12 = arith.constant 0.000000e+00 : f32
    %16 = vector.broadcast %cst_12 : f32 to vector<256x32xf32>
    %17 = arith.maximumf %15, %16 : vector<256x32xf32>
    %18 = arith.truncf %17 : vector<256x32xf32> to vector<256x32xbf16>
    %c0_13 = arith.constant 0 : index
    %c0_14 = arith.constant 0 : index
    %c0_15 = arith.constant 0 : index
    %19 = vector.load %arg3[%c0_13, %c0_14, %c0_15] : memref<1x128x32xbf16, #tpu.memory_space<vmem>>, vector<1x128x32xbf16>
    %20 = vector.shape_cast %19 : vector<1x128x32xbf16> to vector<128x32xbf16>
    %cst_16 = arith.constant dense<0.000000e+00> : vector<256x128xf32>
    %21 = tpu.matmul %18, %20, %cst_16 {dimension_numbers = #tpu.dot_dimension_numbers<[1], [1], [0], [0], [0, 0, 1, 0], [], []>} : vector<256x32xbf16>, vector<128x32xbf16>, vector<256x128xf32> -> vector<256x128xf32>
    %cst_17 = arith.constant 0.176776692 : f32
    %22 = vector.broadcast %cst_17 : f32 to vector<256x128xf32>
    %23 = arith.mulf %21, %22 : vector<256x128xf32>
    %c0_18 = arith.constant 0 : index
    %c0_19 = arith.constant 0 : index
    %24 = vector.load %arg8[%c0_18, %c0_19] : memref<1x128xf32, #tpu.memory_space<vmem>>, vector<1x128xf32>
    %25 = vector.broadcast %24 : vector<1x128xf32> to vector<256x128xf32>
    %26 = arith.addf %23, %25 : vector<256x128xf32>
    %cst_20 = arith.constant dense<0xFF800000> : vector<256xf32>
    %27 = vector.multi_reduction <maximumf>, %26, %cst_20 [1] : vector<256x128xf32> to vector<256xf32>
    %28 = vector.shape_cast %27 : vector<256xf32> to vector<256x1xf32>
    %29 = vector.broadcast %28 : vector<256x1xf32> to vector<256x128xf32>
    %30 = arith.subf %26, %29 : vector<256x128xf32>
    %31 = math.exp %30 : vector<256x128xf32>
    %cst_21 = arith.constant dense<0.000000e+00> : vector<256xf32>
    %32 = vector.multi_reduction <add>, %31, %cst_21 [1] : vector<256x128xf32> to vector<256xf32>
    %33 = vector.shape_cast %32 : vector<256xf32> to vector<256x1xf32>
    %34 = tpu.reciprocal %33 {approx = true} : vector<256x1xf32> -> vector<256x1xf32>
    %35 = vector.broadcast %34 : vector<256x1xf32> to vector<256x128xf32>
    %36 = arith.mulf %31, %35 : vector<256x128xf32>
    %37 = arith.truncf %36 : vector<256x128xf32> to vector<256x128xbf16>
    %c0_22 = arith.constant 0 : index
    %c0_23 = arith.constant 0 : index
    %c0_24 = arith.constant 0 : index
    %38 = vector.load %arg9[%c0_22, %c0_23, %c0_24] : memref<1x256x128xbf16, #tpu.memory_space<vmem>>, vector<1x256x128xbf16>
    %39 = vector.shape_cast %38 : vector<1x256x128xbf16> to vector<256x128xbf16>
    %40 = vector.shape_cast %37 : vector<256x128xbf16> to vector<1x256x128xbf16>
    tpu.vector_store %arg9[%c0_22, %c0_23, %c0_24], %40 {strides = array<i32>} : memref<1x256x128xbf16, #tpu.memory_space<vmem>>, vector<1x256x128xbf16>,
    return
  }
  func.func @transform_0(%arg0: i32, %arg1: i32) -> (i32, i32, i32) {
    %c0_i32 = arith.constant 0 : i32
    %c0_i32_0 = arith.constant 0 : i32
    return %arg0, %c0_i32, %arg1 : i32, i32, i32
  }
  func.func @transform_1(%arg0: i32, %arg1: i32) -> (i32, i32, i32) {
    %c0_i32 = arith.constant 0 : i32
    %c0_i32_0 = arith.constant 0 : i32
    %c0_i32_1 = arith.constant 0 : i32
    return %arg0, %c0_i32, %c0_i32_0 : i32, i32, i32
  }
  func.func @transform_2(%arg0: i32, %arg1: i32) -> (i32, i32) {
    %c0_i32 = arith.constant 0 : i32
    %c0_i32_0 = arith.constant 0 : i32
    %c0_i32_1 = arith.constant 0 : i32
    return %c0_i32, %c0_i32_0 : i32, i32
  }
  func.func @transform_3(%arg0: i32, %arg1: i32) -> (i32, i32) {
    %c0_i32 = arith.constant 0 : i32
    %c0_i32_0 = arith.constant 0 : i32
    %c0_i32_1 = arith.constant 0 : i32
    return %c0_i32, %c0_i32_0 : i32, i32
  }
  func.func @transform_4(%arg0: i32, %arg1: i32) -> (i32, i32) {
    %c0_i32 = arith.constant 0 : i32
    %c0_i32_0 = arith.constant 0 : i32
    %c0_i32_1 = arith.constant 0 : i32
    return %c0_i32, %c0_i32_0 : i32, i32
  }
  func.func @transform_5(%arg0: i32, %arg1: i32) -> (i32, i32) {
    %c0_i32 = arith.constant 0 : i32
    %c0_i32_0 = arith.constant 0 : i32
    %c0_i32_1 = arith.constant 0 : i32
    return %c0_i32, %c0_i32_0 : i32, i32
  }
  func.func @transform_6(%arg0: i32, %arg1: i32) -> (i32, i32) {
    %c0_i32 = arith.constant 0 : i32
    %c0_i32_0 = arith.constant 0 : i32
    %c0_i32_1 = arith.constant 0 : i32
    return %c0_i32, %c0_i32_0 : i32, i32
  }
  func.func @transform_7(%arg0: i32, %arg1: i32) -> (i32, i32, i32) {
    %c0_i32 = arith.constant 0 : i32
    %c0_i32_0 = arith.constant 0 : i32
    return %arg0, %arg1, %c0_i32 : i32, i32, i32
  }
}

</mosaic_0001>

<llo_original>
// kernel: tpu_custom_call.1
$region0: #{tpu_custom_call.1}
  #allocation0 [shape = 'u32[]', space=smem, size = 0x4, offset = 0x4, fixed_abs, tag = 'smem constant byte address 0x4 - core index']
  #allocation1 [shape = 'u32[144,128]{1,0:T(1,128)}', space=vmem, size = 0x12000, scoped, tag = 'internal scratch']
  %s0 = inlined_call_operand.vmem [shape: f32[2,32,256], index: 0, kind: input, shape index: {}]
  %s1 = inlined_call_operand.vmem [shape: bf16[2,128,32], index: 1, kind: input, shape index: {}]
  %s2 = inlined_call_operand.vmem [shape: bf16[32,32], index: 2, kind: input, shape index: {}]
  %s3 = inlined_call_operand.vmem [shape: f32[1,32], index: 3, kind: input, shape index: {}]
  %s4 = inlined_call_operand.vmem [shape: bf16[32,32], index: 4, kind: input, shape index: {}]
  %s5 = inlined_call_operand.vmem [shape: f32[1,32], index: 5, kind: input, shape index: {}]
  %s6 = inlined_call_operand.vmem [shape: f32[1,128], index: 6, kind: input, shape index: {}]
  %s7 = inlined_call_operand.hbm [shape: bf16[2,256,128], index: 7, kind: output, shape index: {}]
  %s8 = sld [smem:[#allocation0]]
  $region61: #{tpu_custom_call.1} parent=0
    _
  %s10 = ssub.s32 1, %s8
  %s11 = scalar_select 0, %s10, %s8
  $region1: #{tpu_custom_call.1} parent=0
    #allocation2 [shape = 'u8[131072]{0}', space=vmem, size = 0x20000, scoped, tag = 'output window, operand 0']
    #allocation3 [shape = 's32[2]{0}', space=sflag, size = 0x8, scoped, tag = 'scoped memory for tpu_custom_call.1']
    %12 = vsyncpa [#allocation3], 0
    %s13 = scalar_lea.sflag [#allocation3], 1
    %14 = vsyncpa %s13, 0
    loop: start=0, step=1, limit=4
    $region2: #{tpu_custom_call.1} parent=1 // loop_pre_header
      _
    $region3: #{tpu_custom_call.1} parent=1 // loop_header
      %s16 = sphi 0, %s20
      %p17 = scmp.ge.s32.totalorder %s16, 4
      %s23 = sphi 0, %s35
      %s24 = sphi 0, %s31
      %s25 = sphi 0, %s23
      %s26 = sphi 0, %s24
      %s27 = sphi 0, %s25
      %s28 = sphi 0, %s26
      %s40 = sphi 0, %s42
      %s43 = sphi 0, %s40
      %s44 = sphi 0, %s43
      %s60 = sphi 0, %s44
      %s66 = sphi 0, %s68
      %s69 = sphi 0, %s66
      %s70 = sphi 0, %s69
      %s86 = sphi 0, %s70
      %s90 = sphi 0, %s90
      %s92 = sphi 0, %s90
      %s93 = sphi 0, %s92
      %s107 = sphi 0, %s93
      %s111 = sphi 0, %s111
      %s113 = sphi 0, %s111
      %s114 = sphi 0, %s113
      %s128 = sphi 0, %s114
      %s132 = sphi 0, %s132
      %s134 = sphi 0, %s132
      %s135 = sphi 0, %s134
      %s149 = sphi 0, %s135
      %s153 = sphi 0, %s153
      %s155 = sphi 0, %s153
      %s156 = sphi 0, %s155
      %s170 = sphi 0, %s156
      %s174 = sphi 0, %s174
      %s176 = sphi 0, %s174
      %s177 = sphi 0, %s176
      %s191 = sphi 0, %s177
      %s199 = sphi 0, %s201
      %s202 = sphi 0, %s199
      %s203 = sphi 0, %s202
      %s219 = sphi 0, %s203
    $region4: #{tpu_custom_call.1} parent=1 // loop_header_branch
      %19 = sbr.rel (%p17) target = $region8
    $region5: #{tpu_custom_call.1} parent=1 // loop_body
      %s21 = ssub.s32 %s16, 1
      %s22 = ssub.s32 %s16, 2
      %s29 = sadd.s32 1, %s24
      %p30 = scmp.ge.s32.totalorder %s29, 1
      %s31 = scalar_select %p30, 0, %s29
      %s32 = sadd.s32 1, %s23
      %s33 = scalar_select %p30, %s32, %s23
      %p34 = scmp.ge.s32.totalorder %s33, 2
      %s35 = scalar_select %p34, 0, %s33
      %s36 = ssub.s32 %s23, %s35
      %s37 = ssub.s32 %s24, %s31
      %s38 = sor.u32 %s36, %s37
      %p39 = scmp.eq.s32.totalorder %s38, 0
      %s41 = sadd.s32 %s40, 1
      %s42 = scalar_select %p39, %s40, %s41
      %p45 = pneg %p39
      %p46 = scmp.eq.s32.totalorder %s16, 1
      %p47 = por %p45, %p46
      %p48 = scmp.ne.s32.totalorder %s40, %s43
      %p49 = scmp.eq.s32.totalorder %s16, 0
      %p50 = por %p48, %p49
      %p51 = scmp.ne.s32.totalorder %s40, %s43
      %p52 = scmp.eq.s32.totalorder %s21, 1
      %p53 = por %p51, %p52
      %p54 = scmp.ne.s32.totalorder %s43, %s44
      %p55 = scmp.eq.s32.totalorder %s21, 0
      %p56 = por %p54, %p55
      %p57 = scmp.ne.s32.totalorder %s43, %s44
      %p58 = scmp.eq.s32.totalorder %s22, 1
      %p59 = por %p57, %p58
      %p61 = scmp.ne.s32.totalorder %s44, %s60
      %p62 = scmp.eq.s32.totalorder %s22, 0
      %p63 = por %p61, %p62
      %s64 = ssub.s32 %s23, %s35
      %p65 = scmp.eq.s32.totalorder %s64, 0
      %s67 = sadd.s32 %s66, 1
      %s68 = scalar_select %p65, %s66, %s67
      %p71 = pneg %p65
      %p72 = scmp.eq.s32.totalorder %s16, 1
      %p73 = por %p71, %p72
      %p74 = scmp.ne.s32.totalorder %s66, %s69
      %p75 = scmp.eq.s32.totalorder %s16, 0
      %p76 = por %p74, %p75
      %p77 = scmp.ne.s32.totalorder %s66, %s69
      %p78 = scmp.eq.s32.totalorder %s21, 1
      %p79 = por %p77, %p78
      %p80 = scmp.ne.s32.totalorder %s69, %s70
      %p81 = scmp.eq.s32.totalorder %s21, 0
      %p82 = por %p80, %p81
      %p83 = scmp.ne.s32.totalorder %s69, %s70
      %p84 = scmp.eq.s32.totalorder %s22, 1
      %p85 = por %p83, %p84
      %p87 = scmp.ne.s32.totalorder %s70, %s86
      %p88 = scmp.eq.s32.totalorder %s22, 0
      %p89 = por %p87, %p88
      %s91 = sadd.s32 %s90, 1
      %p94 = scmp.eq.s32.totalorder %s16, 1
      %p95 = scmp.ne.s32.totalorder %s90, %s92
      %p96 = scmp.eq.s32.totalorder %s16, 0
      %p97 = por %p95, %p96
      %p98 = scmp.ne.s32.totalorder %s90, %s92
      %p99 = scmp.eq.s32.totalorder %s21, 1
      %p100 = por %p98, %p99
      %p101 = scmp.ne.s32.totalorder %s92, %s93
      %p102 = scmp.eq.s32.totalorder %s21, 0
      %p103 = por %p101, %p102
      %p104 = scmp.ne.s32.totalorder %s92, %s93
      %p105 = scmp.eq.s32.totalorder %s22, 1
      %p106 = por %p104, %p105
      %p108 = scmp.ne.s32.totalorder %s93, %s107
      %p109 = scmp.eq.s32.totalorder %s22, 0
      %p110 = por %p108, %p109
      %s112 = sadd.s32 %s111, 1
      %p115 = scmp.eq.s32.totalorder %s16, 1
      %p116 = scmp.ne.s32.totalorder %s111, %s113
      %p117 = scmp.eq.s32.totalorder %s16, 0
      %p118 = por %p116, %p117
      %p119 = scmp.ne.s32.totalorder %s111, %s113
      %p120 = scmp.eq.s32.totalorder %s21, 1
      %p121 = por %p119, %p120
      %p122 = scmp.ne.s32.totalorder %s113, %s114
      %p123 = scmp.eq.s32.totalorder %s21, 0
      %p124 = por %p122, %p123
      %p125 = scmp.ne.s32.totalorder %s113, %s114
      %p126 = scmp.eq.s32.totalorder %s22, 1
      %p127 = por %p125, %p126
      %p129 = scmp.ne.s32.totalorder %s114, %s128
      %p130 = scmp.eq.s32.totalorder %s22, 0
      %p131 = por %p129, %p130
      %s133 = sadd.s32 %s132, 1
      %p136 = scmp.eq.s32.totalorder %s16, 1
      %p137 = scmp.ne.s32.totalorder %s132, %s134
      %p138 = scmp.eq.s32.totalorder %s16, 0
      %p139 = por %p137, %p138
      %p140 = scmp.ne.s32.totalorder %s132, %s134
      %p141 = scmp.eq.s32.totalorder %s21, 1
      %p142 = por %p140, %p141
      %p143 = scmp.ne.s32.totalorder %s134, %s135
      %p144 = scmp.eq.s32.totalorder %s21, 0
      %p145 = por %p143, %p144
      %p146 = scmp.ne.s32.totalorder %s134, %s135
      %p147 = scmp.eq.s32.totalorder %s22, 1
      %p148 = por %p146, %p147
      %p150 = scmp.ne.s32.totalorder %s135, %s149
      %p151 = scmp.eq.s32.totalorder %s22, 0
      %p152 = por %p150, %p151
      %s154 = sadd.s32 %s153, 1
      %p157 = scmp.eq.s32.totalorder %s16, 1
      %p158 = scmp.ne.s32.totalorder %s153, %s155
      %p159 = scmp.eq.s32.totalorder %s16, 0
      %p160 = por %p158, %p159
      %p161 = scmp.ne.s32.totalorder %s153, %s155
      %p162 = scmp.eq.s32.totalorder %s21, 1
      %p163 = por %p161, %p162
      %p164 = scmp.ne.s32.totalorder %s155, %s156
      %p165 = scmp.eq.s32.totalorder %s21, 0
      %p166 = por %p164, %p165
      %p167 = scmp.ne.s32.totalorder %s155, %s156
      %p168 = scmp.eq.s32.totalorder %s22, 1
      %p169 = por %p167, %p168
      %p171 = scmp.ne.s32.totalorder %s156, %s170
      %p172 = scmp.eq.s32.totalorder %s22, 0
      %p173 = por %p171, %p172
      %s175 = sadd.s32 %s174, 1
      %p178 = scmp.eq.s32.totalorder %s16, 1
      %p179 = scmp.ne.s32.totalorder %s174, %s176
      %p180 = scmp.eq.s32.totalorder %s16, 0
      %p181 = por %p179, %p180
      %p182 = scmp.ne.s32.totalorder %s174, %s176
      %p183 = scmp.eq.s32.totalorder %s21, 1
      %p184 = por %p182, %p183
      %p185 = scmp.ne.s32.totalorder %s176, %s177
      %p186 = scmp.eq.s32.totalorder %s21, 0
      %p187 = por %p185, %p186
      %p188 = scmp.ne.s32.totalorder %s176, %s177
      %p189 = scmp.eq.s32.totalorder %s22, 1
      %p190 = por %p188, %p189
      %p192 = scmp.ne.s32.totalorder %s177, %s191
      %p193 = scmp.eq.s32.totalorder %s22, 0
      %p194 = por %p192, %p193
      %s195 = ssub.s32 %s23, %s35
      %s196 = ssub.s32 %s24, %s31
      %s197 = sor.u32 %s195, %s196
      %p198 = scmp.eq.s32.totalorder %s197, 0
      %s200 = sadd.s32 %s199, 1
      %s201 = scalar_select %p198, %s199, %s200
      %p204 = pneg %p198
      %p205 = scmp.eq.s32.totalorder %s16, 1
      %p206 = por %p204, %p205
      %p207 = scmp.ne.s32.totalorder %s199, %s202
      %p208 = scmp.eq.s32.totalorder %s16, 0
      %p209 = por %p207, %p208
      %p210 = scmp.ne.s32.totalorder %s199, %s202
      %p211 = scmp.eq.s32.totalorder %s21, 1
      %p212 = por %p210, %p211
      %p213 = scmp.ne.s32.totalorder %s202, %s203
      %p214 = scmp.eq.s32.totalorder %s21, 0
      %p215 = por %p213, %p214
      %p216 = scmp.ne.s32.totalorder %s202, %s203
      %p217 = scmp.eq.s32.totalorder %s22, 1
      %p218 = por %p216, %p217
      %p220 = scmp.ne.s32.totalorder %s203, %s219
      %p221 = scmp.eq.s32.totalorder %s22, 0
      %p222 = por %p220, %p221
      %p223 = scmp.le.s32.totalorder 1, %s16
      %p224 = scmp.lt.s32.totalorder %s16, 3
      %p225 = pnand %p223, %p224
      %p226 = pneg %p225
      // Predicated region
      $region9: #{tpu_custom_call.1} parent=5 // pred_check
        _
      $region10: #{tpu_custom_call.1} parent=5 // pred_check_branch
        %228 = sbr.rel (%p225) target = $region12
      $region11: #{tpu_custom_call.1} parent=5 // pred_region
        %s229 = ssub.s32 %s16, 1
        // Predicated region
        $region13: #{tpu_custom_call.1} parent=11 // pred_check
          %p230 = pneg %p103
        $region14: #{tpu_custom_call.1} parent=11 // pred_check_branch
          %232 = sbr.rel (%p230) target = $region16
        $region15: #{tpu_custom_call.1} parent=11 // pred_region
          _
        $region16: #{tpu_custom_call.1} parent=11 // pred_fallthru
          _
        // Predicated region
        $region17: #{tpu_custom_call.1} parent=11 // pred_check
          %p233 = pneg %p124
        $region18: #{tpu_custom_call.1} parent=11 // pred_check_branch
          %235 = sbr.rel (%p233) target = $region20
        $region19: #{tpu_custom_call.1} parent=11 // pred_region
          _
        $region20: #{tpu_custom_call.1} parent=11 // pred_fallthru
          _
        // Predicated region
        $region21: #{tpu_custom_call.1} parent=11 // pred_check
          %p236 = pneg %p145
        $region22: #{tpu_custom_call.1} parent=11 // pred_check_branch
          %238 = sbr.rel (%p236) target = $region24
        $region23: #{tpu_custom_call.1} parent=11 // pred_region
          _
        $region24: #{tpu_custom_call.1} parent=11 // pred_fallthru
          _
        // Predicated region
        $region25: #{tpu_custom_call.1} parent=11 // pred_check
          %p239 = pneg %p166
        $region26: #{tpu_custom_call.1} parent=11 // pred_check_branch
          %241 = sbr.rel (%p239) target = $region28
        $region27: #{tpu_custom_call.1} parent=11 // pred_region
          _
        $region28: #{tpu_custom_call.1} parent=11 // pred_fallthru
          _
        // Predicated region
        $region29: #{tpu_custom_call.1} parent=11 // pred_check
          %p242 = pneg %p187
        $region30: #{tpu_custom_call.1} parent=11 // pred_check_branch
          %244 = sbr.rel (%p242) target = $region32
        $region31: #{tpu_custom_call.1} parent=11 // pred_region
          _
        $region32: #{tpu_custom_call.1} parent=11 // pred_fallthru
          _
      $region12: #{tpu_custom_call.1} parent=5 // pred_fallthru
        _
      %p245 = scmp.lt.s32.totalorder %s16, 2
      // Predicated region
      $region33: #{tpu_custom_call.1} parent=5 // pred_check
        %p246 = pneg %p245
      $region34: #{tpu_custom_call.1} parent=5 // pred_check_branch
        %248 = sbr.rel (%p246) target = $region36
      $region35: #{tpu_custom_call.1} parent=5 // pred_region
        // Predicated region
        $region37: #{tpu_custom_call.1} parent=35 // pred_check
          %p249 = pneg %p50
        $region38: #{tpu_custom_call.1} parent=35 // pred_check_branch
          %251 = sbr.rel (%p249) target = $region40
        $region39: #{tpu_custom_call.1} parent=35 // pred_region
          %s252 = smul.u32 2, %s24
          %p253 = scmp.lt.s32.totalorder %s23, 1
          %s254 = scalar_select %p253, %s23, 1
          %p255 = scmp.lt.s32.totalorder %s252, 1
          %s256 = scalar_select %p255, %s252, 1
          %s257 = smul.addr %s254, 8
          %s258 = sadd.s32 %s256, %s257
          %s259 = smul.addr %s258, 8
          %s260 = scalar_lea.vmem %s0, %s259
          %s261 = smul.u32 2, %s24
        $region40: #{tpu_custom_call.1} parent=35 // pred_fallthru
          _
        // Predicated region
        $region41: #{tpu_custom_call.1} parent=35 // pred_check
          %p262 = pneg %p76
        $region42: #{tpu_custom_call.1} parent=35 // pred_check_branch
          %264 = sbr.rel (%p262) target = $region44
        $region43: #{tpu_custom_call.1} parent=35 // pred_region
          %p265 = scmp.lt.s32.totalorder %s23, 1
          %s266 = scalar_select %p265, %s23, 1
          %s267 = smul.addr %s266, 16
          %s268 = smul.addr %s267, 4
          %s269 = scalar_lea.vmem %s1, %s268
        $region44: #{tpu_custom_call.1} parent=35 // pred_fallthru
          _
      $region36: #{tpu_custom_call.1} parent=5 // pred_fallthru
        _
      %p270 = scmp.le.s32.totalorder 1, %s16
      %p271 = scmp.lt.s32.totalorder %s16, 3
      %p272 = pnand %p270, %p271
      %p273 = pneg %p272
      // Predicated region
      $region45: #{tpu_custom_call.1} parent=5 // pred_check
        _
      $region46: #{tpu_custom_call.1} parent=5 // pred_check_branch
        %275 = sbr.rel (%p272) target = $region48
      $region47: #{tpu_custom_call.1} parent=5 // pred_region
        %s276 = ssub.s32 %s16, 1
        %s277 = smul.u32 2, %s26
        %p278 = scmp.lt.s32.totalorder %s25, 1
        %s279 = scalar_select %p278, %s25, 1
        %p280 = scmp.lt.s32.totalorder %s277, 1
        %s281 = scalar_select %p280, %s277, 1
        %s282 = smul.addr %s279, 8
        %s283 = sadd.s32 %s281, %s282
        %s284 = smul.addr %s283, 8
        %s285 = scalar_lea.vmem %s0, %s284
        %p286 = pneg %p56
        %p287 = pneg %p53
        %p288 = scmp.lt.s32.totalorder %s25, 1
        %s289 = scalar_select %p288, %s25, 1
        %s290 = smul.addr %s289, 16
        %s291 = smul.addr %s290, 4
        %s292 = scalar_lea.vmem %s1, %s291
        %p293 = pneg %p82
        %p294 = pneg %p79
        %p295 = pneg %p103
        %p296 = pneg %p100
        %p297 = pneg %p124
        %p298 = pneg %p121
        %p299 = pneg %p145
        %p300 = pneg %p142
        %p301 = pneg %p166
        %p302 = pneg %p163
        %p303 = pneg %p187
        %p304 = pneg %p184
        %p305 = pneg %p215
        %p306 = pneg %p212
        %s307 = sand.u32 %s202, 1
        %s308 = scalar_lea.sflag [#allocation3], %s307
        %s309 = sand.u32 %s202, 1
        %s310 = smul.addr %s309, 128
        %s311 = scalar_lea.vmem [#allocation2], %s310
        %s312 = smul.u32 2, %s26
        %p313 = scmp.lt.s32.totalorder %s25, 1
        %s314 = scalar_select %p313, %s25, 1
        %p315 = scmp.lt.s32.totalorder %s312, 1
        %s316 = scalar_select %p315, %s312, 1
        %s317 = smul.addr %s314, 8
        %s318 = sadd.s32 %s316, %s317
        %s319 = smul.addr %s318, 8
        %s320 = scalar_lea.vmem %s0, %s319
        %s321 = smul.u32 2, %s26
        %p322 = scmp.lt.s32.totalorder %s25, 1
        %s323 = scalar_select %p322, %s25, 1
        %s324 = smul.addr %s323, 16
        %s325 = smul.addr %s324, 4
        %s326 = scalar_lea.vmem %s1, %s325
        %s327 = smul.u32 32, %s26
        %v329 = vld [vmem:[%s320] sm:$0xff]
        %v330 = vld [vmem:[%s320 + $0x8] sm:$0xff]
        %v331 = vld [vmem:[%s320 + $0x10] sm:$0xff]
        %v332 = vld [vmem:[%s320 + $0x18] sm:$0xff]
        %v333 = vld [vmem:[%s320 + $0x20] sm:$0xff]
        %v334 = vld [vmem:[%s320 + $0x28] sm:$0xff]
        %v335 = vld [vmem:[%s320 + $0x30] sm:$0xff]
        %v336 = vld [vmem:[%s320 + $0x38] sm:$0xff]
        %v337 = vpack.c.bf16 %v331, %v329
        %v338 = vpack.c.bf16 %v332, %v330
        %v339 = vpack.c.bf16 %v335, %v333
        %v340 = vpack.c.bf16 %v336, %v334
        %v341 = vld [vmem:[%s2] sm:$0xf]
        %v342 = vld [vmem:[%s2 + $0x4] sm:$0xf]
        %v343 = vld [vmem:[%s2 + $0x8] sm:$0xf]
        %v344 = vld [vmem:[%s2 + $0xc] sm:$0xf]
        %v345 = vld [vmem:[%s3] sm:$0x1]
        %v347 = vlaneseq
        %v348 = vshrl.u32 %v347, 7
        %v349 = vsub.s32 0, %v348
        %v350 = vrot.slane %v345, %v349
        %352 = vxpose.xlu0.c.b16.start [1/8] %v337, 128
        %353 = vxpose.xlu0.c.b16.cont [2/8] %v339, 128
        %354 = vxpose.xlu0.c.b16.cont [3/8] 0, 128
        %355 = vxpose.xlu0.c.b16.cont [4/8] 0, 128
        %356 = vxpose.xlu0.c.b16.cont [5/8] 0, 128
        %357 = vxpose.xlu0.c.b16.cont [6/8] 0, 128
        %358 = vxpose.xlu0.c.b16.cont [7/8] 0, 128
        %359 = vxpose.xlu0.c.b16.end [8/8] 0, 128
        %v360 = vpop.trf.xlu0
        %v361 = vpop.trf.xlu0
        %v362 = vpop.trf.xlu0
        %v363 = vpop.trf.xlu0
        %v364 = vpop.trf.xlu0
        %v365 = vpop.trf.xlu0
        %v366 = vpop.trf.xlu0
        %v367 = vpop.trf.xlu0
        %368 = vxpose.xlu0.c.b16.start [1/8] %v338, 128
        %369 = vxpose.xlu0.c.b16.cont [2/8] %v340, 128
        %370 = vxpose.xlu0.c.b16.cont [3/8] 0, 128
        %371 = vxpose.xlu0.c.b16.cont [4/8] 0, 128
        %372 = vxpose.xlu0.c.b16.cont [5/8] 0, 128
        %373 = vxpose.xlu0.c.b16.cont [6/8] 0, 128
        %374 = vxpose.xlu0.c.b16.cont [7/8] 0, 128
        %375 = vxpose.xlu0.c.b16.end [8/8] 0, 128
        %v376 = vpop.trf.xlu0
        %v377 = vpop.trf.xlu0
        %v378 = vpop.trf.xlu0
        %v379 = vpop.trf.xlu0
        %v380 = vpop.trf.xlu0
        %v381 = vpop.trf.xlu0
        %v382 = vpop.trf.xlu0
        %v383 = vpop.trf.xlu0
        %v388 = vunpack.c.l.b16 %v341
        %v389 = vunpack.c.l.b16 %v342
        %v390 = vunpack.c.l.b16 %v343
        %v391 = vunpack.c.l.b16 %v344
        %v392 = vpack.c.b16 %v389, %v388
        %v393 = vpack.c.b16 %v391, %v390
        %vm396 = vcmask 261120
        %v398 = vsel %vm396, %v360, 0
        %v401 = vsel %vm396, %v361, 0
        %v404 = vsel %vm396, %v362, 0
        %v407 = vsel %vm396, %v363, 0
        %v410 = vsel %vm396, %v364, 0
        %v413 = vsel %vm396, %v365, 0
        %v416 = vsel %vm396, %v366, 0
        %v419 = vsel %vm396, %v367, 0
        %v422 = vsel %vm396, %v376, 0
        %v425 = vsel %vm396, %v377, 0
        %v428 = vsel %vm396, %v378, 0
        %v431 = vsel %vm396, %v379, 0
        %v434 = vsel %vm396, %v380, 0
        %v437 = vsel %vm396, %v381, 0
        %v440 = vsel %vm396, %v382, 0
        %v443 = vsel %vm396, %v383, 0
        %445 = vmatprep.subr.bf16.mxu0 0
        %446 = vmatpush1.bf16.msra.mxu0 %v392
        %447 = vmatprep.subr.bf16.mxu0 0
        %448 = vmatpush1.bf16.msra.mxu0 %v393
        %449 = vmatprep.subr.bf16.mxu0 0
        %450 = vmatpush1.bf16.msra.mxu0 0
        %451 = vmatprep.subr.bf16.mxu0 0
        %452 = vmatpush1.bf16.msra.mxu0 0
        %453 = vmatprep.subr.bf16.mxu0 0
        %454 = vmatpush1.bf16.msra.mxu0 0
        %455 = vmatprep.subr.bf16.mxu0 0
        %456 = vmatpush1.bf16.msra.mxu0 0
        %457 = vmatprep.subr.bf16.mxu0 0
        %458 = vmatpush1.bf16.msra.mxu0 0
        %459 = vmatprep.subr.bf16.mxu0 0
        %460 = vmatpush1.bf16.msra.mxu0 0
        %461 = vmatprep.subr.bf16.mxu0 0
        %462 = vmatpush1.bf16.msra.mxu0 0
        %463 = vmatprep.subr.bf16.mxu0 0
        %464 = vmatpush1.bf16.msra.mxu0 0
        %465 = vmatprep.subr.bf16.mxu0 0
        %466 = vmatpush1.bf16.msra.mxu0 0
        %467 = vmatprep.subr.bf16.mxu0 0
        %468 = vmatpush1.bf16.msra.mxu0 0
        %469 = vmatprep.subr.bf16.mxu0 0
        %470 = vmatpush1.bf16.msra.mxu0 0
        %471 = vmatprep.subr.bf16.mxu0 0
        %472 = vmatpush1.bf16.msra.mxu0 0
        %473 = vmatprep.subr.bf16.mxu0 0
        %474 = vmatpush1.bf16.msra.mxu0 0
        %475 = vmatprep.subr.bf16.mxu0 0
        %476 = vmatpush1.bf16.msra.mxu0 0
        %477 = vmatprep.mubr.bf16.mxu0 0
        %478 = vmatmul.mubr.bf16.gmra.mrb[0].mxu0 %v398
        %v479 = vpop.f32.mrb[0].mxu0
        %v480 = vadd.f32 %v350, %v479
        %v481 = vpop.f32.mrb[0].mxu0
        %v482 = vpop.f32.mrb[0].mxu0
        %v483 = vadd.f32 %v350, %v482
        %v484 = vpop.f32.mrb[0].mxu0
        %485 = vmatprep.mubr.bf16.mxu0 0
        %486 = vmatmul.mubr.bf16.gmra.mrb[0].mxu0 %v401
        %v487 = vpop.f32.mrb[0].mxu0
        %v488 = vadd.f32 %v350, %v487
        %v489 = vpop.f32.mrb[0].mxu0
        %v490 = vpop.f32.mrb[0].mxu0
        %v491 = vadd.f32 %v350, %v490
        %v492 = vpop.f32.mrb[0].mxu0
        %493 = vmatprep.mubr.bf16.mxu0 0
        %494 = vmatmul.mubr.bf16.gmra.mrb[0].mxu0 %v404
        %v495 = vpop.f32.mrb[0].mxu0
        %v496 = vadd.f32 %v350, %v495
        %v497 = vpop.f32.mrb[0].mxu0
        %v498 = vpop.f32.mrb[0].mxu0
        %v499 = vadd.f32 %v350, %v498
        %v500 = vpop.f32.mrb[0].mxu0
        %501 = vmatprep.mubr.bf16.mxu0 0
        %502 = vmatmul.mubr.bf16.gmra.mrb[0].mxu0 %v407
        %v503 = vpop.f32.mrb[0].mxu0
        %v504 = vadd.f32 %v350, %v503
        %v505 = vpop.f32.mrb[0].mxu0
        %v506 = vpop.f32.mrb[0].mxu0
        %v507 = vadd.f32 %v350, %v506
        %v508 = vpop.f32.mrb[0].mxu0
        %509 = vmatprep.mubr.bf16.mxu0 0
        %510 = vmatmul.mubr.bf16.gmra.mrb[0].mxu0 %v410
        %v511 = vpop.f32.mrb[0].mxu0
        %v512 = vadd.f32 %v350, %v511
        %v513 = vpop.f32.mrb[0].mxu0
        %v514 = vpop.f32.mrb[0].mxu0
        %v515 = vadd.f32 %v350, %v514
        %v516 = vpop.f32.mrb[0].mxu0
        %517 = vmatprep.mubr.bf16.mxu0 0
        %518 = vmatmul.mubr.bf16.gmra.mrb[0].mxu0 %v413
        %v519 = vpop.f32.mrb[0].mxu0
        %v520 = vadd.f32 %v350, %v519
        %v521 = vpop.f32.mrb[0].mxu0
        %v522 = vpop.f32.mrb[0].mxu0
        %v523 = vadd.f32 %v350, %v522
        %v524 = vpop.f32.mrb[0].mxu0
        %525 = vmatprep.mubr.bf16.mxu0 0
        %526 = vmatmul.mubr.bf16.gmra.mrb[0].mxu0 %v416
        %v527 = vpop.f32.mrb[0].mxu0
        %v528 = vadd.f32 %v350, %v527
        %v529 = vpop.f32.mrb[0].mxu0
        %v530 = vpop.f32.mrb[0].mxu0
        %v531 = vadd.f32 %v350, %v530
        %v532 = vpop.f32.mrb[0].mxu0
        %533 = vmatprep.mubr.bf16.mxu0 0
        %534 = vmatmul.mubr.bf16.gmra.mrb[0].mxu0 %v419
        %v535 = vpop.f32.mrb[0].mxu0
        %v536 = vadd.f32 %v350, %v535
        %v537 = vpop.f32.mrb[0].mxu0
        %v538 = vpop.f32.mrb[0].mxu0
        %v539 = vadd.f32 %v350, %v538
        %v540 = vpop.f32.mrb[0].mxu0
        %541 = vmatprep.mubr.bf16.mxu0 0
        %542 = vmatmul.mubr.bf16.gmra.mrb[0].mxu0 %v422
        %v543 = vpop.f32.mrb[0].mxu0
        %v544 = vadd.f32 %v350, %v543
        %v545 = vpop.f32.mrb[0].mxu0
        %v546 = vpop.f32.mrb[0].mxu0
        %v547 = vadd.f32 %v350, %v546
        %v548 = vpop.f32.mrb[0].mxu0
        %549 = vmatprep.mubr.bf16.mxu0 0
        %550 = vmatmul.mubr.bf16.gmra.mrb[0].mxu0 %v425
        %v551 = vpop.f32.mrb[0].mxu0
        %v552 = vadd.f32 %v350, %v551
        %v553 = vpop.f32.mrb[0].mxu0
        %v554 = vpop.f32.mrb[0].mxu0
        %v555 = vadd.f32 %v350, %v554
        %v556 = vpop.f32.mrb[0].mxu0
        %557 = vmatprep.mubr.bf16.mxu0 0
        %558 = vmatmul.mubr.bf16.gmra.mrb[0].mxu0 %v428
        %v559 = vpop.f32.mrb[0].mxu0
        %v560 = vadd.f32 %v350, %v559
        %v561 = vpop.f32.mrb[0].mxu0
        %v562 = vpop.f32.mrb[0].mxu0
        %v563 = vadd.f32 %v350, %v562
        %v564 = vpop.f32.mrb[0].mxu0
        %565 = vmatprep.mubr.bf16.mxu0 0
        %566 = vmatmul.mubr.bf16.gmra.mrb[0].mxu0 %v431
        %v567 = vpop.f32.mrb[0].mxu0
        %v568 = vadd.f32 %v350, %v567
        %v569 = vpop.f32.mrb[0].mxu0
        %v570 = vpop.f32.mrb[0].mxu0
        %v571 = vadd.f32 %v350, %v570
        %v572 = vpop.f32.mrb[0].mxu0
        %573 = vmatprep.mubr.bf16.mxu0 0
        %574 = vmatmul.mubr.bf16.gmra.mrb[0].mxu0 %v434
        %v575 = vpop.f32.mrb[0].mxu0
        %v576 = vadd.f32 %v350, %v575
        %v577 = vpop.f32.mrb[0].mxu0
        %v578 = vpop.f32.mrb[0].mxu0
        %v579 = vadd.f32 %v350, %v578
        %v580 = vpop.f32.mrb[0].mxu0
        %581 = vmatprep.mubr.bf16.mxu0 0
        %582 = vmatmul.mubr.bf16.gmra.mrb[0].mxu0 %v437
        %v583 = vpop.f32.mrb[0].mxu0
        %v584 = vadd.f32 %v350, %v583
        %v585 = vpop.f32.mrb[0].mxu0
        %v586 = vpop.f32.mrb[0].mxu0
        %v587 = vadd.f32 %v350, %v586
        %v588 = vpop.f32.mrb[0].mxu0
        %589 = vmatprep.mubr.bf16.mxu0 0
        %590 = vmatmul.mubr.bf16.gmra.mrb[0].mxu0 %v440
        %v591 = vpop.f32.mrb[0].mxu0
        %v592 = vadd.f32 %v350, %v591
        %v593 = vpop.f32.mrb[0].mxu0
        %v594 = vpop.f32.mrb[0].mxu0
        %v595 = vadd.f32 %v350, %v594
        %v596 = vpop.f32.mrb[0].mxu0
        %597 = vmatprep.mubr.bf16.mxu0 0
        %598 = vmatmul.mubr.bf16.gmra.mrb[0].mxu0 %v443
        %v599 = vpop.f32.mrb[0].mxu0
        %v600 = vadd.f32 %v350, %v599
        %v601 = vpop.f32.mrb[0].mxu0
        %v602 = vpop.f32.mrb[0].mxu0
        %v603 = vadd.f32 %v350, %v602
        %v604 = vpop.f32.mrb[0].mxu0
        %605 = vdwg.mxu0
        %v606 = vmax.f32 %v480, 0.0
        %v607 = vmax.f32 %v483, 0.0
        %v608 = vmax.f32 %v488, 0.0
        %v609 = vmax.f32 %v491, 0.0
        %v610 = vmax.f32 %v496, 0.0
        %v611 = vmax.f32 %v499, 0.0
        %v612 = vmax.f32 %v504, 0.0
        %v613 = vmax.f32 %v507, 0.0
        %v614 = vmax.f32 %v512, 0.0
        %v615 = vmax.f32 %v515, 0.0
        %v616 = vmax.f32 %v520, 0.0
        %v617 = vmax.f32 %v523, 0.0
        %v618 = vmax.f32 %v528, 0.0
        %v619 = vmax.f32 %v531, 0.0
        %v620 = vmax.f32 %v536, 0.0
        %v621 = vmax.f32 %v539, 0.0
        %v622 = vmax.f32 %v544, 0.0
        %v623 = vmax.f32 %v547, 0.0
        %v624 = vmax.f32 %v552, 0.0
        %v625 = vmax.f32 %v555, 0.0
        %v626 = vmax.f32 %v560, 0.0
        %v627 = vmax.f32 %v563, 0.0
        %v628 = vmax.f32 %v568, 0.0
        %v629 = vmax.f32 %v571, 0.0
        %v630 = vmax.f32 %v576, 0.0
        %v631 = vmax.f32 %v579, 0.0
        %v632 = vmax.f32 %v584, 0.0
        %v633 = vmax.f32 %v587, 0.0
        %v634 = vmax.f32 %v592, 0.0
        %v635 = vmax.f32 %v595, 0.0
        %v636 = vmax.f32 %v600, 0.0
        %v637 = vmax.f32 %v603, 0.0
        %v638 = vpack.c.bf16 %v607, %v606
        %v639 = vpack.c.bf16 %v609, %v608
        %v640 = vpack.c.bf16 %v611, %v610
        %v641 = vpack.c.bf16 %v613, %v612
        %v642 = vpack.c.bf16 %v615, %v614
        %v643 = vpack.c.bf16 %v617, %v616
        %v644 = vpack.c.bf16 %v619, %v618
        %v645 = vpack.c.bf16 %v621, %v620
        %v646 = vpack.c.bf16 %v623, %v622
        %v647 = vpack.c.bf16 %v625, %v624
        %v648 = vpack.c.bf16 %v627, %v626
        %v649 = vpack.c.bf16 %v629, %v628
        %v650 = vpack.c.bf16 %v631, %v630
        %v651 = vpack.c.bf16 %v633, %v632
        %v652 = vpack.c.bf16 %v635, %v634
        %v653 = vpack.c.bf16 %v637, %v636
        %v654 = vld [vmem:[%s4] sm:$0xf]
        %v655 = vld [vmem:[%s4 + $0x4] sm:$0xf]
        %v656 = vld [vmem:[%s4 + $0x8] sm:$0xf]
        %v657 = vld [vmem:[%s4 + $0xc] sm:$0xf]
        %v658 = vld [vmem:[%s5] sm:$0x1]
        %v660 = vlaneseq
        %v661 = vshrl.u32 %v660, 7
        %v662 = vsub.s32 0, %v661
        %v663 = vrot.slane %v658, %v662
        %v669 = vunpack.c.l.b16 %v654
        %v670 = vunpack.c.l.b16 %v655
        %v671 = vunpack.c.l.b16 %v656
        %v672 = vunpack.c.l.b16 %v657
        %v673 = vpack.c.b16 %v670, %v669
        %v674 = vpack.c.b16 %v672, %v671
        %v678 = vsel %vm396, %v638, 0
        %v681 = vsel %vm396, %v639, 0
        %v684 = vsel %vm396, %v640, 0
        %v687 = vsel %vm396, %v641, 0
        %v690 = vsel %vm396, %v642, 0
        %v693 = vsel %vm396, %v643, 0
        %v696 = vsel %vm396, %v644, 0
        %v699 = vsel %vm396, %v645, 0
        %v702 = vsel %vm396, %v646, 0
        %v705 = vsel %vm396, %v647, 0
        %v708 = vsel %vm396, %v648, 0
        %v711 = vsel %vm396, %v649, 0
        %v714 = vsel %vm396, %v650, 0
        %v717 = vsel %vm396, %v651, 0
        %v720 = vsel %vm396, %v652, 0
        %v723 = vsel %vm396, %v653, 0
        %725 = vmatprep.subr.bf16.mxu0 0
        %726 = vmatpush1.bf16.msra.mxu0 %v673
        %727 = vmatprep.subr.bf16.mxu0 0
        %728 = vmatpush1.bf16.msra.mxu0 %v674
        %729 = vmatprep.subr.bf16.mxu0 0
        %730 = vmatpush1.bf16.msra.mxu0 0
        %731 = vmatprep.subr.bf16.mxu0 0
        %732 = vmatpush1.bf16.msra.mxu0 0
        %733 = vmatprep.subr.bf16.mxu0 0
        %734 = vmatpush1.bf16.msra.mxu0 0
        %735 = vmatprep.subr.bf16.mxu0 0
        %736 = vmatpush1.bf16.msra.mxu0 0
        %737 = vmatprep.subr.bf16.mxu0 0
        %738 = vmatpush1.bf16.msra.mxu0 0
        %739 = vmatprep.subr.bf16.mxu0 0
        %740 = vmatpush1.bf16.msra.mxu0 0
        %741 = vmatprep.subr.bf16.mxu0 0
        %742 = vmatpush1.bf16.msra.mxu0 0
        %743 = vmatprep.subr.bf16.mxu0 0
        %744 = vmatpush1.bf16.msra.mxu0 0
        %745 = vmatprep.subr.bf16.mxu0 0
        %746 = vmatpush1.bf16.msra.mxu0 0
        %747 = vmatprep.subr.bf16.mxu0 0
        %748 = vmatpush1.bf16.msra.mxu0 0
        %749 = vmatprep.subr.bf16.mxu0 0
        %750 = vmatpush1.bf16.msra.mxu0 0
        %751 = vmatprep.subr.bf16.mxu0 0
        %752 = vmatpush1.bf16.msra.mxu0 0
        %753 = vmatprep.subr.bf16.mxu0 0
        %754 = vmatpush1.bf16.msra.mxu0 0
        %755 = vmatprep.subr.bf16.mxu0 0
        %756 = vmatpush1.bf16.msra.mxu0 0
        %757 = vmatprep.mubr.bf16.mxu0 0
        %758 = vmatmul.mubr.bf16.gmra.mrb[0].mxu0 %v678
        %v759 = vpop.f32.mrb[0].mxu0
        %v760 = vadd.f32 %v663, %v759
        %v761 = vpop.f32.mrb[0].mxu0
        %v762 = vpop.f32.mrb[0].mxu0
        %v763 = vadd.f32 %v663, %v762
        %v764 = vpop.f32.mrb[0].mxu0
        %765 = vmatprep.mubr.bf16.mxu0 0
        %766 = vmatmul.mubr.bf16.gmra.mrb[0].mxu0 %v681
        %v767 = vpop.f32.mrb[0].mxu0
        %v768 = vadd.f32 %v663, %v767
        %v769 = vpop.f32.mrb[0].mxu0
        %v770 = vpop.f32.mrb[0].mxu0
        %v771 = vadd.f32 %v663, %v770
        %v772 = vpop.f32.mrb[0].mxu0
        %773 = vmatprep.mubr.bf16.mxu0 0
        %774 = vmatmul.mubr.bf16.gmra.mrb[0].mxu0 %v684
        %v775 = vpop.f32.mrb[0].mxu0
        %v776 = vadd.f32 %v663, %v775
        %v777 = vpop.f32.mrb[0].mxu0
        %v778 = vpop.f32.mrb[0].mxu0
        %v779 = vadd.f32 %v663, %v778
        %v780 = vpop.f32.mrb[0].mxu0
        %781 = vmatprep.mubr.bf16.mxu0 0
        %782 = vmatmul.mubr.bf16.gmra.mrb[0].mxu0 %v687
        %v783 = vpop.f32.mrb[0].mxu0
        %v784 = vadd.f32 %v663, %v783
        %v785 = vpop.f32.mrb[0].mxu0
        %v786 = vpop.f32.mrb[0].mxu0
        %v787 = vadd.f32 %v663, %v786
        %v788 = vpop.f32.mrb[0].mxu0
        %789 = vmatprep.mubr.bf16.mxu0 0
        %790 = vmatmul.mubr.bf16.gmra.mrb[0].mxu0 %v690
        %v791 = vpop.f32.mrb[0].mxu0
        %v792 = vadd.f32 %v663, %v791
        %v793 = vpop.f32.mrb[0].mxu0
        %v794 = vpop.f32.mrb[0].mxu0
        %v795 = vadd.f32 %v663, %v794
        %v796 = vpop.f32.mrb[0].mxu0
        %797 = vmatprep.mubr.bf16.mxu0 0
        %798 = vmatmul.mubr.bf16.gmra.mrb[0].mxu0 %v693
        %v799 = vpop.f32.mrb[0].mxu0
        %v800 = vadd.f32 %v663, %v799
        %v801 = vpop.f32.mrb[0].mxu0
        %v802 = vpop.f32.mrb[0].mxu0
        %v803 = vadd.f32 %v663, %v802
        %v804 = vpop.f32.mrb[0].mxu0
        %805 = vmatprep.mubr.bf16.mxu0 0
        %806 = vmatmul.mubr.bf16.gmra.mrb[0].mxu0 %v696
        %v807 = vpop.f32.mrb[0].mxu0
        %v808 = vadd.f32 %v663, %v807
        %v809 = vpop.f32.mrb[0].mxu0
        %v810 = vpop.f32.mrb[0].mxu0
        %v811 = vadd.f32 %v663, %v810
        %v812 = vpop.f32.mrb[0].mxu0
        %813 = vmatprep.mubr.bf16.mxu0 0
        %814 = vmatmul.mubr.bf16.gmra.mrb[0].mxu0 %v699
        %v815 = vpop.f32.mrb[0].mxu0
        %v816 = vadd.f32 %v663, %v815
        %v817 = vpop.f32.mrb[0].mxu0
        %v818 = vpop.f32.mrb[0].mxu0
        %v819 = vadd.f32 %v663, %v818
        %v820 = vpop.f32.mrb[0].mxu0
        %821 = vmatprep.mubr.bf16.mxu0 0
        %822 = vmatmul.mubr.bf16.gmra.mrb[0].mxu0 %v702
        %v823 = vpop.f32.mrb[0].mxu0
        %v824 = vadd.f32 %v663, %v823
        %v825 = vpop.f32.mrb[0].mxu0
        %v826 = vpop.f32.mrb[0].mxu0
        %v827 = vadd.f32 %v663, %v826
        %v828 = vpop.f32.mrb[0].mxu0
        %829 = vmatprep.mubr.bf16.mxu0 0
        %830 = vmatmul.mubr.bf16.gmra.mrb[0].mxu0 %v705
        %v831 = vpop.f32.mrb[0].mxu0
        %v832 = vadd.f32 %v663, %v831
        %v833 = vpop.f32.mrb[0].mxu0
        %v834 = vpop.f32.mrb[0].mxu0
        %v835 = vadd.f32 %v663, %v834
        %v836 = vpop.f32.mrb[0].mxu0
        %837 = vmatprep.mubr.bf16.mxu0 0
        %838 = vmatmul.mubr.bf16.gmra.mrb[0].mxu0 %v708
        %v839 = vpop.f32.mrb[0].mxu0
        %v840 = vadd.f32 %v663, %v839
        %v841 = vpop.f32.mrb[0].mxu0
        %v842 = vpop.f32.mrb[0].mxu0
        %v843 = vadd.f32 %v663, %v842
        %v844 = vpop.f32.mrb[0].mxu0
        %845 = vmatprep.mubr.bf16.mxu0 0
        %846 = vmatmul.mubr.bf16.gmra.mrb[0].mxu0 %v711
        %v847 = vpop.f32.mrb[0].mxu0
        %v848 = vadd.f32 %v663, %v847
        %v849 = vpop.f32.mrb[0].mxu0
        %v850 = vpop.f32.mrb[0].mxu0
        %v851 = vadd.f32 %v663, %v850
        %v852 = vpop.f32.mrb[0].mxu0
        %853 = vmatprep.mubr.bf16.mxu0 0
        %854 = vmatmul.mubr.bf16.gmra.mrb[0].mxu0 %v714
        %v855 = vpop.f32.mrb[0].mxu0
        %v856 = vadd.f32 %v663, %v855
        %v857 = vpop.f32.mrb[0].mxu0
        %v858 = vpop.f32.mrb[0].mxu0
        %v859 = vadd.f32 %v663, %v858
        %v860 = vpop.f32.mrb[0].mxu0
        %861 = vmatprep.mubr.bf16.mxu0 0
        %862 = vmatmul.mubr.bf16.gmra.mrb[0].mxu0 %v717
        %v863 = vpop.f32.mrb[0].mxu0
        %v864 = vadd.f32 %v663, %v863
        %v865 = vpop.f32.mrb[0].mxu0
        %v866 = vpop.f32.mrb[0].mxu0
        %v867 = vadd.f32 %v663, %v866
        %v868 = vpop.f32.mrb[0].mxu0
        %869 = vmatprep.mubr.bf16.mxu0 0
        %870 = vmatmul.mubr.bf16.gmra.mrb[0].mxu0 %v720
        %v871 = vpop.f32.mrb[0].mxu0
        %v872 = vadd.f32 %v663, %v871
        %v873 = vpop.f32.mrb[0].mxu0
        %v874 = vpop.f32.mrb[0].mxu0
        %v875 = vadd.f32 %v663, %v874
        %v876 = vpop.f32.mrb[0].mxu0
        %877 = vmatprep.mubr.bf16.mxu0 0
        %878 = vmatmul.mubr.bf16.gmra.mrb[0].mxu0 %v723
        %v879 = vpop.f32.mrb[0].mxu0
        %v880 = vadd.f32 %v663, %v879
        %v881 = vpop.f32.mrb[0].mxu0
        %v882 = vpop.f32.mrb[0].mxu0
        %v883 = vadd.f32 %v663, %v882
        %v884 = vpop.f32.mrb[0].mxu0
        %885 = vdwg.mxu0
        %v886 = vmax.f32 %v760, 0.0
        %v887 = vmax.f32 %v763, 0.0
        %v888 = vmax.f32 %v768, 0.0
        %v889 = vmax.f32 %v771, 0.0
        %v890 = vmax.f32 %v776, 0.0
        %v891 = vmax.f32 %v779, 0.0
        %v892 = vmax.f32 %v784, 0.0
        %v893 = vmax.f32 %v787, 0.0
        %v894 = vmax.f32 %v792, 0.0
        %v895 = vmax.f32 %v795, 0.0
        %v896 = vmax.f32 %v800, 0.0
        %v897 = vmax.f32 %v803, 0.0
        %v898 = vmax.f32 %v808, 0.0
        %v899 = vmax.f32 %v811, 0.0
        %v900 = vmax.f32 %v816, 0.0
        %v901 = vmax.f32 %v819, 0.0
        %v902 = vmax.f32 %v824, 0.0
        %v903 = vmax.f32 %v827, 0.0
        %v904 = vmax.f32 %v832, 0.0
        %v905 = vmax.f32 %v835, 0.0
        %v906 = vmax.f32 %v840, 0.0
        %v907 = vmax.f32 %v843, 0.0
        %v908 = vmax.f32 %v848, 0.0
        %v909 = vmax.f32 %v851, 0.0
        %v910 = vmax.f32 %v856, 0.0
        %v911 = vmax.f32 %v859, 0.0
        %v912 = vmax.f32 %v864, 0.0
        %v913 = vmax.f32 %v867, 0.0
        %v914 = vmax.f32 %v872, 0.0
        %v915 = vmax.f32 %v875, 0.0
        %v916 = vmax.f32 %v880, 0.0
        %v917 = vmax.f32 %v883, 0.0
        %v918 = vpack.c.bf16 %v887, %v886
        %v919 = vpack.c.bf16 %v889, %v888
        %v920 = vpack.c.bf16 %v891, %v890
        %v921 = vpack.c.bf16 %v893, %v892
        %v922 = vpack.c.bf16 %v895, %v894
        %v923 = vpack.c.bf16 %v897, %v896
        %v924 = vpack.c.bf16 %v899, %v898
        %v925 = vpack.c.bf16 %v901, %v900
        %v926 = vpack.c.bf16 %v903, %v902
        %v927 = vpack.c.bf16 %v905, %v904
        %v928 = vpack.c.bf16 %v907, %v906
        %v929 = vpack.c.bf16 %v909, %v908
        %v930 = vpack.c.bf16 %v911, %v910
        %v931 = vpack.c.bf16 %v913, %v912
        %v932 = vpack.c.bf16 %v915, %v914
        %v933 = vpack.c.bf16 %v917, %v916
        %v934 = vld [vmem:[%s326] sm:$0xf]
        %v935 = vld [vmem:[%s326 + $0x4] sm:$0xf]
        %v936 = vld [vmem:[%s326 + $0x8] sm:$0xf]
        %v937 = vld [vmem:[%s326 + $0xc] sm:$0xf]
        %v938 = vld [vmem:[%s326 + $0x10] sm:$0xf]
        %v939 = vld [vmem:[%s326 + $0x14] sm:$0xf]
        %v940 = vld [vmem:[%s326 + $0x18] sm:$0xf]
        %v941 = vld [vmem:[%s326 + $0x1c] sm:$0xf]
        %v942 = vld [vmem:[%s326 + $0x20] sm:$0xf]
        %v943 = vld [vmem:[%s326 + $0x24] sm:$0xf]
        %v944 = vld [vmem:[%s326 + $0x28] sm:$0xf]
        %v945 = vld [vmem:[%s326 + $0x2c] sm:$0xf]
        %v946 = vld [vmem:[%s326 + $0x30] sm:$0xf]
        %v947 = vld [vmem:[%s326 + $0x34] sm:$0xf]
        %v948 = vld [vmem:[%s326 + $0x38] sm:$0xf]
        %v949 = vld [vmem:[%s326 + $0x3c] sm:$0xf]
        %v966 = vunpack.c.l.b16 %v934
        %v967 = vunpack.c.l.b16 %v935
        %v968 = vunpack.c.l.b16 %v936
        %v969 = vunpack.c.l.b16 %v937
        %v970 = vunpack.c.l.b16 %v938
        %v971 = vunpack.c.l.b16 %v939
        %v972 = vunpack.c.l.b16 %v940
        %v973 = vunpack.c.l.b16 %v941
        %v974 = vunpack.c.l.b16 %v942
        %v975 = vunpack.c.l.b16 %v943
        %v976 = vunpack.c.l.b16 %v944
        %v977 = vunpack.c.l.b16 %v945
        %v978 = vunpack.c.l.b16 %v946
        %v979 = vunpack.c.l.b16 %v947
        %v980 = vunpack.c.l.b16 %v948
        %v981 = vunpack.c.l.b16 %v949
        %v982 = vpack.c.b16 %v967, %v966
        %v983 = vpack.c.b16 %v969, %v968
        %v984 = vpack.c.b16 %v971, %v970
        %v985 = vpack.c.b16 %v973, %v972
        %v986 = vpack.c.b16 %v975, %v974
        %v987 = vpack.c.b16 %v977, %v976
        %v988 = vpack.c.b16 %v979, %v978
        %v989 = vpack.c.b16 %v981, %v980
        %v991 = vsel %vm396, %v918, 0
        %v994 = vsel %vm396, %v919, 0
        %v997 = vsel %vm396, %v920, 0
        %v1000 = vsel %vm396, %v921, 0
        %v1003 = vsel %vm396, %v922, 0
        %v1006 = vsel %vm396, %v923, 0
        %v1009 = vsel %vm396, %v924, 0
        %v1012 = vsel %vm396, %v925, 0
        %v1015 = vsel %vm396, %v926, 0
        %v1018 = vsel %vm396, %v927, 0
        %v1021 = vsel %vm396, %v928, 0
        %v1024 = vsel %vm396, %v929, 0
        %v1027 = vsel %vm396, %v930, 0
        %v1030 = vsel %vm396, %v931, 0
        %v1033 = vsel %vm396, %v932, 0
        %v1036 = vsel %vm396, %v933, 0
        %v1039 = vsel %vm396, %v982, 0
        %v1042 = vsel %vm396, %v983, 0
        %v1045 = vsel %vm396, %v984, 0
        %v1048 = vsel %vm396, %v985, 0
        %v1051 = vsel %vm396, %v986, 0
        %v1054 = vsel %vm396, %v987, 0
        %v1057 = vsel %vm396, %v988, 0
        %v1060 = vsel %vm396, %v989, 0
        %1062 = vmatprep.subr.bf16.mxu0 0
        %1063 = vmatpush1.bf16.xpose.msra.mxu0 %v1039
        %1064 = vmatprep.subr.bf16.mxu0 0
        %1065 = vmatpush1.bf16.xpose.msra.mxu0 %v1042
        %1066 = vmatprep.subr.bf16.mxu0 0
        %1067 = vmatpush1.bf16.xpose.msra.mxu0 %v1045
        %1068 = vmatprep.subr.bf16.mxu0 0
        %1069 = vmatpush1.bf16.xpose.msra.mxu0 %v1048
        %1070 = vmatprep.subr.bf16.mxu0 0
        %1071 = vmatpush1.bf16.xpose.msra.mxu0 %v1051
        %1072 = vmatprep.subr.bf16.mxu0 0
        %1073 = vmatpush1.bf16.xpose.msra.mxu0 %v1054
        %1074 = vmatprep.subr.bf16.mxu0 0
        %1075 = vmatpush1.bf16.xpose.msra.mxu0 %v1057
        %1076 = vmatprep.subr.bf16.mxu0 0
        %1077 = vmatpush1.bf16.xpose.msra.mxu0 %v1060
        %1078 = vmatprep.subr.bf16.mxu0 0
        %1079 = vmatpush1.bf16.xpose.msra.mxu0 0
        %1080 = vmatprep.subr.bf16.mxu0 0
        %1081 = vmatpush1.bf16.xpose.msra.mxu0 0
        %1082 = vmatprep.subr.bf16.mxu0 0
        %1083 = vmatpush1.bf16.xpose.msra.mxu0 0
        %1084 = vmatprep.subr.bf16.mxu0 0
        %1085 = vmatpush1.bf16.xpose.msra.mxu0 0
        %1086 = vmatprep.subr.bf16.mxu0 0
        %1087 = vmatpush1.bf16.xpose.msra.mxu0 0
        %1088 = vmatprep.subr.bf16.mxu0 0
        %1089 = vmatpush1.bf16.xpose.msra.mxu0 0
        %1090 = vmatprep.subr.bf16.mxu0 0
        %1091 = vmatpush1.bf16.xpose.msra.mxu0 0
        %1092 = vmatprep.subr.bf16.mxu0 0
        %1093 = vmatpush1.bf16.xpose.msra.mxu0 0
        %1094 = vmatprep.mubr.bf16.mxu0 0
        %1095 = vmatmul.mubr.bf16.gmra.mrb[0].mxu0 %v991
        %v1096 = vpop.f32.mrb[0].mxu0
        %v1097 = vadd.f32 0.0, %v1096
        %v1098 = vpop.f32.mrb[0].mxu0
        %v1099 = vpop.f32.mrb[0].mxu0
        %v1100 = vadd.f32 0.0, %v1099
        %v1101 = vpop.f32.mrb[0].mxu0
        %1102 = vmatprep.mubr.bf16.mxu0 0
        %1103 = vmatmul.mubr.bf16.gmra.mrb[0].mxu0 %v994
        %v1104 = vpop.f32.mrb[0].mxu0
        %v1105 = vadd.f32 0.0, %v1104
        %v1106 = vpop.f32.mrb[0].mxu0
        %v1107 = vpop.f32.mrb[0].mxu0
        %v1108 = vadd.f32 0.0, %v1107
        %v1109 = vpop.f32.mrb[0].mxu0
        %1110 = vmatprep.mubr.bf16.mxu0 0
        %1111 = vmatmul.mubr.bf16.gmra.mrb[0].mxu0 %v997
        %v1112 = vpop.f32.mrb[0].mxu0
        %v1113 = vadd.f32 0.0, %v1112
        %v1114 = vpop.f32.mrb[0].mxu0
        %v1115 = vpop.f32.mrb[0].mxu0
        %v1116 = vadd.f32 0.0, %v1115
        %v1117 = vpop.f32.mrb[0].mxu0
        %1118 = vmatprep.mubr.bf16.mxu0 0
        %1119 = vmatmul.mubr.bf16.gmra.mrb[0].mxu0 %v1000
        %v1120 = vpop.f32.mrb[0].mxu0
        %v1121 = vadd.f32 0.0, %v1120
        %v1122 = vpop.f32.mrb[0].mxu0
        %v1123 = vpop.f32.mrb[0].mxu0
        %v1124 = vadd.f32 0.0, %v1123
        %v1125 = vpop.f32.mrb[0].mxu0
        %1126 = vmatprep.mubr.bf16.mxu0 0
        %1127 = vmatmul.mubr.bf16.gmra.mrb[0].mxu0 %v1003
        %v1128 = vpop.f32.mrb[0].mxu0
        %v1129 = vadd.f32 0.0, %v1128
        %v1130 = vpop.f32.mrb[0].mxu0
        %v1131 = vpop.f32.mrb[0].mxu0
        %v1132 = vadd.f32 0.0, %v1131
        %v1133 = vpop.f32.mrb[0].mxu0
        %1134 = vmatprep.mubr.bf16.mxu0 0
        %1135 = vmatmul.mubr.bf16.gmra.mrb[0].mxu0 %v1006
        %v1136 = vpop.f32.mrb[0].mxu0
        %v1137 = vadd.f32 0.0, %v1136
        %v1138 = vpop.f32.mrb[0].mxu0
        %v1139 = vpop.f32.mrb[0].mxu0
        %v1140 = vadd.f32 0.0, %v1139
        %v1141 = vpop.f32.mrb[0].mxu0
        %1142 = vmatprep.mubr.bf16.mxu0 0
        %1143 = vmatmul.mubr.bf16.gmra.mrb[0].mxu0 %v1009
        %v1144 = vpop.f32.mrb[0].mxu0
        %v1145 = vadd.f32 0.0, %v1144
        %v1146 = vpop.f32.mrb[0].mxu0
        %v1147 = vpop.f32.mrb[0].mxu0
        %v1148 = vadd.f32 0.0, %v1147
        %v1149 = vpop.f32.mrb[0].mxu0
        %1150 = vmatprep.mubr.bf16.mxu0 0
        %1151 = vmatmul.mubr.bf16.gmra.mrb[0].mxu0 %v1012
        %v1152 = vpop.f32.mrb[0].mxu0
        %v1153 = vadd.f32 0.0, %v1152
        %v1154 = vpop.f32.mrb[0].mxu0
        %v1155 = vpop.f32.mrb[0].mxu0
        %v1156 = vadd.f32 0.0, %v1155
        %v1157 = vpop.f32.mrb[0].mxu0
        %1158 = vmatprep.mubr.bf16.mxu0 0
        %1159 = vmatmul.mubr.bf16.gmra.mrb[0].mxu0 %v1015
        %v1160 = vpop.f32.mrb[0].mxu0
        %v1161 = vadd.f32 0.0, %v1160
        %v1162 = vpop.f32.mrb[0].mxu0
        %v1163 = vpop.f32.mrb[0].mxu0
        %v1164 = vadd.f32 0.0, %v1163
        %v1165 = vpop.f32.mrb[0].mxu0
        %1166 = vmatprep.mubr.bf16.mxu0 0
        %1167 = vmatmul.mubr.bf16.gmra.mrb[0].mxu0 %v1018
        %v1168 = vpop.f32.mrb[0].mxu0
        %v1169 = vadd.f32 0.0, %v1168
        %v1170 = vpop.f32.mrb[0].mxu0
        %v1171 = vpop.f32.mrb[0].mxu0
        %v1172 = vadd.f32 0.0, %v1171
        %v1173 = vpop.f32.mrb[0].mxu0
        %1174 = vmatprep.mubr.bf16.mxu0 0
        %1175 = vmatmul.mubr.bf16.gmra.mrb[0].mxu0 %v1021
        %v1176 = vpop.f32.mrb[0].mxu0
        %v1177 = vadd.f32 0.0, %v1176
        %v1178 = vpop.f32.mrb[0].mxu0
        %v1179 = vpop.f32.mrb[0].mxu0
        %v1180 = vadd.f32 0.0, %v1179
        %v1181 = vpop.f32.mrb[0].mxu0
        %1182 = vmatprep.mubr.bf16.mxu0 0
        %1183 = vmatmul.mubr.bf16.gmra.mrb[0].mxu0 %v1024
        %v1184 = vpop.f32.mrb[0].mxu0
        %v1185 = vadd.f32 0.0, %v1184
        %v1186 = vpop.f32.mrb[0].mxu0
        %v1187 = vpop.f32.mrb[0].mxu0
        %v1188 = vadd.f32 0.0, %v1187
        %v1189 = vpop.f32.mrb[0].mxu0
        %1190 = vmatprep.mubr.bf16.mxu0 0
        %1191 = vmatmul.mubr.bf16.gmra.mrb[0].mxu0 %v1027
        %v1192 = vpop.f32.mrb[0].mxu0
        %v1193 = vadd.f32 0.0, %v1192
        %v1194 = vpop.f32.mrb[0].mxu0
        %v1195 = vpop.f32.mrb[0].mxu0
        %v1196 = vadd.f32 0.0, %v1195
        %v1197 = vpop.f32.mrb[0].mxu0
        %1198 = vmatprep.mubr.bf16.mxu0 0
        %1199 = vmatmul.mubr.bf16.gmra.mrb[0].mxu0 %v1030
        %v1200 = vpop.f32.mrb[0].mxu0
        %v1201 = vadd.f32 0.0, %v1200
        %v1202 = vpop.f32.mrb[0].mxu0
        %v1203 = vpop.f32.mrb[0].mxu0
        %v1204 = vadd.f32 0.0, %v1203
        %v1205 = vpop.f32.mrb[0].mxu0
        %1206 = vmatprep.mubr.bf16.mxu0 0
        %1207 = vmatmul.mubr.bf16.gmra.mrb[0].mxu0 %v1033
        %v1208 = vpop.f32.mrb[0].mxu0
        %v1209 = vadd.f32 0.0, %v1208
        %v1210 = vpop.f32.mrb[0].mxu0
        %v1211 = vpop.f32.mrb[0].mxu0
        %v1212 = vadd.f32 0.0, %v1211
        %v1213 = vpop.f32.mrb[0].mxu0
        %1214 = vmatprep.mubr.bf16.mxu0 0
        %1215 = vmatmul.mubr.bf16.gmra.mrb[0].mxu0 %v1036
        %v1216 = vpop.f32.mrb[0].mxu0
        %v1217 = vadd.f32 0.0, %v1216
        %v1218 = vpop.f32.mrb[0].mxu0
        %v1219 = vpop.f32.mrb[0].mxu0
        %v1220 = vadd.f32 0.0, %v1219
        %v1221 = vpop.f32.mrb[0].mxu0
        %1222 = vdwg.mxu0
        %v1223 = vmul.f32 %v1097, 0.17677669
        %v1224 = vmul.f32 %v1100, 0.17677669
        %v1225 = vmul.f32 %v1105, 0.17677669
        %v1226 = vmul.f32 %v1108, 0.17677669
        %v1227 = vmul.f32 %v1113, 0.17677669
        %v1228 = vmul.f32 %v1116, 0.17677669
        %v1229 = vmul.f32 %v1121, 0.17677669
        %v1230 = vmul.f32 %v1124, 0.17677669
        %v1231 = vmul.f32 %v1129, 0.17677669
        %v1232 = vmul.f32 %v1132, 0.17677669
        %v1233 = vmul.f32 %v1137, 0.17677669
        %v1234 = vmul.f32 %v1140, 0.17677669
        %v1235 = vmul.f32 %v1145, 0.17677669
        %v1236 = vmul.f32 %v1148, 0.17677669
        %v1237 = vmul.f32 %v1153, 0.17677669
        %v1238 = vmul.f32 %v1156, 0.17677669
        %v1239 = vmul.f32 %v1161, 0.17677669
        %v1240 = vmul.f32 %v1164, 0.17677669
        %v1241 = vmul.f32 %v1169, 0.17677669
        %v1242 = vmul.f32 %v1172, 0.17677669
        %v1243 = vmul.f32 %v1177, 0.17677669
        %v1244 = vmul.f32 %v1180, 0.17677669
        %v1245 = vmul.f32 %v1185, 0.17677669
        %v1246 = vmul.f32 %v1188, 0.17677669
        %v1247 = vmul.f32 %v1193, 0.17677669
        %v1248 = vmul.f32 %v1196, 0.17677669
        %v1249 = vmul.f32 %v1201, 0.17677669
        %v1250 = vmul.f32 %v1204, 0.17677669
        %v1251 = vmul.f32 %v1209, 0.17677669
        %v1252 = vmul.f32 %v1212, 0.17677669
        %v1253 = vmul.f32 %v1217, 0.17677669
        %v1254 = vmul.f32 %v1220, 0.17677669
        %v1255 = vld [vmem:[%s6] sm:$0x1]
        %v1257 = vlaneseq
        %v1258 = vshrl.u32 %v1257, 7
        %v1259 = vsub.s32 0, %v1258
        %v1260 = vrot.slane %v1255, %v1259
        %v1262 = vadd.f32 %v1223, %v1260
        %v1263 = vadd.f32 %v1224, %v1260
        %v1264 = vadd.f32 %v1225, %v1260
        %v1265 = vadd.f32 %v1226, %v1260
        %v1266 = vadd.f32 %v1227, %v1260
        %v1267 = vadd.f32 %v1228, %v1260
        %v1268 = vadd.f32 %v1229, %v1260
        %v1269 = vadd.f32 %v1230, %v1260
        %v1270 = vadd.f32 %v1231, %v1260
        %v1271 = vadd.f32 %v1232, %v1260
        %v1272 = vadd.f32 %v1233, %v1260
        %v1273 = vadd.f32 %v1234, %v1260
        %v1274 = vadd.f32 %v1235, %v1260
        %v1275 = vadd.f32 %v1236, %v1260
        %v1276 = vadd.f32 %v1237, %v1260
        %v1277 = vadd.f32 %v1238, %v1260
        %v1278 = vadd.f32 %v1239, %v1260
        %v1279 = vadd.f32 %v1240, %v1260
        %v1280 = vadd.f32 %v1241, %v1260
        %v1281 = vadd.f32 %v1242, %v1260
        %v1282 = vadd.f32 %v1243, %v1260
        %v1283 = vadd.f32 %v1244, %v1260
        %v1284 = vadd.f32 %v1245, %v1260
        %v1285 = vadd.f32 %v1246, %v1260
        %v1286 = vadd.f32 %v1247, %v1260
        %v1287 = vadd.f32 %v1248, %v1260
        %v1288 = vadd.f32 %v1249, %v1260
        %v1289 = vadd.f32 %v1250, %v1260
        %v1290 = vadd.f32 %v1251, %v1260
        %v1291 = vadd.f32 %v1252, %v1260
        %v1292 = vadd.f32 %v1253, %v1260
        %v1293 = vadd.f32 %v1254, %v1260
        %1294 = vmax.xlane.f32.xlu0 %v1262
        %v1295 = vpop.xlane.xlu0 %1294
        %1296 = vmax.xlane.f32.xlu0 %v1263
        %v1297 = vpop.xlane.xlu0 %1296
        %1298 = vmax.xlane.f32.xlu0 %v1264
        %v1299 = vpop.xlane.xlu0 %1298
        %1300 = vmax.xlane.f32.xlu0 %v1265
        %v1301 = vpop.xlane.xlu0 %1300
        %1302 = vmax.xlane.f32.xlu0 %v1266
        %v1303 = vpop.xlane.xlu0 %1302
        %1304 = vmax.xlane.f32.xlu0 %v1267
        %v1305 = vpop.xlane.xlu0 %1304
        %1306 = vmax.xlane.f32.xlu0 %v1268
        %v1307 = vpop.xlane.xlu0 %1306
        %1308 = vmax.xlane.f32.xlu0 %v1269
        %v1309 = vpop.xlane.xlu0 %1308
        %1310 = vmax.xlane.f32.xlu0 %v1270
        %v1311 = vpop.xlane.xlu0 %1310
        %1312 = vmax.xlane.f32.xlu0 %v1271
        %v1313 = vpop.xlane.xlu0 %1312
        %1314 = vmax.xlane.f32.xlu0 %v1272
        %v1315 = vpop.xlane.xlu0 %1314
        %1316 = vmax.xlane.f32.xlu0 %v1273
        %v1317 = vpop.xlane.xlu0 %1316
        %1318 = vmax.xlane.f32.xlu0 %v1274
        %v1319 = vpop.xlane.xlu0 %1318
        %1320 = vmax.xlane.f32.xlu0 %v1275
        %v1321 = vpop.xlane.xlu0 %1320
        %1322 = vmax.xlane.f32.xlu0 %v1276
        %v1323 = vpop.xlane.xlu0 %1322
        %1324 = vmax.xlane.f32.xlu0 %v1277
        %v1325 = vpop.xlane.xlu0 %1324
        %1326 = vmax.xlane.f32.xlu0 %v1278
        %v1327 = vpop.xlane.xlu0 %1326
        %1328 = vmax.xlane.f32.xlu0 %v1279
        %v1329 = vpop.xlane.xlu0 %1328
        %1330 = vmax.xlane.f32.xlu0 %v1280
        %v1331 = vpop.xlane.xlu0 %1330
        %1332 = vmax.xlane.f32.xlu0 %v1281
        %v1333 = vpop.xlane.xlu0 %1332
        %1334 = vmax.xlane.f32.xlu0 %v1282
        %v1335 = vpop.xlane.xlu0 %1334
        %1336 = vmax.xlane.f32.xlu0 %v1283
        %v1337 = vpop.xlane.xlu0 %1336
        %1338 = vmax.xlane.f32.xlu0 %v1284
        %v1339 = vpop.xlane.xlu0 %1338
        %1340 = vmax.xlane.f32.xlu0 %v1285
        %v1341 = vpop.xlane.xlu0 %1340
        %1342 = vmax.xlane.f32.xlu0 %v1286
        %v1343 = vpop.xlane.xlu0 %1342
        %1344 = vmax.xlane.f32.xlu0 %v1287
        %v1345 = vpop.xlane.xlu0 %1344
        %1346 = vmax.xlane.f32.xlu0 %v1288
        %v1347 = vpop.xlane.xlu0 %1346
        %1348 = vmax.xlane.f32.xlu0 %v1289
        %v1349 = vpop.xlane.xlu0 %1348
        %1350 = vmax.xlane.f32.xlu0 %v1290
        %v1351 = vpop.xlane.xlu0 %1350
        %1352 = vmax.xlane.f32.xlu0 %v1291
        %v1353 = vpop.xlane.xlu0 %1352
        %1354 = vmax.xlane.f32.xlu0 %v1292
        %v1355 = vpop.xlane.xlu0 %1354
        %1356 = vmax.xlane.f32.xlu0 %v1293
        %v1357 = vpop.xlane.xlu0 %1356
        %v1358 = vsub.f32 %v1262, %v1295
        %v1359 = vsub.f32 %v1263, %v1297
        %v1360 = vsub.f32 %v1264, %v1299
        %v1361 = vsub.f32 %v1265, %v1301
        %v1362 = vsub.f32 %v1266, %v1303
        %v1363 = vsub.f32 %v1267, %v1305
        %v1364 = vsub.f32 %v1268, %v1307
        %v1365 = vsub.f32 %v1269, %v1309
        %v1366 = vsub.f32 %v1270, %v1311
        %v1367 = vsub.f32 %v1271, %v1313
        %v1368 = vsub.f32 %v1272, %v1315
        %v1369 = vsub.f32 %v1273, %v1317
        %v1370 = vsub.f32 %v1274, %v1319
        %v1371 = vsub.f32 %v1275, %v1321
        %v1372 = vsub.f32 %v1276, %v1323
        %v1373 = vsub.f32 %v1277, %v1325
        %v1374 = vsub.f32 %v1278, %v1327
        %v1375 = vsub.f32 %v1279, %v1329
        %v1376 = vsub.f32 %v1280, %v1331
        %v1377 = vsub.f32 %v1281, %v1333
        %v1378 = vsub.f32 %v1282, %v1335
        %v1379 = vsub.f32 %v1283, %v1337
        %v1380 = vsub.f32 %v1284, %v1339
        %v1381 = vsub.f32 %v1285, %v1341
        %v1382 = vsub.f32 %v1286, %v1343
        %v1383 = vsub.f32 %v1287, %v1345
        %v1384 = vsub.f32 %v1288, %v1347
        %v1385 = vsub.f32 %v1289, %v1349
        %v1386 = vsub.f32 %v1290, %v1351
        %v1387 = vsub.f32 %v1291, %v1353
        %v1388 = vsub.f32 %v1292, %v1355
        %v1389 = vsub.f32 %v1293, %v1357
        %v1390 = vmul.f32 %v1358, 1.442695
        %v1391 = vpow.pop %v1390
        %v1392 = vmul.f32 %v1359, 1.442695
        %v1393 = vpow.pop %v1392
        %v1394 = vmul.f32 %v1360, 1.442695
        %v1395 = vpow.pop %v1394
        %v1396 = vmul.f32 %v1361, 1.442695
        %v1397 = vpow.pop %v1396
        %v1398 = vmul.f32 %v1362, 1.442695
        %v1399 = vpow.pop %v1398
        %v1400 = vmul.f32 %v1363, 1.442695
        %v1401 = vpow.pop %v1400
        %v1402 = vmul.f32 %v1364, 1.442695
        %v1403 = vpow.pop %v1402
        %v1404 = vmul.f32 %v1365, 1.442695
        %v1405 = vpow.pop %v1404
        %v1406 = vmul.f32 %v1366, 1.442695
        %v1407 = vpow.pop %v1406
        %v1408 = vmul.f32 %v1367, 1.442695
        %v1409 = vpow.pop %v1408
        %v1410 = vmul.f32 %v1368, 1.442695
        %v1411 = vpow.pop %v1410
        %v1412 = vmul.f32 %v1369, 1.442695
        %v1413 = vpow.pop %v1412
        %v1414 = vmul.f32 %v1370, 1.442695
        %v1415 = vpow.pop %v1414
        %v1416 = vmul.f32 %v1371, 1.442695
        %v1417 = vpow.pop %v1416
        %v1418 = vmul.f32 %v1372, 1.442695
        %v1419 = vpow.pop %v1418
        %v1420 = vmul.f32 %v1373, 1.442695
        %v1421 = vpow.pop %v1420
        %v1422 = vmul.f32 %v1374, 1.442695
        %v1423 = vpow.pop %v1422
        %v1424 = vmul.f32 %v1375, 1.442695
        %v1425 = vpow.pop %v1424
        %v1426 = vmul.f32 %v1376, 1.442695
        %v1427 = vpow.pop %v1426
        %v1428 = vmul.f32 %v1377, 1.442695
        %v1429 = vpow.pop %v1428
        %v1430 = vmul.f32 %v1378, 1.442695
        %v1431 = vpow.pop %v1430
        %v1432 = vmul.f32 %v1379, 1.442695
        %v1433 = vpow.pop %v1432
        %v1434 = vmul.f32 %v1380, 1.442695
        %v1435 = vpow.pop %v1434
        %v1436 = vmul.f32 %v1381, 1.442695
        %v1437 = vpow.pop %v1436
        %v1438 = vmul.f32 %v1382, 1.442695
        %v1439 = vpow.pop %v1438
        %v1440 = vmul.f32 %v1383, 1.442695
        %v1441 = vpow.pop %v1440
        %v1442 = vmul.f32 %v1384, 1.442695
        %v1443 = vpow.pop %v1442
        %v1444 = vmul.f32 %v1385, 1.442695
        %v1445 = vpow.pop %v1444
        %v1446 = vmul.f32 %v1386, 1.442695
        %v1447 = vpow.pop %v1446
        %v1448 = vmul.f32 %v1387, 1.442695
        %v1449 = vpow.pop %v1448
        %v1450 = vmul.f32 %v1388, 1.442695
        %v1451 = vpow.pop %v1450
        %v1452 = vmul.f32 %v1389, 1.442695
        %v1453 = vpow.pop %v1452
        %1454 = vadd.xlane.f32.xlu0 %v1391
        %v1455 = vpop.xlane.xlu0 %1454
        %1456 = vadd.xlane.f32.xlu0 %v1393
        %v1457 = vpop.xlane.xlu0 %1456
        %1458 = vadd.xlane.f32.xlu0 %v1395
        %v1459 = vpop.xlane.xlu0 %1458
        %1460 = vadd.xlane.f32.xlu0 %v1397
        %v1461 = vpop.xlane.xlu0 %1460
        %1462 = vadd.xlane.f32.xlu0 %v1399
        %v1463 = vpop.xlane.xlu0 %1462
        %1464 = vadd.xlane.f32.xlu0 %v1401
        %v1465 = vpop.xlane.xlu0 %1464
        %1466 = vadd.xlane.f32.xlu0 %v1403
        %v1467 = vpop.xlane.xlu0 %1466
        %1468 = vadd.xlane.f32.xlu0 %v1405
        %v1469 = vpop.xlane.xlu0 %1468
        %1470 = vadd.xlane.f32.xlu0 %v1407
        %v1471 = vpop.xlane.xlu0 %1470
        %1472 = vadd.xlane.f32.xlu0 %v1409
        %v1473 = vpop.xlane.xlu0 %1472
        %1474 = vadd.xlane.f32.xlu0 %v1411
        %v1475 = vpop.xlane.xlu0 %1474
        %1476 = vadd.xlane.f32.xlu0 %v1413
        %v1477 = vpop.xlane.xlu0 %1476
        %1478 = vadd.xlane.f32.xlu0 %v1415
        %v1479 = vpop.xlane.xlu0 %1478
        %1480 = vadd.xlane.f32.xlu0 %v1417
        %v1481 = vpop.xlane.xlu0 %1480
        %1482 = vadd.xlane.f32.xlu0 %v1419
        %v1483 = vpop.xlane.xlu0 %1482
        %1484 = vadd.xlane.f32.xlu0 %v1421
        %v1485 = vpop.xlane.xlu0 %1484
        %1486 = vadd.xlane.f32.xlu0 %v1423
        %v1487 = vpop.xlane.xlu0 %1486
        %1488 = vadd.xlane.f32.xlu0 %v1425
        %v1489 = vpop.xlane.xlu0 %1488
        %1490 = vadd.xlane.f32.xlu0 %v1427
        %v1491 = vpop.xlane.xlu0 %1490
        %1492 = vadd.xlane.f32.xlu0 %v1429
        %v1493 = vpop.xlane.xlu0 %1492
        %1494 = vadd.xlane.f32.xlu0 %v1431
        %v1495 = vpop.xlane.xlu0 %1494
        %1496 = vadd.xlane.f32.xlu0 %v1433
        %v1497 = vpop.xlane.xlu0 %1496
        %1498 = vadd.xlane.f32.xlu0 %v1435
        %v1499 = vpop.xlane.xlu0 %1498
        %1500 = vadd.xlane.f32.xlu0 %v1437
        %v1501 = vpop.xlane.xlu0 %1500
        %1502 = vadd.xlane.f32.xlu0 %v1439
        %v1503 = vpop.xlane.xlu0 %1502
        %1504 = vadd.xlane.f32.xlu0 %v1441
        %v1505 = vpop.xlane.xlu0 %1504
        %1506 = vadd.xlane.f32.xlu0 %v1443
        %v1507 = vpop.xlane.xlu0 %1506
        %1508 = vadd.xlane.f32.xlu0 %v1445
        %v1509 = vpop.xlane.xlu0 %1508
        %1510 = vadd.xlane.f32.xlu0 %v1447
        %v1511 = vpop.xlane.xlu0 %1510
        %1512 = vadd.xlane.f32.xlu0 %v1449
        %v1513 = vpop.xlane.xlu0 %1512
        %1514 = vadd.xlane.f32.xlu0 %v1451
        %v1515 = vpop.xlane.xlu0 %1514
        %1516 = vadd.xlane.f32.xlu0 %v1453
        %v1517 = vpop.xlane.xlu0 %1516
        %v1518 = vrcp.pop %v1455
        %v1519 = vrcp.pop %v1457
        %v1520 = vrcp.pop %v1459
        %v1521 = vrcp.pop %v1461
        %v1522 = vrcp.pop %v1463
        %v1523 = vrcp.pop %v1465
        %v1524 = vrcp.pop %v1467
        %v1525 = vrcp.pop %v1469
        %v1526 = vrcp.pop %v1471
        %v1527 = vrcp.pop %v1473
        %v1528 = vrcp.pop %v1475
        %v1529 = vrcp.pop %v1477
        %v1530 = vrcp.pop %v1479
        %v1531 = vrcp.pop %v1481
        %v1532 = vrcp.pop %v1483
        %v1533 = vrcp.pop %v1485
        %v1534 = vrcp.pop %v1487
        %v1535 = vrcp.pop %v1489
        %v1536 = vrcp.pop %v1491
        %v1537 = vrcp.pop %v1493
        %v1538 = vrcp.pop %v1495
        %v1539 = vrcp.pop %v1497
        %v1540 = vrcp.pop %v1499
        %v1541 = vrcp.pop %v1501
        %v1542 = vrcp.pop %v1503
        %v1543 = vrcp.pop %v1505
        %v1544 = vrcp.pop %v1507
        %v1545 = vrcp.pop %v1509
        %v1546 = vrcp.pop %v1511
        %v1547 = vrcp.pop %v1513
        %v1548 = vrcp.pop %v1515
        %v1549 = vrcp.pop %v1517
        %v1550 = vmul.f32 %v1391, %v1518
        %v1551 = vmul.f32 %v1393, %v1519
        %v1552 = vmul.f32 %v1395, %v1520
        %v1553 = vmul.f32 %v1397, %v1521
        %v1554 = vmul.f32 %v1399, %v1522
        %v1555 = vmul.f32 %v1401, %v1523
        %v1556 = vmul.f32 %v1403, %v1524
        %v1557 = vmul.f32 %v1405, %v1525
        %v1558 = vmul.f32 %v1407, %v1526
        %v1559 = vmul.f32 %v1409, %v1527
        %v1560 = vmul.f32 %v1411, %v1528
        %v1561 = vmul.f32 %v1413, %v1529
        %v1562 = vmul.f32 %v1415, %v1530
        %v1563 = vmul.f32 %v1417, %v1531
        %v1564 = vmul.f32 %v1419, %v1532
        %v1565 = vmul.f32 %v1421, %v1533
        %v1566 = vmul.f32 %v1423, %v1534
        %v1567 = vmul.f32 %v1425, %v1535
        %v1568 = vmul.f32 %v1427, %v1536
        %v1569 = vmul.f32 %v1429, %v1537
        %v1570 = vmul.f32 %v1431, %v1538
        %v1571 = vmul.f32 %v1433, %v1539
        %v1572 = vmul.f32 %v1435, %v1540
        %v1573 = vmul.f32 %v1437, %v1541
        %v1574 = vmul.f32 %v1439, %v1542
        %v1575 = vmul.f32 %v1441, %v1543
        %v1576 = vmul.f32 %v1443, %v1544
        %v1577 = vmul.f32 %v1445, %v1545
        %v1578 = vmul.f32 %v1447, %v1546
        %v1579 = vmul.f32 %v1449, %v1547
        %v1580 = vmul.f32 %v1451, %v1548
        %v1581 = vmul.f32 %v1453, %v1549
        %v1582 = vpack.c.bf16 %v1551, %v1550
        %v1583 = vpack.c.bf16 %v1553, %v1552
        %v1584 = vpack.c.bf16 %v1555, %v1554
        %v1585 = vpack.c.bf16 %v1557, %v1556
        %v1586 = vpack.c.bf16 %v1559, %v1558
        %v1587 = vpack.c.bf16 %v1561, %v1560
        %v1588 = vpack.c.bf16 %v1563, %v1562
        %v1589 = vpack.c.bf16 %v1565, %v1564
        %v1590 = vpack.c.bf16 %v1567, %v1566
        %v1591 = vpack.c.bf16 %v1569, %v1568
        %v1592 = vpack.c.bf16 %v1571, %v1570
        %v1593 = vpack.c.bf16 %v1573, %v1572
        %v1594 = vpack.c.bf16 %v1575, %v1574
        %v1595 = vpack.c.bf16 %v1577, %v1576
        %v1596 = vpack.c.bf16 %v1579, %v1578
        %v1597 = vpack.c.bf16 %v1581, %v1580
        %v1614 = vunpack.c.l.b16 %v1582
        %v1615 = vunpack.c.h.b16 %v1582
        %v1616 = vunpack.c.l.b16 %v1583
        %v1617 = vunpack.c.h.b16 %v1583
        %v1618 = vunpack.c.l.b16 %v1584
        %v1619 = vunpack.c.h.b16 %v1584
        %v1620 = vunpack.c.l.b16 %v1585
        %v1621 = vunpack.c.h.b16 %v1585
        %v1622 = vunpack.c.l.b16 %v1586
        %v1623 = vunpack.c.h.b16 %v1586
        %v1624 = vunpack.c.l.b16 %v1587
        %v1625 = vunpack.c.h.b16 %v1587
        %v1626 = vunpack.c.l.b16 %v1588
        %v1627 = vunpack.c.h.b16 %v1588
        %v1628 = vunpack.c.l.b16 %v1589
        %v1629 = vunpack.c.h.b16 %v1589
        %v1630 = vunpack.c.l.b16 %v1590
        %v1631 = vunpack.c.h.b16 %v1590
        %v1632 = vunpack.c.l.b16 %v1591
        %v1633 = vunpack.c.h.b16 %v1591
        %v1634 = vunpack.c.l.b16 %v1592
        %v1635 = vunpack.c.h.b16 %v1592
        %v1636 = vunpack.c.l.b16 %v1593
        %v1637 = vunpack.c.h.b16 %v1593
        %v1638 = vunpack.c.l.b16 %v1594
        %v1639 = vunpack.c.h.b16 %v1594
        %v1640 = vunpack.c.l.b16 %v1595
        %v1641 = vunpack.c.h.b16 %v1595
        %v1642 = vunpack.c.l.b16 %v1596
        %v1643 = vunpack.c.h.b16 %v1596
        %v1644 = vunpack.c.l.b16 %v1597
        %v1645 = vunpack.c.h.b16 %v1597
        %v1646 = vpack.c.b16 %v1614, %v1614
        %v1647 = vpack.c.b16 %v1615, %v1615
        %v1648 = vpack.c.b16 %v1616, %v1616
        %v1649 = vpack.c.b16 %v1617, %v1617
        %v1650 = vpack.c.b16 %v1618, %v1618
        %v1651 = vpack.c.b16 %v1619, %v1619
        %v1652 = vpack.c.b16 %v1620, %v1620
        %v1653 = vpack.c.b16 %v1621, %v1621
        %v1654 = vpack.c.b16 %v1622, %v1622
        %v1655 = vpack.c.b16 %v1623, %v1623
        %v1656 = vpack.c.b16 %v1624, %v1624
        %v1657 = vpack.c.b16 %v1625, %v1625
        %v1658 = vpack.c.b16 %v1626, %v1626
        %v1659 = vpack.c.b16 %v1627, %v1627
        %v1660 = vpack.c.b16 %v1628, %v1628
        %v1661 = vpack.c.b16 %v1629, %v1629
        %v1662 = vpack.c.b16 %v1630, %v1630
        %v1663 = vpack.c.b16 %v1631, %v1631
        %v1664 = vpack.c.b16 %v1632, %v1632
        %v1665 = vpack.c.b16 %v1633, %v1633
        %v1666 = vpack.c.b16 %v1634, %v1634
        %v1667 = vpack.c.b16 %v1635, %v1635
        %v1668 = vpack.c.b16 %v1636, %v1636
        %v1669 = vpack.c.b16 %v1637, %v1637
        %v1670 = vpack.c.b16 %v1638, %v1638
        %v1671 = vpack.c.b16 %v1639, %v1639
        %v1672 = vpack.c.b16 %v1640, %v1640
        %v1673 = vpack.c.b16 %v1641, %v1641
        %v1674 = vpack.c.b16 %v1642, %v1642
        %v1675 = vpack.c.b16 %v1643, %v1643
        %v1676 = vpack.c.b16 %v1644, %v1644
        %v1677 = vpack.c.b16 %v1645, %v1645
        %1710 = vst [vmem:[%s311] sm:$0xf] %v1646
        %1711 = vst [vmem:[%s311 + $0x4] sm:$0xf] %v1647
        %1712 = vst [vmem:[%s311 + $0x8] sm:$0xf] %v1648
        %1713 = vst [vmem:[%s311 + $0xc] sm:$0xf] %v1649
        %1714 = vst [vmem:[%s311 + $0x10] sm:$0xf] %v1650
        %1715 = vst [vmem:[%s311 + $0x14] sm:$0xf] %v1651
        %1716 = vst [vmem:[%s311 + $0x18] sm:$0xf] %v1652
        %1717 = vst [vmem:[%s311 + $0x1c] sm:$0xf] %v1653
        %1718 = vst [vmem:[%s311 + $0x20] sm:$0xf] %v1654
        %1719 = vst [vmem:[%s311 + $0x24] sm:$0xf] %v1655
        %1720 = vst [vmem:[%s311 + $0x28] sm:$0xf] %v1656
        %1721 = vst [vmem:[%s311 + $0x2c] sm:$0xf] %v1657
        %1722 = vst [vmem:[%s311 + $0x30] sm:$0xf] %v1658
        %1723 = vst [vmem:[%s311 + $0x34] sm:$0xf] %v1659
        %1724 = vst [vmem:[%s311 + $0x38] sm:$0xf] %v1660
        %1725 = vst [vmem:[%s311 + $0x3c] sm:$0xf] %v1661
        %1726 = vst [vmem:[%s311 + $0x40] sm:$0xf] %v1662
        %1727 = vst [vmem:[%s311 + $0x44] sm:$0xf] %v1663
        %1728 = vst [vmem:[%s311 + $0x48] sm:$0xf] %v1664
        %1729 = vst [vmem:[%s311 + $0x4c] sm:$0xf] %v1665
        %1730 = vst [vmem:[%s311 + $0x50] sm:$0xf] %v1666
        %1731 = vst [vmem:[%s311 + $0x54] sm:$0xf] %v1667
        %1732 = vst [vmem:[%s311 + $0x58] sm:$0xf] %v1668
        %1733 = vst [vmem:[%s311 + $0x5c] sm:$0xf] %v1669
        %1734 = vst [vmem:[%s311 + $0x60] sm:$0xf] %v1670
        %1735 = vst [vmem:[%s311 + $0x64] sm:$0xf] %v1671
        %1736 = vst [vmem:[%s311 + $0x68] sm:$0xf] %v1672
        %1737 = vst [vmem:[%s311 + $0x6c] sm:$0xf] %v1673
        %1738 = vst [vmem:[%s311 + $0x70] sm:$0xf] %v1674
        %1739 = vst [vmem:[%s311 + $0x74] sm:$0xf] %v1675
        %1740 = vst [vmem:[%s311 + $0x78] sm:$0xf] %v1676
        %1741 = vst [vmem:[%s311 + $0x7c] sm:$0xf] %v1677
        %s1742 = sand.u32 %s202, 1
        %s1743 = scalar_lea.sflag [#allocation3], %s1742
        %s1744 = sand.u32 %s202, 1
        %s1745 = smul.addr %s1744, 128
        %s1746 = scalar_lea.vmem [#allocation2], %s1745
        // Predicated region
        $region49: #{tpu_custom_call.1} parent=47 // pred_check
          %p1747 = pneg %p212
        $region50: #{tpu_custom_call.1} parent=47 // pred_check_branch
          %1749 = sbr.rel (%p1747) target = $region52
        $region51: #{tpu_custom_call.1} parent=47 // pred_region
          %s1750 = smul.u32 32, %s26
          %s1752 = ssub.s32 2048, 2048
          %1753 = vsyncadd %s1743, %s1752
          %s1754 = smul.addr %s25, 32
          %s1755 = sadd.s32 %s1750, %s1754
          %s1756 = smul.addr %s1755, 64
          %s1757 = scalar_lea.hbm %s7, %s1756
          %s1758 = sshll.u32 %s1746, 4
          %s1759 = int_to_ptr.vmem [resolvable:$true] %s1758
          %1764 = dma.vmem_to_hbm [thread:$0]  %s1759, 2048, %s1757, %s1743, 64, 64, 4
        $region52: #{tpu_custom_call.1} parent=47 // pred_fallthru
          _
      $region48: #{tpu_custom_call.1} parent=5 // pred_fallthru
        _
      %p1765 = scmp.le.s32.totalorder 2, %s16
      // Predicated region
      $region53: #{tpu_custom_call.1} parent=5 // pred_check
        %p1766 = pneg %p1765
      $region54: #{tpu_custom_call.1} parent=5 // pred_check_branch
        %1768 = sbr.rel (%p1766) target = $region56
      $region55: #{tpu_custom_call.1} parent=5 // pred_region
        %s1769 = ssub.s32 %s16, 2
        // Predicated region
        $region57: #{tpu_custom_call.1} parent=55 // pred_check
          %p1770 = pneg %p218
        $region58: #{tpu_custom_call.1} parent=55 // pred_check_branch
          %1772 = sbr.rel (%p1770) target = $region60
        $region59: #{tpu_custom_call.1} parent=55 // pred_region
          %s1773 = sand.u32 %s203, 1
          %s1774 = scalar_lea.sflag [#allocation3], %s1773
          %s1775 = sand.u32 %s203, 1
          %s1776 = smul.addr %s1775, 128
          %s1777 = scalar_lea.vmem [#allocation2], %s1776
          %1778 = dma.done %s1774, 2048
        $region60: #{tpu_custom_call.1} parent=55 // pred_fallthru
          _
      $region56: #{tpu_custom_call.1} parent=5 // pred_fallthru
        _
    $region6: #{tpu_custom_call.1} parent=1 // loop_footer
      %s20 = sadd.s32 1, %s16
    $region7: #{tpu_custom_call.1} parent=1 // loop_footer_branch
      %15 = sbr.rel target = $region3
    $region8: #{tpu_custom_call.1} parent=1 // loop_exit
      _
    %1779 = vsyncpa [#allocation3], 1
    %s1780 = scalar_lea.sflag [#allocation3], 1
    %1781 = vsyncpa %s1780, 1

// kernel: tpu_custom_call.1
$region0: #{tpu_custom_call.1}
  #allocation0 [shape = 'u32[]', space=smem, size = 0x4, offset = 0x4, fixed_abs, tag = 'smem constant byte address 0x4 - core index']
  #allocation1 [shape = 'u32[144,128]{1,0:T(1,128)}', space=vmem, size = 0x12000, scoped, tag = 'internal scratch']
  %s0 = inlined_call_operand.vmem [shape: f32[2,32,256], index: 0, kind: input, shape index: {}]
  %s1 = inlined_call_operand.vmem [shape: bf16[2,128,32], index: 1, kind: input, shape index: {}]
  %s2 = inlined_call_operand.vmem [shape: bf16[32,32], index: 2, kind: input, shape index: {}]
  %s3 = inlined_call_operand.vmem [shape: f32[1,32], index: 3, kind: input, shape index: {}]
  %s4 = inlined_call_operand.vmem [shape: bf16[32,32], index: 4, kind: input, shape index: {}]
  %s5 = inlined_call_operand.vmem [shape: f32[1,32], index: 5, kind: input, shape index: {}]
  %s6 = inlined_call_operand.vmem [shape: f32[1,128], index: 6, kind: input, shape index: {}]
  %s7 = inlined_call_operand.hbm [shape: bf16[2,256,128], index: 7, kind: output, shape index: {}]
  %s8 = sld [smem:[#allocation0]]
  $region61: #{tpu_custom_call.1} parent=0
    _
  %s10 = ssub.s32 1, %s8
  %s11 = scalar_select 0, %s10, %s8
  $region1: #{tpu_custom_call.1} parent=0
    #allocation2 [shape = 'u8[131072]{0}', space=vmem, size = 0x20000, scoped, tag = 'output window, operand 0']
    #allocation3 [shape = 's32[2]{0}', space=sflag, size = 0x8, scoped, tag = 'scoped memory for tpu_custom_call.1']
    %12 = vsyncpa [#allocation3], 0
    %s13 = scalar_lea.sflag [#allocation3], 1
    %14 = vsyncpa %s13, 0
    loop: start=0, step=1, limit=4
    $region2: #{tpu_custom_call.1} parent=1 // loop_pre_header
      _
    $region3: #{tpu_custom_call.1} parent=1 // loop_header
      %s16 = sphi 0, %s20
      %p17 = scmp.ge.s32.totalorder %s16, 4
      %s23 = sphi 0, %s35
      %s24 = sphi 0, %s31
      %s25 = sphi 0, %s23
      %s26 = sphi 0, %s24
      %s27 = sphi 0, %s25
      %s28 = sphi 0, %s26
      %s40 = sphi 0, %s42
      %s43 = sphi 0, %s40
      %s44 = sphi 0, %s43
      %s60 = sphi 0, %s44
      %s66 = sphi 0, %s68
      %s69 = sphi 0, %s66
      %s70 = sphi 0, %s69
      %s86 = sphi 0, %s70
      %s90 = sphi 0, %s90
      %s92 = sphi 0, %s90
      %s93 = sphi 0, %s92
      %s107 = sphi 0, %s93
      %s111 = sphi 0, %s111
      %s113 = sphi 0, %s111
      %s114 = sphi 0, %s113
      %s128 = sphi 0, %s114
      %s132 = sphi 0, %s132
      %s134 = sphi 0, %s132
      %s135 = sphi 0, %s134
      %s149 = sphi 0, %s135
      %s153 = sphi 0, %s153
      %s155 = sphi 0, %s153
      %s156 = sphi 0, %s155
      %s170 = sphi 0, %s156
      %s174 = sphi 0, %s174
      %s176 = sphi 0, %s174
      %s177 = sphi 0, %s176
      %s191 = sphi 0, %s177
      %s199 = sphi 0, %s201
      %s202 = sphi 0, %s199
      %s203 = sphi 0, %s202
      %s219 = sphi 0, %s203
    $region4: #{tpu_custom_call.1} parent=1 // loop_header_branch
      %19 = sbr.rel (%p17) target = $region8
    $region5: #{tpu_custom_call.1} parent=1 // loop_body
      %s21 = ssub.s32 %s16, 1
      %s22 = ssub.s32 %s16, 2
      %s29 = sadd.s32 1, %s24
      %p30 = scmp.ge.s32.totalorder %s29, 1
      %s31 = scalar_select %p30, 0, %s29
      %s32 = sadd.s32 1, %s23
      %s33 = scalar_select %p30, %s32, %s23
      %p34 = scmp.ge.s32.totalorder %s33, 2
      %s35 = scalar_select %p34, 0, %s33
      %s36 = ssub.s32 %s23, %s35
      %s37 = ssub.s32 %s24, %s31
      %s38 = sor.u32 %s36, %s37
      %p39 = scmp.eq.s32.totalorder %s38, 0
      %s41 = sadd.s32 %s40, 1
      %s42 = scalar_select %p39, %s40, %s41
      %p45 = pneg %p39
      %p46 = scmp.eq.s32.totalorder %s16, 1
      %p47 = por %p45, %p46
      %p48 = scmp.ne.s32.totalorder %s40, %s43
      %p49 = scmp.eq.s32.totalorder %s16, 0
      %p50 = por %p48, %p49
      %p51 = scmp.ne.s32.totalorder %s40, %s43
      %p52 = scmp.eq.s32.totalorder %s21, 1
      %p53 = por %p51, %p52
      %p54 = scmp.ne.s32.totalorder %s43, %s44
      %p55 = scmp.eq.s32.totalorder %s21, 0
      %p56 = por %p54, %p55
      %p57 = scmp.ne.s32.totalorder %s43, %s44
      %p58 = scmp.eq.s32.totalorder %s22, 1
      %p59 = por %p57, %p58
      %p61 = scmp.ne.s32.totalorder %s44, %s60
      %p62 = scmp.eq.s32.totalorder %s22, 0
      %p63 = por %p61, %p62
      %s64 = ssub.s32 %s23, %s35
      %p65 = scmp.eq.s32.totalorder %s64, 0
      %s67 = sadd.s32 %s66, 1
      %s68 = scalar_select %p65, %s66, %s67
      %p71 = pneg %p65
      %p72 = scmp.eq.s32.totalorder %s16, 1
      %p73 = por %p71, %p72
      %p74 = scmp.ne.s32.totalorder %s66, %s69
      %p75 = scmp.eq.s32.totalorder %s16, 0
      %p76 = por %p74, %p75
      %p77 = scmp.ne.s32.totalorder %s66, %s69
      %p78 = scmp.eq.s32.totalorder %s21, 1
      %p79 = por %p77, %p78
      %p80 = scmp.ne.s32.totalorder %s69, %s70
      %p81 = scmp.eq.s32.totalorder %s21, 0
      %p82 = por %p80, %p81
      %p83 = scmp.ne.s32.totalorder %s69, %s70
      %p84 = scmp.eq.s32.totalorder %s22, 1
      %p85 = por %p83, %p84
      %p87 = scmp.ne.s32.totalorder %s70, %s86
      %p88 = scmp.eq.s32.totalorder %s22, 0
      %p89 = por %p87, %p88
      %s91 = sadd.s32 %s90, 1
      %p94 = scmp.eq.s32.totalorder %s16, 1
      %p95 = scmp.ne.s32.totalorder %s90, %s92
      %p96 = scmp.eq.s32.totalorder %s16, 0
      %p97 = por %p95, %p96
      %p98 = scmp.ne.s32.totalorder %s90, %s92
      %p99 = scmp.eq.s32.totalorder %s21, 1
      %p100 = por %p98, %p99
      %p101 = scmp.ne.s32.totalorder %s92, %s93
      %p102 = scmp.eq.s32.totalorder %s21, 0
      %p103 = por %p101, %p102
      %p104 = scmp.ne.s32.totalorder %s92, %s93
      %p105 = scmp.eq.s32.totalorder %s22, 1
      %p106 = por %p104, %p105
      %p108 = scmp.ne.s32.totalorder %s93, %s107
      %p109 = scmp.eq.s32.totalorder %s22, 0
      %p110 = por %p108, %p109
      %s112 = sadd.s32 %s111, 1
      %p115 = scmp.eq.s32.totalorder %s16, 1
      %p116 = scmp.ne.s32.totalorder %s111, %s113
      %p117 = scmp.eq.s32.totalorder %s16, 0
      %p118 = por %p116, %p117
      %p119 = scmp.ne.s32.totalorder %s111, %s113
      %p120 = scmp.eq.s32.totalorder %s21, 1
      %p121 = por %p119, %p120
      %p122 = scmp.ne.s32.totalorder %s113, %s114
      %p123 = scmp.eq.s32.totalorder %s21, 0
      %p124 = por %p122, %p123
      %p125 = scmp.ne.s32.totalorder %s113, %s114
      %p126 = scmp.eq.s32.totalorder %s22, 1
      %p127 = por %p125, %p126
      %p129 = scmp.ne.s32.totalorder %s114, %s128
      %p130 = scmp.eq.s32.totalorder %s22, 0
      %p131 = por %p129, %p130
      %s133 = sadd.s32 %s132, 1
      %p136 = scmp.eq.s32.totalorder %s16, 1
      %p137 = scmp.ne.s32.totalorder %s132, %s134
      %p138 = scmp.eq.s32.totalorder %s16, 0
      %p139 = por %p137, %p138
      %p140 = scmp.ne.s32.totalorder %s132, %s134
      %p141 = scmp.eq.s32.totalorder %s21, 1
      %p142 = por %p140, %p141
      %p143 = scmp.ne.s32.totalorder %s134, %s135
      %p144 = scmp.eq.s32.totalorder %s21, 0
      %p145 = por %p143, %p144
      %p146 = scmp.ne.s32.totalorder %s134, %s135
      %p147 = scmp.eq.s32.totalorder %s22, 1
      %p148 = por %p146, %p147
      %p150 = scmp.ne.s32.totalorder %s135, %s149
      %p151 = scmp.eq.s32.totalorder %s22, 0
      %p152 = por %p150, %p151
      %s154 = sadd.s32 %s153, 1
      %p157 = scmp.eq.s32.totalorder %s16, 1
      %p158 = scmp.ne.s32.totalorder %s153, %s155
      %p159 = scmp.eq.s32.totalorder %s16, 0
      %p160 = por %p158, %p159
      %p161 = scmp.ne.s32.totalorder %s153, %s155
      %p162 = scmp.eq.s32.totalorder %s21, 1
      %p163 = por %p161, %p162
      %p164 = scmp.ne.s32.totalorder %s155, %s156
      %p165 = scmp.eq.s32.totalorder %s21, 0
      %p166 = por %p164, %p165
      %p167 = scmp.ne.s32.totalorder %s155, %s156
      %p168 = scmp.eq.s32.totalorder %s22, 1
      %p169 = por %p167, %p168
      %p171 = scmp.ne.s32.totalorder %s156, %s170
      %p172 = scmp.eq.s32.totalorder %s22, 0
      %p173 = por %p171, %p172
      %s175 = sadd.s32 %s174, 1
      %p178 = scmp.eq.s32.totalorder %s16, 1
      %p179 = scmp.ne.s32.totalorder %s174, %s176
      %p180 = scmp.eq.s32.totalorder %s16, 0
      %p181 = por %p179, %p180
      %p182 = scmp.ne.s32.totalorder %s174, %s176
      %p183 = scmp.eq.s32.totalorder %s21, 1
      %p184 = por %p182, %p183
      %p185 = scmp.ne.s32.totalorder %s176, %s177
      %p186 = scmp.eq.s32.totalorder %s21, 0
      %p187 = por %p185, %p186
      %p188 = scmp.ne.s32.totalorder %s176, %s177
      %p189 = scmp.eq.s32.totalorder %s22, 1
      %p190 = por %p188, %p189
      %p192 = scmp.ne.s32.totalorder %s177, %s191
      %p193 = scmp.eq.s32.totalorder %s22, 0
      %p194 = por %p192, %p193
      %s195 = ssub.s32 %s23, %s35
      %s196 = ssub.s32 %s24, %s31
      %s197 = sor.u32 %s195, %s196
      %p198 = scmp.eq.s32.totalorder %s197, 0
      %s200 = sadd.s32 %s199, 1
      %s201 = scalar_select %p198, %s199, %s200
      %p204 = pneg %p198
      %p205 = scmp.eq.s32.totalorder %s16, 1
      %p206 = por %p204, %p205
      %p207 = scmp.ne.s32.totalorder %s199, %s202
      %p208 = scmp.eq.s32.totalorder %s16, 0
      %p209 = por %p207, %p208
      %p210 = scmp.ne.s32.totalorder %s199, %s202
      %p211 = scmp.eq.s32.totalorder %s21, 1
      %p212 = por %p210, %p211
      %p213 = scmp.ne.s32.totalorder %s202, %s203
      %p214 = scmp.eq.s32.totalorder %s21, 0
      %p215 = por %p213, %p214
      %p216 = scmp.ne.s32.totalorder %s202, %s203
      %p217 = scmp.eq.s32.totalorder %s22, 1
      %p218 = por %p216, %p217
      %p220 = scmp.ne.s32.totalorder %s203, %s219
      %p221 = scmp.eq.s32.totalorder %s22, 0
      %p222 = por %p220, %p221
      %p223 = scmp.le.s32.totalorder 1, %s16
      %p224 = scmp.lt.s32.totalorder %s16, 3
      %p225 = pnand %p223, %p224
      %p226 = pneg %p225
      // Predicated region
      $region9: #{tpu_custom_call.1} parent=5 // pred_check
        _
      $region10: #{tpu_custom_call.1} parent=5 // pred_check_branch
        %228 = sbr.rel (%p225) target = $region12
      $region11: #{tpu_custom_call.1} parent=5 // pred_region
        %s229 = ssub.s32 %s16, 1
        // Predicated region
        $region13: #{tpu_custom_call.1} parent=11 // pred_check
          %p230 = pneg %p103
        $region14: #{tpu_custom_call.1} parent=11 // pred_check_branch
          %232 = sbr.rel (%p230) target = $region16
        $region15: #{tpu_custom_call.1} parent=11 // pred_region
          _
        $region16: #{tpu_custom_call.1} parent=11 // pred_fallthru
          _
        // Predicated region
        $region17: #{tpu_custom_call.1} parent=11 // pred_check
          %p233 = pneg %p124
        $region18: #{tpu_custom_call.1} parent=11 // pred_check_branch
          %235 = sbr.rel (%p233) target = $region20
        $region19: #{tpu_custom_call.1} parent=11 // pred_region
          _
        $region20: #{tpu_custom_call.1} parent=11 // pred_fallthru
          _
        // Predicated region
        $region21: #{tpu_custom_call.1} parent=11 // pred_check
          %p236 = pneg %p145
        $region22: #{tpu_custom_call.1} parent=11 // pred_check_branch
          %238 = sbr.rel (%p236) target = $region24
        $region23: #{tpu_custom_call.1} parent=11 // pred_region
          _
        $region24: #{tpu_custom_call.1} parent=11 // pred_fallthru
          _
        // Predicated region
        $region25: #{tpu_custom_call.1} parent=11 // pred_check
          %p239 = pneg %p166
        $region26: #{tpu_custom_call.1} parent=11 // pred_check_branch
          %241 = sbr.rel (%p239) target = $region28
        $region27: #{tpu_custom_call.1} parent=11 // pred_region
          _
        $region28: #{tpu_custom_call.1} parent=11 // pred_fallthru
          _
        // Predicated region
        $region29: #{tpu_custom_call.1} parent=11 // pred_check
          %p242 = pneg %p187
        $region30: #{tpu_custom_call.1} parent=11 // pred_check_branch
          %244 = sbr.rel (%p242) target = $region32
        $region31: #{tpu_custom_call.1} parent=11 // pred_region
          _
        $region32: #{tpu_custom_call.1} parent=11 // pred_fallthru
          _
      $region12: #{tpu_custom_call.1} parent=5 // pred_fallthru
        _
      %p245 = scmp.lt.s32.totalorder %s16, 2
      // Predicated region
      $region33: #{tpu_custom_call.1} parent=5 // pred_check
        %p246 = pneg %p245
      $region34: #{tpu_custom_call.1} parent=5 // pred_check_branch
        %248 = sbr.rel (%p246) target = $region36
      $region35: #{tpu_custom_call.1} parent=5 // pred_region
        // Predicated region
        $region37: #{tpu_custom_call.1} parent=35 // pred_check
          %p249 = pneg %p50
        $region38: #{tpu_custom_call.1} parent=35 // pred_check_branch
          %251 = sbr.rel (%p249) target = $region40
        $region39: #{tpu_custom_call.1} parent=35 // pred_region
          %s252 = smul.u32 2, %s24
          %p253 = scmp.lt.s32.totalorder %s23, 1
          %s254 = scalar_select %p253, %s23, 1
          %p255 = scmp.lt.s32.totalorder %s252, 1
          %s256 = scalar_select %p255, %s252, 1
          %s257 = smul.addr %s254, 8
          %s258 = sadd.s32 %s256, %s257
          %s259 = smul.addr %s258, 8
          %s260 = scalar_lea.vmem %s0, %s259
          %s261 = smul.u32 2, %s24
        $region40: #{tpu_custom_call.1} parent=35 // pred_fallthru
          _
        // Predicated region
        $region41: #{tpu_custom_call.1} parent=35 // pred_check
          %p262 = pneg %p76
        $region42: #{tpu_custom_call.1} parent=35 // pred_check_branch
          %264 = sbr.rel (%p262) target = $region44
        $region43: #{tpu_custom_call.1} parent=35 // pred_region
          %p265 = scmp.lt.s32.totalorder %s23, 1
          %s266 = scalar_select %p265, %s23, 1
          %s267 = smul.addr %s266, 16
          %s268 = smul.addr %s267, 4
          %s269 = scalar_lea.vmem %s1, %s268
        $region44: #{tpu_custom_call.1} parent=35 // pred_fallthru
          _
      $region36: #{tpu_custom_call.1} parent=5 // pred_fallthru
        _
      %p270 = scmp.le.s32.totalorder 1, %s16
      %p271 = scmp.lt.s32.totalorder %s16, 3
      %p272 = pnand %p270, %p271
      %p273 = pneg %p272
      // Predicated region
      $region45: #{tpu_custom_call.1} parent=5 // pred_check
        _
      $region46: #{tpu_custom_call.1} parent=5 // pred_check_branch
        %275 = sbr.rel (%p272) target = $region48
      $region47: #{tpu_custom_call.1} parent=5 // pred_region
        %s276 = ssub.s32 %s16, 1
        %s277 = smul.u32 2, %s26
        %p278 = scmp.lt.s32.totalorder %s25, 1
        %s279 = scalar_select %p278, %s25, 1
        %p280 = scmp.lt.s32.totalorder %s277, 1
        %s281 = scalar_select %p280, %s277, 1
        %s282 = smul.addr %s279, 8
        %s283 = sadd.s32 %s281, %s282
        %s284 = smul.addr %s283, 8
        %s285 = scalar_lea.vmem %s0, %s284
        %p286 = pneg %p56
        %p287 = pneg %p53
        %p288 = scmp.lt.s32.totalorder %s25, 1
        %s289 = scalar_select %p288, %s25, 1
        %s290 = smul.addr %s289, 16
        %s291 = smul.addr %s290, 4
        %s292 = scalar_lea.vmem %s1, %s291
        %p293 = pneg %p82
        %p294 = pneg %p79
        %p295 = pneg %p103
        %p296 = pneg %p100
        %p297 = pneg %p124
        %p298 = pneg %p121
        %p299 = pneg %p145
        %p300 = pneg %p142
        %p301 = pneg %p166
        %p302 = pneg %p163
        %p303 = pneg %p187
        %p304 = pneg %p184
        %p305 = pneg %p215
        %p306 = pneg %p212
        %s307 = sand.u32 %s202, 1
        %s308 = scalar_lea.sflag [#allocation3], %s307
        %s309 = sand.u32 %s202, 1
        %s310 = smul.addr %s309, 128
        %s311 = scalar_lea.vmem [#allocation2], %s310
        %s312 = smul.u32 2, %s26
        %p313 = scmp.lt.s32.totalorder %s25, 1
        %s314 = scalar_select %p313, %s25, 1
        %p315 = scmp.lt.s32.totalorder %s312, 1
        %s316 = scalar_select %p315, %s312, 1
        %s317 = smul.addr %s314, 8
        %s318 = sadd.s32 %s316, %s317
        %s319 = smul.addr %s318, 8
        %s320 = scalar_lea.vmem %s0, %s319
        %s321 = smul.u32 2, %s26
        %p322 = scmp.lt.s32.totalorder %s25, 1
        %s323 = scalar_select %p322, %s25, 1
        %s324 = smul.addr %s323, 16
        %s325 = smul.addr %s324, 4
        %s326 = scalar_lea.vmem %s1, %s325
        %s327 = smul.u32 32, %s26
        %v329 = vld [vmem:[%s320] sm:$0xff]
        %v330 = vld [vmem:[%s320 + $0x8] sm:$0xff]
        %v331 = vld [vmem:[%s320 + $0x10] sm:$0xff]
        %v332 = vld [vmem:[%s320 + $0x18] sm:$0xff]
        %v333 = vld [vmem:[%s320 + $0x20] sm:$0xff]
        %v334 = vld [vmem:[%s320 + $0x28] sm:$0xff]
        %v335 = vld [vmem:[%s320 + $0x30] sm:$0xff]
        %v336 = vld [vmem:[%s320 + $0x38] sm:$0xff]
        %v337 = vpack.c.bf16 %v331, %v329
        %v338 = vpack.c.bf16 %v332, %v330
        %v339 = vpack.c.bf16 %v335, %v333
        %v340 = vpack.c.bf16 %v336, %v334
        %v341 = vld [vmem:[%s2] sm:$0xf]
        %v342 = vld [vmem:[%s2 + $0x4] sm:$0xf]
        %v343 = vld [vmem:[%s2 + $0x8] sm:$0xf]
        %v344 = vld [vmem:[%s2 + $0xc] sm:$0xf]
        %v345 = vld [vmem:[%s3] sm:$0x1]
        %v347 = vlaneseq
        %v348 = vshrl.u32 %v347, 7
        %v349 = vsub.s32 0, %v348
        %v350 = vrot.slane %v345, %v349
        %352 = vxpose.xlu0.c.b16.start [1/8] %v337, 128
        %353 = vxpose.xlu0.c.b16.cont [2/8] %v339, 128
        %354 = vxpose.xlu0.c.b16.cont [3/8] 0, 128
        %355 = vxpose.xlu0.c.b16.cont [4/8] 0, 128
        %356 = vxpose.xlu0.c.b16.cont [5/8] 0, 128
        %357 = vxpose.xlu0.c.b16.cont [6/8] 0, 128
        %358 = vxpose.xlu0.c.b16.cont [7/8] 0, 128
        %359 = vxpose.xlu0.c.b16.end [8/8] 0, 128
        %v360 = vpop.trf.xlu0
        %v361 = vpop.trf.xlu0
        %v362 = vpop.trf.xlu0
        %v363 = vpop.trf.xlu0
        %v364 = vpop.trf.xlu0
        %v365 = vpop.trf.xlu0
        %v366 = vpop.trf.xlu0
        %v367 = vpop.trf.xlu0
        %368 = vxpose.xlu0.c.b16.start [1/8] %v338, 128
        %369 = vxpose.xlu0.c.b16.cont [2/8] %v340, 128
        %370 = vxpose.xlu0.c.b16.cont [3/8] 0, 128
        %371 = vxpose.xlu0.c.b16.cont [4/8] 0, 128
        %372 = vxpose.xlu0.c.b16.cont [5/8] 0, 128
        %373 = vxpose.xlu0.c.b16.cont [6/8] 0, 128
        %374 = vxpose.xlu0.c.b16.cont [7/8] 0, 128
        %375 = vxpose.xlu0.c.b16.end [8/8] 0, 128
        %v376 = vpop.trf.xlu0
        %v377 = vpop.trf.xlu0
        %v378 = vpop.trf.xlu0
        %v379 = vpop.trf.xlu0
        %v380 = vpop.trf.xlu0
        %v381 = vpop.trf.xlu0
        %v382 = vpop.trf.xlu0
        %v383 = vpop.trf.xlu0
        %v388 = vunpack.c.l.b16 %v341
        %v389 = vunpack.c.l.b16 %v342
        %v390 = vunpack.c.l.b16 %v343
        %v391 = vunpack.c.l.b16 %v344
        %v392 = vpack.c.b16 %v389, %v388
        %v393 = vpack.c.b16 %v391, %v390
        %vm396 = vcmask 261120
        %v398 = vsel %vm396, %v360, 0
        %v401 = vsel %vm396, %v361, 0
        %v404 = vsel %vm396, %v362, 0
        %v407 = vsel %vm396, %v363, 0
        %v410 = vsel %vm396, %v364, 0
        %v413 = vsel %vm396, %v365, 0
        %v416 = vsel %vm396, %v366, 0
        %v419 = vsel %vm396, %v367, 0
        %v422 = vsel %vm396, %v376, 0
        %v425 = vsel %vm396, %v377, 0
        %v428 = vsel %vm396, %v378, 0
        %v431 = vsel %vm396, %v379, 0
        %v434 = vsel %vm396, %v380, 0
        %v437 = vsel %vm396, %v381, 0
        %v440 = vsel %vm396, %v382, 0
        %v443 = vsel %vm396, %v383, 0
        %445 = vmatprep.subr.bf16.mxu0 0
        %446 = vmatpush1.bf16.msra.mxu0 %v392
        %447 = vmatprep.subr.bf16.mxu0 0
        %448 = vmatpush1.bf16.msra.mxu0 %v393
        %449 = vmatprep.subr.bf16.mxu0 0
        %450 = vmatpush1.bf16.msra.mxu0 0
        %451 = vmatprep.subr.bf16.mxu0 0
        %452 = vmatpush1.bf16.msra.mxu0 0
        %453 = vmatprep.subr.bf16.mxu0 0
        %454 = vmatpush1.bf16.msra.mxu0 0
        %455 = vmatprep.subr.bf16.mxu0 0
        %456 = vmatpush1.bf16.msra.mxu0 0
        %457 = vmatprep.subr.bf16.mxu0 0
        %458 = vmatpush1.bf16.msra.mxu0 0
        %459 = vmatprep.subr.bf16.mxu0 0
        %460 = vmatpush1.bf16.msra.mxu0 0
        %461 = vmatprep.subr.bf16.mxu0 0
        %462 = vmatpush1.bf16.msra.mxu0 0
        %463 = vmatprep.subr.bf16.mxu0 0
        %464 = vmatpush1.bf16.msra.mxu0 0
        %465 = vmatprep.subr.bf16.mxu0 0
        %466 = vmatpush1.bf16.msra.mxu0 0
        %467 = vmatprep.subr.bf16.mxu0 0
        %468 = vmatpush1.bf16.msra.mxu0 0
        %469 = vmatprep.subr.bf16.mxu0 0
        %470 = vmatpush1.bf16.msra.mxu0 0
        %471 = vmatprep.subr.bf16.mxu0 0
        %472 = vmatpush1.bf16.msra.mxu0 0
        %473 = vmatprep.subr.bf16.mxu0 0
        %474 = vmatpush1.bf16.msra.mxu0 0
        %475 = vmatprep.subr.bf16.mxu0 0
        %476 = vmatpush1.bf16.msra.mxu0 0
        %477 = vmatprep.mubr.bf16.mxu0 0
        %478 = vmatmul.mubr.bf16.gmra.mrb[0].mxu0 %v398
        %v479 = vpop.f32.mrb[0].mxu0
        %v480 = vadd.f32 %v350, %v479
        %v481 = vpop.f32.mrb[0].mxu0
        %v482 = vpop.f32.mrb[0].mxu0
        %v483 = vadd.f32 %v350, %v482
        %v484 = vpop.f32.mrb[0].mxu0
        %485 = vmatprep.mubr.bf16.mxu0 0
        %486 = vmatmul.mubr.bf16.gmra.mrb[0].mxu0 %v401
        %v487 = vpop.f32.mrb[0].mxu0
        %v488 = vadd.f32 %v350, %v487
        %v489 = vpop.f32.mrb[0].mxu0
        %v490 = vpop.f32.mrb[0].mxu0
        %v491 = vadd.f32 %v350, %v490
        %v492 = vpop.f32.mrb[0].mxu0
        %493 = vmatprep.mubr.bf16.mxu0 0
        %494 = vmatmul.mubr.bf16.gmra.mrb[0].mxu0 %v404
        %v495 = vpop.f32.mrb[0].mxu0
        %v496 = vadd.f32 %v350, %v495
        %v497 = vpop.f32.mrb[0].mxu0
        %v498 = vpop.f32.mrb[0].mxu0
        %v499 = vadd.f32 %v350, %v498
        %v500 = vpop.f32.mrb[0].mxu0
        %501 = vmatprep.mubr.bf16.mxu0 0
        %502 = vmatmul.mubr.bf16.gmra.mrb[0].mxu0 %v407
        %v503 = vpop.f32.mrb[0].mxu0
        %v504 = vadd.f32 %v350, %v503
        %v505 = vpop.f32.mrb[0].mxu0
        %v506 = vpop.f32.mrb[0].mxu0
        %v507 = vadd.f32 %v350, %v506
        %v508 = vpop.f32.mrb[0].mxu0
        %509 = vmatprep.mubr.bf16.mxu0 0
        %510 = vmatmul.mubr.bf16.gmra.mrb[0].mxu0 %v410
        %v511 = vpop.f32.mrb[0].mxu0
        %v512 = vadd.f32 %v350, %v511
        %v513 = vpop.f32.mrb[0].mxu0
        %v514 = vpop.f32.mrb[0].mxu0
        %v515 = vadd.f32 %v350, %v514
        %v516 = vpop.f32.mrb[0].mxu0
        %517 = vmatprep.mubr.bf16.mxu0 0
        %518 = vmatmul.mubr.bf16.gmra.mrb[0].mxu0 %v413
        %v519 = vpop.f32.mrb[0].mxu0
        %v520 = vadd.f32 %v350, %v519
        %v521 = vpop.f32.mrb[0].mxu0
        %v522 = vpop.f32.mrb[0].mxu0
        %v523 = vadd.f32 %v350, %v522
        %v524 = vpop.f32.mrb[0].mxu0
        %525 = vmatprep.mubr.bf16.mxu0 0
        %526 = vmatmul.mubr.bf16.gmra.mrb[0].mxu0 %v416
        %v527 = vpop.f32.mrb[0].mxu0
        %v528 = vadd.f32 %v350, %v527
        %v529 = vpop.f32.mrb[0].mxu0
        %v530 = vpop.f32.mrb[0].mxu0
        %v531 = vadd.f32 %v350, %v530
        %v532 = vpop.f32.mrb[0].mxu0
        %533 = vmatprep.mubr.bf16.mxu0 0
        %534 = vmatmul.mubr.bf16.gmra.mrb[0].mxu0 %v419
        %v535 = vpop.f32.mrb[0].mxu0
        %v536 = vadd.f32 %v350, %v535
        %v537 = vpop.f32.mrb[0].mxu0
        %v538 = vpop.f32.mrb[0].mxu0
        %v539 = vadd.f32 %v350, %v538
        %v540 = vpop.f32.mrb[0].mxu0
        %541 = vmatprep.mubr.bf16.mxu0 0
        %542 = vmatmul.mubr.bf16.gmra.mrb[0].mxu0 %v422
        %v543 = vpop.f32.mrb[0].mxu0
        %v544 = vadd.f32 %v350, %v543
        %v545 = vpop.f32.mrb[0].mxu0
        %v546 = vpop.f32.mrb[0].mxu0
        %v547 = vadd.f32 %v350, %v546
        %v548 = vpop.f32.mrb[0].mxu0
        %549 = vmatprep.mubr.bf16.mxu0 0
        %550 = vmatmul.mubr.bf16.gmra.mrb[0].mxu0 %v425
        %v551 = vpop.f32.mrb[0].mxu0
        %v552 = vadd.f32 %v350, %v551
        %v553 = vpop.f32.mrb[0].mxu0
        %v554 = vpop.f32.mrb[0].mxu0
        %v555 = vadd.f32 %v350, %v554
        %v556 = vpop.f32.mrb[0].mxu0
        %557 = vmatprep.mubr.bf16.mxu0 0
        %558 = vmatmul.mubr.bf16.gmra.mrb[0].mxu0 %v428
        %v559 = vpop.f32.mrb[0].mxu0
        %v560 = vadd.f32 %v350, %v559
        %v561 = vpop.f32.mrb[0].mxu0
        %v562 = vpop.f32.mrb[0].mxu0
        %v563 = vadd.f32 %v350, %v562
        %v564 = vpop.f32.mrb[0].mxu0
        %565 = vmatprep.mubr.bf16.mxu0 0
        %566 = vmatmul.mubr.bf16.gmra.mrb[0].mxu0 %v431
        %v567 = vpop.f32.mrb[0].mxu0
        %v568 = vadd.f32 %v350, %v567
        %v569 = vpop.f32.mrb[0].mxu0
        %v570 = vpop.f32.mrb[0].mxu0
        %v571 = vadd.f32 %v350, %v570
        %v572 = vpop.f32.mrb[0].mxu0
        %573 = vmatprep.mubr.bf16.mxu0 0
        %574 = vmatmul.mubr.bf16.gmra.mrb[0].mxu0 %v434
        %v575 = vpop.f32.mrb[0].mxu0
        %v576 = vadd.f32 %v350, %v575
        %v577 = vpop.f32.mrb[0].mxu0
        %v578 = vpop.f32.mrb[0].mxu0
        %v579 = vadd.f32 %v350, %v578
        %v580 = vpop.f32.mrb[0].mxu0
        %581 = vmatprep.mubr.bf16.mxu0 0
        %582 = vmatmul.mubr.bf16.gmra.mrb[0].mxu0 %v437
        %v583 = vpop.f32.mrb[0].mxu0
        %v584 = vadd.f32 %v350, %v583
        %v585 = vpop.f32.mrb[0].mxu0
        %v586 = vpop.f32.mrb[0].mxu0
        %v587 = vadd.f32 %v350, %v586
        %v588 = vpop.f32.mrb[0].mxu0
        %589 = vmatprep.mubr.bf16.mxu0 0
        %590 = vmatmul.mubr.bf16.gmra.mrb[0].mxu0 %v440
        %v591 = vpop.f32.mrb[0].mxu0
        %v592 = vadd.f32 %v350, %v591
        %v593 = vpop.f32.mrb[0].mxu0
        %v594 = vpop.f32.mrb[0].mxu0
        %v595 = vadd.f32 %v350, %v594
        %v596 = vpop.f32.mrb[0].mxu0
        %597 = vmatprep.mubr.bf16.mxu0 0
        %598 = vmatmul.mubr.bf16.gmra.mrb[0].mxu0 %v443
        %v599 = vpop.f32.mrb[0].mxu0
        %v600 = vadd.f32 %v350, %v599
        %v601 = vpop.f32.mrb[0].mxu0
        %v602 = vpop.f32.mrb[0].mxu0
        %v603 = vadd.f32 %v350, %v602
        %v604 = vpop.f32.mrb[0].mxu0
        %605 = vdwg.mxu0
        %v606 = vmax.f32 %v480, 0.0
        %v607 = vmax.f32 %v483, 0.0
        %v608 = vmax.f32 %v488, 0.0
        %v609 = vmax.f32 %v491, 0.0
        %v610 = vmax.f32 %v496, 0.0
        %v611 = vmax.f32 %v499, 0.0
        %v612 = vmax.f32 %v504, 0.0
        %v613 = vmax.f32 %v507, 0.0
        %v614 = vmax.f32 %v512, 0.0
        %v615 = vmax.f32 %v515, 0.0
        %v616 = vmax.f32 %v520, 0.0
        %v617 = vmax.f32 %v523, 0.0
        %v618 = vmax.f32 %v528, 0.0
        %v619 = vmax.f32 %v531, 0.0
        %v620 = vmax.f32 %v536, 0.0
        %v621 = vmax.f32 %v539, 0.0
        %v622 = vmax.f32 %v544, 0.0
        %v623 = vmax.f32 %v547, 0.0
        %v624 = vmax.f32 %v552, 0.0
        %v625 = vmax.f32 %v555, 0.0
        %v626 = vmax.f32 %v560, 0.0
        %v627 = vmax.f32 %v563, 0.0
        %v628 = vmax.f32 %v568, 0.0
        %v629 = vmax.f32 %v571, 0.0
        %v630 = vmax.f32 %v576, 0.0
        %v631 = vmax.f32 %v579, 0.0
        %v632 = vmax.f32 %v584, 0.0
        %v633 = vmax.f32 %v587, 0.0
        %v634 = vmax.f32 %v592, 0.0
        %v635 = vmax.f32 %v595, 0.0
        %v636 = vmax.f32 %v600, 0.0
        %v637 = vmax.f32 %v603, 0.0
        %v638 = vpack.c.bf16 %v607, %v606
        %v639 = vpack.c.bf16 %v609, %v608
        %v640 = vpack.c.bf16 %v611, %v610
        %v641 = vpack.c.bf16 %v613, %v612
        %v642 = vpack.c.bf16 %v615, %v614
        %v643 = vpack.c.bf16 %v617, %v616
        %v644 = vpack.c.bf16 %v619, %v618
        %v645 = vpack.c.bf16 %v621, %v620
        %v646 = vpack.c.bf16 %v623, %v622
        %v647 = vpack.c.bf16 %v625, %v624
        %v648 = vpack.c.bf16 %v627, %v626
        %v649 = vpack.c.bf16 %v629, %v628
        %v650 = vpack.c.bf16 %v631, %v630
        %v651 = vpack.c.bf16 %v633, %v632
        %v652 = vpack.c.bf16 %v635, %v634
        %v653 = vpack.c.bf16 %v637, %v636
        %v654 = vld [vmem:[%s4] sm:$0xf]
        %v655 = vld [vmem:[%s4 + $0x4] sm:$0xf]
        %v656 = vld [vmem:[%s4 + $0x8] sm:$0xf]
        %v657 = vld [vmem:[%s4 + $0xc] sm:$0xf]
        %v658 = vld [vmem:[%s5] sm:$0x1]
        %v660 = vlaneseq
        %v661 = vshrl.u32 %v660, 7
        %v662 = vsub.s32 0, %v661
        %v663 = vrot.slane %v658, %v662
        %v669 = vunpack.c.l.b16 %v654
        %v670 = vunpack.c.l.b16 %v655
        %v671 = vunpack.c.l.b16 %v656
        %v672 = vunpack.c.l.b16 %v657
        %v673 = vpack.c.b16 %v670, %v669
        %v674 = vpack.c.b16 %v672, %v671
        %v678 = vsel %vm396, %v638, 0
        %v681 = vsel %vm396, %v639, 0
        %v684 = vsel %vm396, %v640, 0
        %v687 = vsel %vm396, %v641, 0
        %v690 = vsel %vm396, %v642, 0
        %v693 = vsel %vm396, %v643, 0
        %v696 = vsel %vm396, %v644, 0
        %v699 = vsel %vm396, %v645, 0
        %v702 = vsel %vm396, %v646, 0
        %v705 = vsel %vm396, %v647, 0
        %v708 = vsel %vm396, %v648, 0
        %v711 = vsel %vm396, %v649, 0
        %v714 = vsel %vm396, %v650, 0
        %v717 = vsel %vm396, %v651, 0
        %v720 = vsel %vm396, %v652, 0
        %v723 = vsel %vm396, %v653, 0
        %725 = vmatprep.subr.bf16.mxu0 0
        %726 = vmatpush1.bf16.msra.mxu0 %v673
        %727 = vmatprep.subr.bf16.mxu0 0
        %728 = vmatpush1.bf16.msra.mxu0 %v674
        %729 = vmatprep.subr.bf16.mxu0 0
        %730 = vmatpush1.bf16.msra.mxu0 0
        %731 = vmatprep.subr.bf16.mxu0 0
        %732 = vmatpush1.bf16.msra.mxu0 0
        %733 = vmatprep.subr.bf16.mxu0 0
        %734 = vmatpush1.bf16.msra.mxu0 0
        %735 = vmatprep.subr.bf16.mxu0 0
        %736 = vmatpush1.bf16.msra.mxu0 0
        %737 = vmatprep.subr.bf16.mxu0 0
        %738 = vmatpush1.bf16.msra.mxu0 0
        %739 = vmatprep.subr.bf16.mxu0 0
        %740 = vmatpush1.bf16.msra.mxu0 0
        %741 = vmatprep.subr.bf16.mxu0 0
        %742 = vmatpush1.bf16.msra.mxu0 0
        %743 = vmatprep.subr.bf16.mxu0 0
        %744 = vmatpush1.bf16.msra.mxu0 0
        %745 = vmatprep.subr.bf16.mxu0 0
        %746 = vmatpush1.bf16.msra.mxu0 0
        %747 = vmatprep.subr.bf16.mxu0 0
        %748 = vmatpush1.bf16.msra.mxu0 0
        %749 = vmatprep.subr.bf16.mxu0 0
        %750 = vmatpush1.bf16.msra.mxu0 0
        %751 = vmatprep.subr.bf16.mxu0 0
        %752 = vmatpush1.bf16.msra.mxu0 0
        %753 = vmatprep.subr.bf16.mxu0 0
        %754 = vmatpush1.bf16.msra.mxu0 0
        %755 = vmatprep.subr.bf16.mxu0 0
        %756 = vmatpush1.bf16.msra.mxu0 0
        %757 = vmatprep.mubr.bf16.mxu0 0
        %758 = vmatmul.mubr.bf16.gmra.mrb[0].mxu0 %v678
        %v759 = vpop.f32.mrb[0].mxu0
        %v760 = vadd.f32 %v663, %v759
        %v761 = vpop.f32.mrb[0].mxu0
        %v762 = vpop.f32.mrb[0].mxu0
        %v763 = vadd.f32 %v663, %v762
        %v764 = vpop.f32.mrb[0].mxu0
        %765 = vmatprep.mubr.bf16.mxu0 0
        %766 = vmatmul.mubr.bf16.gmra.mrb[0].mxu0 %v681
        %v767 = vpop.f32.mrb[0].mxu0
        %v768 = vadd.f32 %v663, %v767
        %v769 = vpop.f32.mrb[0].mxu0
        %v770 = vpop.f32.mrb[0].mxu0
        %v771 = vadd.f32 %v663, %v770
        %v772 = vpop.f32.mrb[0].mxu0
        %773 = vmatprep.mubr.bf16.mxu0 0
        %774 = vmatmul.mubr.bf16.gmra.mrb[0].mxu0 %v684
        %v775 = vpop.f32.mrb[0].mxu0
        %v776 = vadd.f32 %v663, %v775
        %v777 = vpop.f32.mrb[0].mxu0
        %v778 = vpop.f32.mrb[0].mxu0
        %v779 = vadd.f32 %v663, %v778
        %v780 = vpop.f32.mrb[0].mxu0
        %781 = vmatprep.mubr.bf16.mxu0 0
        %782 = vmatmul.mubr.bf16.gmra.mrb[0].mxu0 %v687
        %v783 = vpop.f32.mrb[0].mxu0
        %v784 = vadd.f32 %v663, %v783
        %v785 = vpop.f32.mrb[0].mxu0
        %v786 = vpop.f32.mrb[0].mxu0
        %v787 = vadd.f32 %v663, %v786
        %v788 = vpop.f32.mrb[0].mxu0
        %789 = vmatprep.mubr.bf16.mxu0 0
        %790 = vmatmul.mubr.bf16.gmra.mrb[0].mxu0 %v690
        %v791 = vpop.f32.mrb[0].mxu0
        %v792 = vadd.f32 %v663, %v791
        %v793 = vpop.f32.mrb[0].mxu0
        %v794 = vpop.f32.mrb[0].mxu0
        %v795 = vadd.f32 %v663, %v794
        %v796 = vpop.f32.mrb[0].mxu0
        %797 = vmatprep.mubr.bf16.mxu0 0
        %798 = vmatmul.mubr.bf16.gmra.mrb[0].mxu0 %v693
        %v799 = vpop.f32.mrb[0].mxu0
        %v800 = vadd.f32 %v663, %v799
        %v801 = vpop.f32.mrb[0].mxu0
        %v802 = vpop.f32.mrb[0].mxu0
        %v803 = vadd.f32 %v663, %v802
        %v804 = vpop.f32.mrb[0].mxu0
        %805 = vmatprep.mubr.bf16.mxu0 0
        %806 = vmatmul.mubr.bf16.gmra.mrb[0].mxu0 %v696
        %v807 = vpop.f32.mrb[0].mxu0
        %v808 = vadd.f32 %v663, %v807
        %v809 = vpop.f32.mrb[0].mxu0
        %v810 = vpop.f32.mrb[0].mxu0
        %v811 = vadd.f32 %v663, %v810
        %v812 = vpop.f32.mrb[0].mxu0
        %813 = vmatprep.mubr.bf16.mxu0 0
        %814 = vmatmul.mubr.bf16.gmra.mrb[0].mxu0 %v699
        %v815 = vpop.f32.mrb[0].mxu0
        %v816 = vadd.f32 %v663, %v815
        %v817 = vpop.f32.mrb[0].mxu0
        %v818 = vpop.f32.mrb[0].mxu0
        %v819 = vadd.f32 %v663, %v818
        %v820 = vpop.f32.mrb[0].mxu0
        %821 = vmatprep.mubr.bf16.mxu0 0
        %822 = vmatmul.mubr.bf16.gmra.mrb[0].mxu0 %v702
        %v823 = vpop.f32.mrb[0].mxu0
        %v824 = vadd.f32 %v663, %v823
        %v825 = vpop.f32.mrb[0].mxu0
        %v826 = vpop.f32.mrb[0].mxu0
        %v827 = vadd.f32 %v663, %v826
        %v828 = vpop.f32.mrb[0].mxu0
        %829 = vmatprep.mubr.bf16.mxu0 0
        %830 = vmatmul.mubr.bf16.gmra.mrb[0].mxu0 %v705
        %v831 = vpop.f32.mrb[0].mxu0
        %v832 = vadd.f32 %v663, %v831
        %v833 = vpop.f32.mrb[0].mxu0
        %v834 = vpop.f32.mrb[0].mxu0
        %v835 = vadd.f32 %v663, %v834
        %v836 = vpop.f32.mrb[0].mxu0
        %837 = vmatprep.mubr.bf16.mxu0 0
        %838 = vmatmul.mubr.bf16.gmra.mrb[0].mxu0 %v708
        %v839 = vpop.f32.mrb[0].mxu0
        %v840 = vadd.f32 %v663, %v839
        %v841 = vpop.f32.mrb[0].mxu0
        %v842 = vpop.f32.mrb[0].mxu0
        %v843 = vadd.f32 %v663, %v842
        %v844 = vpop.f32.mrb[0].mxu0
        %845 = vmatprep.mubr.bf16.mxu0 0
        %846 = vmatmul.mubr.bf16.gmra.mrb[0].mxu0 %v711
        %v847 = vpop.f32.mrb[0].mxu0
        %v848 = vadd.f32 %v663, %v847
        %v849 = vpop.f32.mrb[0].mxu0
        %v850 = vpop.f32.mrb[0].mxu0
        %v851 = vadd.f32 %v663, %v850
        %v852 = vpop.f32.mrb[0].mxu0
        %853 = vmatprep.mubr.bf16.mxu0 0
        %854 = vmatmul.mubr.bf16.gmra.mrb[0].mxu0 %v714
        %v855 = vpop.f32.mrb[0].mxu0
        %v856 = vadd.f32 %v663, %v855
        %v857 = vpop.f32.mrb[0].mxu0
        %v858 = vpop.f32.mrb[0].mxu0
        %v859 = vadd.f32 %v663, %v858
        %v860 = vpop.f32.mrb[0].mxu0
        %861 = vmatprep.mubr.bf16.mxu0 0
        %862 = vmatmul.mubr.bf16.gmra.mrb[0].mxu0 %v717
        %v863 = vpop.f32.mrb[0].mxu0
        %v864 = vadd.f32 %v663, %v863
        %v865 = vpop.f32.mrb[0].mxu0
        %v866 = vpop.f32.mrb[0].mxu0
        %v867 = vadd.f32 %v663, %v866
        %v868 = vpop.f32.mrb[0].mxu0
        %869 = vmatprep.mubr.bf16.mxu0 0
        %870 = vmatmul.mubr.bf16.gmra.mrb[0].mxu0 %v720
        %v871 = vpop.f32.mrb[0].mxu0
        %v872 = vadd.f32 %v663, %v871
        %v873 = vpop.f32.mrb[0].mxu0
        %v874 = vpop.f32.mrb[0].mxu0
        %v875 = vadd.f32 %v663, %v874
        %v876 = vpop.f32.mrb[0].mxu0
        %877 = vmatprep.mubr.bf16.mxu0 0
        %878 = vmatmul.mubr.bf16.gmra.mrb[0].mxu0 %v723
        %v879 = vpop.f32.mrb[0].mxu0
        %v880 = vadd.f32 %v663, %v879
        %v881 = vpop.f32.mrb[0].mxu0
        %v882 = vpop.f32.mrb[0].mxu0
        %v883 = vadd.f32 %v663, %v882
        %v884 = vpop.f32.mrb[0].mxu0
        %885 = vdwg.mxu0
        %v886 = vmax.f32 %v760, 0.0
        %v887 = vmax.f32 %v763, 0.0
        %v888 = vmax.f32 %v768, 0.0
        %v889 = vmax.f32 %v771, 0.0
        %v890 = vmax.f32 %v776, 0.0
        %v891 = vmax.f32 %v779, 0.0
        %v892 = vmax.f32 %v784, 0.0
        %v893 = vmax.f32 %v787, 0.0
        %v894 = vmax.f32 %v792, 0.0
        %v895 = vmax.f32 %v795, 0.0
        %v896 = vmax.f32 %v800, 0.0
        %v897 = vmax.f32 %v803, 0.0
        %v898 = vmax.f32 %v808, 0.0
        %v899 = vmax.f32 %v811, 0.0
        %v900 = vmax.f32 %v816, 0.0
        %v901 = vmax.f32 %v819, 0.0
        %v902 = vmax.f32 %v824, 0.0
        %v903 = vmax.f32 %v827, 0.0
        %v904 = vmax.f32 %v832, 0.0
        %v905 = vmax.f32 %v835, 0.0
        %v906 = vmax.f32 %v840, 0.0
        %v907 = vmax.f32 %v843, 0.0
        %v908 = vmax.f32 %v848, 0.0
        %v909 = vmax.f32 %v851, 0.0
        %v910 = vmax.f32 %v856, 0.0
        %v911 = vmax.f32 %v859, 0.0
        %v912 = vmax.f32 %v864, 0.0
        %v913 = vmax.f32 %v867, 0.0
        %v914 = vmax.f32 %v872, 0.0
        %v915 = vmax.f32 %v875, 0.0
        %v916 = vmax.f32 %v880, 0.0
        %v917 = vmax.f32 %v883, 0.0
        %v918 = vpack.c.bf16 %v887, %v886
        %v919 = vpack.c.bf16 %v889, %v888
        %v920 = vpack.c.bf16 %v891, %v890
        %v921 = vpack.c.bf16 %v893, %v892
        %v922 = vpack.c.bf16 %v895, %v894
        %v923 = vpack.c.bf16 %v897, %v896
        %v924 = vpack.c.bf16 %v899, %v898
        %v925 = vpack.c.bf16 %v901, %v900
        %v926 = vpack.c.bf16 %v903, %v902
        %v927 = vpack.c.bf16 %v905, %v904
        %v928 = vpack.c.bf16 %v907, %v906
        %v929 = vpack.c.bf16 %v909, %v908
        %v930 = vpack.c.bf16 %v911, %v910
        %v931 = vpack.c.bf16 %v913, %v912
        %v932 = vpack.c.bf16 %v915, %v914
        %v933 = vpack.c.bf16 %v917, %v916
        %v934 = vld [vmem:[%s326] sm:$0xf]
        %v935 = vld [vmem:[%s326 + $0x4] sm:$0xf]
        %v936 = vld [vmem:[%s326 + $0x8] sm:$0xf]
        %v937 = vld [vmem:[%s326 + $0xc] sm:$0xf]
        %v938 = vld [vmem:[%s326 + $0x10] sm:$0xf]
        %v939 = vld [vmem:[%s326 + $0x14] sm:$0xf]
        %v940 = vld [vmem:[%s326 + $0x18] sm:$0xf]
        %v941 = vld [vmem:[%s326 + $0x1c] sm:$0xf]
        %v942 = vld [vmem:[%s326 + $0x20] sm:$0xf]
        %v943 = vld [vmem:[%s326 + $0x24] sm:$0xf]
        %v944 = vld [vmem:[%s326 + $0x28] sm:$0xf]
        %v945 = vld [vmem:[%s326 + $0x2c] sm:$0xf]
        %v946 = vld [vmem:[%s326 + $0x30] sm:$0xf]
        %v947 = vld [vmem:[%s326 + $0x34] sm:$0xf]
        %v948 = vld [vmem:[%s326 + $0x38] sm:$0xf]
        %v949 = vld [vmem:[%s326 + $0x3c] sm:$0xf]
        %v966 = vunpack.c.l.b16 %v934
        %v967 = vunpack.c.l.b16 %v935
        %v968 = vunpack.c.l.b16 %v936
        %v969 = vunpack.c.l.b16 %v937
        %v970 = vunpack.c.l.b16 %v938
        %v971 = vunpack.c.l.b16 %v939
        %v972 = vunpack.c.l.b16 %v940
        %v973 = vunpack.c.l.b16 %v941
        %v974 = vunpack.c.l.b16 %v942
        %v975 = vunpack.c.l.b16 %v943
        %v976 = vunpack.c.l.b16 %v944
        %v977 = vunpack.c.l.b16 %v945
        %v978 = vunpack.c.l.b16 %v946
        %v979 = vunpack.c.l.b16 %v947
        %v980 = vunpack.c.l.b16 %v948
        %v981 = vunpack.c.l.b16 %v949
        %v982 = vpack.c.b16 %v967, %v966
        %v983 = vpack.c.b16 %v969, %v968
        %v984 = vpack.c.b16 %v971, %v970
        %v985 = vpack.c.b16 %v973, %v972
        %v986 = vpack.c.b16 %v975, %v974
        %v987 = vpack.c.b16 %v977, %v976
        %v988 = vpack.c.b16 %v979, %v978
        %v989 = vpack.c.b16 %v981, %v980
        %v991 = vsel %vm396, %v918, 0
        %v994 = vsel %vm396, %v919, 0
        %v997 = vsel %vm396, %v920, 0
        %v1000 = vsel %vm396, %v921, 0
        %v1003 = vsel %vm396, %v922, 0
        %v1006 = vsel %vm396, %v923, 0
        %v1009 = vsel %vm396, %v924, 0
        %v1012 = vsel %vm396, %v925, 0
        %v1015 = vsel %vm396, %v926, 0
        %v1018 = vsel %vm396, %v927, 0
        %v1021 = vsel %vm396, %v928, 0
        %v1024 = vsel %vm396, %v929, 0
        %v1027 = vsel %vm396, %v930, 0
        %v1030 = vsel %vm396, %v931, 0
        %v1033 = vsel %vm396, %v932, 0
        %v1036 = vsel %vm396, %v933, 0
        %v1039 = vsel %vm396, %v982, 0
        %v1042 = vsel %vm396, %v983, 0
        %v1045 = vsel %vm396, %v984, 0
        %v1048 = vsel %vm396, %v985, 0
        %v1051 = vsel %vm396, %v986, 0
        %v1054 = vsel %vm396, %v987, 0
        %v1057 = vsel %vm396, %v988, 0
        %v1060 = vsel %vm396, %v989, 0
        %1062 = vmatprep.subr.bf16.mxu0 0
        %1063 = vmatpush1.bf16.xpose.msra.mxu0 %v1039
        %1064 = vmatprep.subr.bf16.mxu0 0
        %1065 = vmatpush1.bf16.xpose.msra.mxu0 %v1042
        %1066 = vmatprep.subr.bf16.mxu0 0
        %1067 = vmatpush1.bf16.xpose.msra.mxu0 %v1045
        %1068 = vmatprep.subr.bf16.mxu0 0
        %1069 = vmatpush1.bf16.xpose.msra.mxu0 %v1048
        %1070 = vmatprep.subr.bf16.mxu0 0
        %1071 = vmatpush1.bf16.xpose.msra.mxu0 %v1051
        %1072 = vmatprep.subr.bf16.mxu0 0
        %1073 = vmatpush1.bf16.xpose.msra.mxu0 %v1054
        %1074 = vmatprep.subr.bf16.mxu0 0
        %1075 = vmatpush1.bf16.xpose.msra.mxu0 %v1057
        %1076 = vmatprep.subr.bf16.mxu0 0
        %1077 = vmatpush1.bf16.xpose.msra.mxu0 %v1060
        %1078 = vmatprep.subr.bf16.mxu0 0
        %1079 = vmatpush1.bf16.xpose.msra.mxu0 0
        %1080 = vmatprep.subr.bf16.mxu0 0
        %1081 = vmatpush1.bf16.xpose.msra.mxu0 0
        %1082 = vmatprep.subr.bf16.mxu0 0
        %1083 = vmatpush1.bf16.xpose.msra.mxu0 0
        %1084 = vmatprep.subr.bf16.mxu0 0
        %1085 = vmatpush1.bf16.xpose.msra.mxu0 0
        %1086 = vmatprep.subr.bf16.mxu0 0
        %1087 = vmatpush1.bf16.xpose.msra.mxu0 0
        %1088 = vmatprep.subr.bf16.mxu0 0
        %1089 = vmatpush1.bf16.xpose.msra.mxu0 0
        %1090 = vmatprep.subr.bf16.mxu0 0
        %1091 = vmatpush1.bf16.xpose.msra.mxu0 0
        %1092 = vmatprep.subr.bf16.mxu0 0
        %1093 = vmatpush1.bf16.xpose.msra.mxu0 0
        %1094 = vmatprep.mubr.bf16.mxu0 0
        %1095 = vmatmul.mubr.bf16.gmra.mrb[0].mxu0 %v991
        %v1096 = vpop.f32.mrb[0].mxu0
        %v1097 = vadd.f32 0.0, %v1096
        %v1098 = vpop.f32.mrb[0].mxu0
        %v1099 = vpop.f32.mrb[0].mxu0
        %v1100 = vadd.f32 0.0, %v1099
        %v1101 = vpop.f32.mrb[0].mxu0
        %1102 = vmatprep.mubr.bf16.mxu0 0
        %1103 = vmatmul.mubr.bf16.gmra.mrb[0].mxu0 %v994
        %v1104 = vpop.f32.mrb[0].mxu0
        %v1105 = vadd.f32 0.0, %v1104
        %v1106 = vpop.f32.mrb[0].mxu0
        %v1107 = vpop.f32.mrb[0].mxu0
        %v1108 = vadd.f32 0.0, %v1107
        %v1109 = vpop.f32.mrb[0].mxu0
        %1110 = vmatprep.mubr.bf16.mxu0 0
        %1111 = vmatmul.mubr.bf16.gmra.mrb[0].mxu0 %v997
        %v1112 = vpop.f32.mrb[0].mxu0
        %v1113 = vadd.f32 0.0, %v1112
        %v1114 = vpop.f32.mrb[0].mxu0
        %v1115 = vpop.f32.mrb[0].mxu0
        %v1116 = vadd.f32 0.0, %v1115
        %v1117 = vpop.f32.mrb[0].mxu0
        %1118 = vmatprep.mubr.bf16.mxu0 0
        %1119 = vmatmul.mubr.bf16.gmra.mrb[0].mxu0 %v1000
        %v1120 = vpop.f32.mrb[0].mxu0
        %v1121 = vadd.f32 0.0, %v1120
        %v1122 = vpop.f32.mrb[0].mxu0
        %v1123 = vpop.f32.mrb[0].mxu0
        %v1124 = vadd.f32 0.0, %v1123
        %v1125 = vpop.f32.mrb[0].mxu0
        %1126 = vmatprep.mubr.bf16.mxu0 0
        %1127 = vmatmul.mubr.bf16.gmra.mrb[0].mxu0 %v1003
        %v1128 = vpop.f32.mrb[0].mxu0
        %v1129 = vadd.f32 0.0, %v1128
        %v1130 = vpop.f32.mrb[0].mxu0
        %v1131 = vpop.f32.mrb[0].mxu0
        %v1132 = vadd.f32 0.0, %v1131
        %v1133 = vpop.f32.mrb[0].mxu0
        %1134 = vmatprep.mubr.bf16.mxu0 0
        %1135 = vmatmul.mubr.bf16.gmra.mrb[0].mxu0 %v1006
        %v1136 = vpop.f32.mrb[0].mxu0
        %v1137 = vadd.f32 0.0, %v1136
        %v1138 = vpop.f32.mrb[0].mxu0
        %v1139 = vpop.f32.mrb[0].mxu0
        %v1140 = vadd.f32 0.0, %v1139
        %v1141 = vpop.f32.mrb[0].mxu0
        %1142 = vmatprep.mubr.bf16.mxu0 0
        %1143 = vmatmul.mubr.bf16.gmra.mrb[0].mxu0 %v1009
        %v1144 = vpop.f32.mrb[0].mxu0
        %v1145 = vadd.f32 0.0, %v1144
        %v1146 = vpop.f32.mrb[0].mxu0
        %v1147 = vpop.f32.mrb[0].mxu0
        %v1148 = vadd.f32 0.0, %v1147
        %v1149 = vpop.f32.mrb[0].mxu0
        %1150 = vmatprep.mubr.bf16.mxu0 0
        %1151 = vmatmul.mubr.bf16.gmra.mrb[0].mxu0 %v1012
        %v1152 = vpop.f32.mrb[0].mxu0
        %v1153 = vadd.f32 0.0, %v1152
        %v1154 = vpop.f32.mrb[0].mxu0
        %v1155 = vpop.f32.mrb[0].mxu0
        %v1156 = vadd.f32 0.0, %v1155
        %v1157 = vpop.f32.mrb[0].mxu0
        %1158 = vmatprep.mubr.bf16.mxu0 0
        %1159 = vmatmul.mubr.bf16.gmra.mrb[0].mxu0 %v1015
        %v1160 = vpop.f32.mrb[0].mxu0
        %v1161 = vadd.f32 0.0, %v1160
        %v1162 = vpop.f32.mrb[0].mxu0
        %v1163 = vpop.f32.mrb[0].mxu0
        %v1164 = vadd.f32 0.0, %v1163
        %v1165 = vpop.f32.mrb[0].mxu0
        %1166 = vmatprep.mubr.bf16.mxu0 0
        %1167 = vmatmul.mubr.bf16.gmra.mrb[0].mxu0 %v1018
        %v1168 = vpop.f32.mrb[0].mxu0
        %v1169 = vadd.f32 0.0, %v1168
        %v1170 = vpop.f32.mrb[0].mxu0
        %v1171 = vpop.f32.mrb[0].mxu0
        %v1172 = vadd.f32 0.0, %v1171
        %v1173 = vpop.f32.mrb[0].mxu0
        %1174 = vmatprep.mubr.bf16.mxu0 0
        %1175 = vmatmul.mubr.bf16.gmra.mrb[0].mxu0 %v1021
        %v1176 = vpop.f32.mrb[0].mxu0
        %v1177 = vadd.f32 0.0, %v1176
        %v1178 = vpop.f32.mrb[0].mxu0
        %v1179 = vpop.f32.mrb[0].mxu0
        %v1180 = vadd.f32 0.0, %v1179
        %v1181 = vpop.f32.mrb[0].mxu0
        %1182 = vmatprep.mubr.bf16.mxu0 0
        %1183 = vmatmul.mubr.bf16.gmra.mrb[0].mxu0 %v1024
        %v1184 = vpop.f32.mrb[0].mxu0
        %v1185 = vadd.f32 0.0, %v1184
        %v1186 = vpop.f32.mrb[0].mxu0
        %v1187 = vpop.f32.mrb[0].mxu0
        %v1188 = vadd.f32 0.0, %v1187
        %v1189 = vpop.f32.mrb[0].mxu0
        %1190 = vmatprep.mubr.bf16.mxu0 0
        %1191 = vmatmul.mubr.bf16.gmra.mrb[0].mxu0 %v1027
        %v1192 = vpop.f32.mrb[0].mxu0
        %v1193 = vadd.f32 0.0, %v1192
        %v1194 = vpop.f32.mrb[0].mxu0
        %v1195 = vpop.f32.mrb[0].mxu0
        %v1196 = vadd.f32 0.0, %v1195
        %v1197 = vpop.f32.mrb[0].mxu0
        %1198 = vmatprep.mubr.bf16.mxu0 0
        %1199 = vmatmul.mubr.bf16.gmra.mrb[0].mxu0 %v1030
        %v1200 = vpop.f32.mrb[0].mxu0
        %v1201 = vadd.f32 0.0, %v1200
        %v1202 = vpop.f32.mrb[0].mxu0
        %v1203 = vpop.f32.mrb[0].mxu0
        %v1204 = vadd.f32 0.0, %v1203
        %v1205 = vpop.f32.mrb[0].mxu0
        %1206 = vmatprep.mubr.bf16.mxu0 0
        %1207 = vmatmul.mubr.bf16.gmra.mrb[0].mxu0 %v1033
        %v1208 = vpop.f32.mrb[0].mxu0
        %v1209 = vadd.f32 0.0, %v1208
        %v1210 = vpop.f32.mrb[0].mxu0
        %v1211 = vpop.f32.mrb[0].mxu0
        %v1212 = vadd.f32 0.0, %v1211
        %v1213 = vpop.f32.mrb[0].mxu0
        %1214 = vmatprep.mubr.bf16.mxu0 0
        %1215 = vmatmul.mubr.bf16.gmra.mrb[0].mxu0 %v1036
        %v1216 = vpop.f32.mrb[0].mxu0
        %v1217 = vadd.f32 0.0, %v1216
        %v1218 = vpop.f32.mrb[0].mxu0
        %v1219 = vpop.f32.mrb[0].mxu0
        %v1220 = vadd.f32 0.0, %v1219
        %v1221 = vpop.f32.mrb[0].mxu0
        %1222 = vdwg.mxu0
        %v1223 = vmul.f32 %v1097, 0.17677669
        %v1224 = vmul.f32 %v1100, 0.17677669
        %v1225 = vmul.f32 %v1105, 0.17677669
        %v1226 = vmul.f32 %v1108, 0.17677669
        %v1227 = vmul.f32 %v1113, 0.17677669
        %v1228 = vmul.f32 %v1116, 0.17677669
        %v1229 = vmul.f32 %v1121, 0.17677669
        %v1230 = vmul.f32 %v1124, 0.17677669
        %v1231 = vmul.f32 %v1129, 0.17677669
        %v1232 = vmul.f32 %v1132, 0.17677669
        %v1233 = vmul.f32 %v1137, 0.17677669
        %v1234 = vmul.f32 %v1140, 0.17677669
        %v1235 = vmul.f32 %v1145, 0.17677669
        %v1236 = vmul.f32 %v1148, 0.17677669
        %v1237 = vmul.f32 %v1153, 0.17677669
        %v1238 = vmul.f32 %v1156, 0.17677669
        %v1239 = vmul.f32 %v1161, 0.17677669
        %v1240 = vmul.f32 %v1164, 0.17677669
        %v1241 = vmul.f32 %v1169, 0.17677669
        %v1242 = vmul.f32 %v1172, 0.17677669
        %v1243 = vmul.f32 %v1177, 0.17677669
        %v1244 = vmul.f32 %v1180, 0.17677669
        %v1245 = vmul.f32 %v1185, 0.17677669
        %v1246 = vmul.f32 %v1188, 0.17677669
        %v1247 = vmul.f32 %v1193, 0.17677669
        %v1248 = vmul.f32 %v1196, 0.17677669
        %v1249 = vmul.f32 %v1201, 0.17677669
        %v1250 = vmul.f32 %v1204, 0.17677669
        %v1251 = vmul.f32 %v1209, 0.17677669
        %v1252 = vmul.f32 %v1212, 0.17677669
        %v1253 = vmul.f32 %v1217, 0.17677669
        %v1254 = vmul.f32 %v1220, 0.17677669
        %v1255 = vld [vmem:[%s6] sm:$0x1]
        %v1257 = vlaneseq
        %v1258 = vshrl.u32 %v1257, 7
        %v1259 = vsub.s32 0, %v1258
        %v1260 = vrot.slane %v1255, %v1259
        %v1262 = vadd.f32 %v1223, %v1260
        %v1263 = vadd.f32 %v1224, %v1260
        %v1264 = vadd.f32 %v1225, %v1260
        %v1265 = vadd.f32 %v1226, %v1260
        %v1266 = vadd.f32 %v1227, %v1260
        %v1267 = vadd.f32 %v1228, %v1260
        %v1268 = vadd.f32 %v1229, %v1260
        %v1269 = vadd.f32 %v1230, %v1260
        %v1270 = vadd.f32 %v1231, %v1260
        %v1271 = vadd.f32 %v1232, %v1260
        %v1272 = vadd.f32 %v1233, %v1260
        %v1273 = vadd.f32 %v1234, %v1260
        %v1274 = vadd.f32 %v1235, %v1260
        %v1275 = vadd.f32 %v1236, %v1260
        %v1276 = vadd.f32 %v1237, %v1260
        %v1277 = vadd.f32 %v1238, %v1260
        %v1278 = vadd.f32 %v1239, %v1260
        %v1279 = vadd.f32 %v1240, %v1260
        %v1280 = vadd.f32 %v1241, %v1260
        %v1281 = vadd.f32 %v1242, %v1260
        %v1282 = vadd.f32 %v1243, %v1260
        %v1283 = vadd.f32 %v1244, %v1260
        %v1284 = vadd.f32 %v1245, %v1260
        %v1285 = vadd.f32 %v1246, %v1260
        %v1286 = vadd.f32 %v1247, %v1260
        %v1287 = vadd.f32 %v1248, %v1260
        %v1288 = vadd.f32 %v1249, %v1260
        %v1289 = vadd.f32 %v1250, %v1260
        %v1290 = vadd.f32 %v1251, %v1260
        %v1291 = vadd.f32 %v1252, %v1260
        %v1292 = vadd.f32 %v1253, %v1260
        %v1293 = vadd.f32 %v1254, %v1260
        %1294 = vmax.xlane.f32.xlu0 %v1262
        %v1295 = vpop.xlane.xlu0 %1294
        %1296 = vmax.xlane.f32.xlu0 %v1263
        %v1297 = vpop.xlane.xlu0 %1296
        %1298 = vmax.xlane.f32.xlu0 %v1264
        %v1299 = vpop.xlane.xlu0 %1298
        %1300 = vmax.xlane.f32.xlu0 %v1265
        %v1301 = vpop.xlane.xlu0 %1300
        %1302 = vmax.xlane.f32.xlu0 %v1266
        %v1303 = vpop.xlane.xlu0 %1302
        %1304 = vmax.xlane.f32.xlu0 %v1267
        %v1305 = vpop.xlane.xlu0 %1304
        %1306 = vmax.xlane.f32.xlu0 %v1268
        %v1307 = vpop.xlane.xlu0 %1306
        %1308 = vmax.xlane.f32.xlu0 %v1269
        %v1309 = vpop.xlane.xlu0 %1308
        %1310 = vmax.xlane.f32.xlu0 %v1270
        %v1311 = vpop.xlane.xlu0 %1310
        %1312 = vmax.xlane.f32.xlu0 %v1271
        %v1313 = vpop.xlane.xlu0 %1312
        %1314 = vmax.xlane.f32.xlu0 %v1272
        %v1315 = vpop.xlane.xlu0 %1314
        %1316 = vmax.xlane.f32.xlu0 %v1273
        %v1317 = vpop.xlane.xlu0 %1316
        %1318 = vmax.xlane.f32.xlu0 %v1274
        %v1319 = vpop.xlane.xlu0 %1318
        %1320 = vmax.xlane.f32.xlu0 %v1275
        %v1321 = vpop.xlane.xlu0 %1320
        %1322 = vmax.xlane.f32.xlu0 %v1276
        %v1323 = vpop.xlane.xlu0 %1322
        %1324 = vmax.xlane.f32.xlu0 %v1277
        %v1325 = vpop.xlane.xlu0 %1324
        %1326 = vmax.xlane.f32.xlu0 %v1278
        %v1327 = vpop.xlane.xlu0 %1326
        %1328 = vmax.xlane.f32.xlu0 %v1279
        %v1329 = vpop.xlane.xlu0 %1328
        %1330 = vmax.xlane.f32.xlu0 %v1280
        %v1331 = vpop.xlane.xlu0 %1330
        %1332 = vmax.xlane.f32.xlu0 %v1281
        %v1333 = vpop.xlane.xlu0 %1332
        %1334 = vmax.xlane.f32.xlu0 %v1282
        %v1335 = vpop.xlane.xlu0 %1334
        %1336 = vmax.xlane.f32.xlu0 %v1283
        %v1337 = vpop.xlane.xlu0 %1336
        %1338 = vmax.xlane.f32.xlu0 %v1284
        %v1339 = vpop.xlane.xlu0 %1338
        %1340 = vmax.xlane.f32.xlu0 %v1285
        %v1341 = vpop.xlane.xlu0 %1340
        %1342 = vmax.xlane.f32.xlu0 %v1286
        %v1343 = vpop.xlane.xlu0 %1342
        %1344 = vmax.xlane.f32.xlu0 %v1287
        %v1345 = vpop.xlane.xlu0 %1344
        %1346 = vmax.xlane.f32.xlu0 %v1288
        %v1347 = vpop.xlane.xlu0 %1346
        %1348 = vmax.xlane.f32.xlu0 %v1289
        %v1349 = vpop.xlane.xlu0 %1348
        %1350 = vmax.xlane.f32.xlu0 %v1290
        %v1351 = vpop.xlane.xlu0 %1350
        %1352 = vmax.xlane.f32.xlu0 %v1291
        %v1353 = vpop.xlane.xlu0 %1352
        %1354 = vmax.xlane.f32.xlu0 %v1292
        %v1355 = vpop.xlane.xlu0 %1354
        %1356 = vmax.xlane.f32.xlu0 %v1293
        %v1357 = vpop.xlane.xlu0 %1356
        %v1358 = vsub.f32 %v1262, %v1295
        %v1359 = vsub.f32 %v1263, %v1297
        %v1360 = vsub.f32 %v1264, %v1299
        %v1361 = vsub.f32 %v1265, %v1301
        %v1362 = vsub.f32 %v1266, %v1303
        %v1363 = vsub.f32 %v1267, %v1305
        %v1364 = vsub.f32 %v1268, %v1307
        %v1365 = vsub.f32 %v1269, %v1309
        %v1366 = vsub.f32 %v1270, %v1311
        %v1367 = vsub.f32 %v1271, %v1313
        %v1368 = vsub.f32 %v1272, %v1315
        %v1369 = vsub.f32 %v1273, %v1317
        %v1370 = vsub.f32 %v1274, %v1319
        %v1371 = vsub.f32 %v1275, %v1321
        %v1372 = vsub.f32 %v1276, %v1323
        %v1373 = vsub.f32 %v1277, %v1325
        %v1374 = vsub.f32 %v1278, %v1327
        %v1375 = vsub.f32 %v1279, %v1329
        %v1376 = vsub.f32 %v1280, %v1331
        %v1377 = vsub.f32 %v1281, %v1333
        %v1378 = vsub.f32 %v1282, %v1335
        %v1379 = vsub.f32 %v1283, %v1337
        %v1380 = vsub.f32 %v1284, %v1339
        %v1381 = vsub.f32 %v1285, %v1341
        %v1382 = vsub.f32 %v1286, %v1343
        %v1383 = vsub.f32 %v1287, %v1345
        %v1384 = vsub.f32 %v1288, %v1347
        %v1385 = vsub.f32 %v1289, %v1349
        %v1386 = vsub.f32 %v1290, %v1351
        %v1387 = vsub.f32 %v1291, %v1353
        %v1388 = vsub.f32 %v1292, %v1355
        %v1389 = vsub.f32 %v1293, %v1357
        %v1390 = vmul.f32 %v1358, 1.442695
        %v1391 = vpow.pop %v1390
        %v1392 = vmul.f32 %v1359, 1.442695
        %v1393 = vpow.pop %v1392
        %v1394 = vmul.f32 %v1360, 1.442695
        %v1395 = vpow.pop %v1394
        %v1396 = vmul.f32 %v1361, 1.442695
        %v1397 = vpow.pop %v1396
        %v1398 = vmul.f32 %v1362, 1.442695
        %v1399 = vpow.pop %v1398
        %v1400 = vmul.f32 %v1363, 1.442695
        %v1401 = vpow.pop %v1400
        %v1402 = vmul.f32 %v1364, 1.442695
        %v1403 = vpow.pop %v1402
        %v1404 = vmul.f32 %v1365, 1.442695
        %v1405 = vpow.pop %v1404
        %v1406 = vmul.f32 %v1366, 1.442695
        %v1407 = vpow.pop %v1406
        %v1408 = vmul.f32 %v1367, 1.442695
        %v1409 = vpow.pop %v1408
        %v1410 = vmul.f32 %v1368, 1.442695
        %v1411 = vpow.pop %v1410
        %v1412 = vmul.f32 %v1369, 1.442695
        %v1413 = vpow.pop %v1412
        %v1414 = vmul.f32 %v1370, 1.442695
        %v1415 = vpow.pop %v1414
        %v1416 = vmul.f32 %v1371, 1.442695
        %v1417 = vpow.pop %v1416
        %v1418 = vmul.f32 %v1372, 1.442695
        %v1419 = vpow.pop %v1418
        %v1420 = vmul.f32 %v1373, 1.442695
        %v1421 = vpow.pop %v1420
        %v1422 = vmul.f32 %v1374, 1.442695
        %v1423 = vpow.pop %v1422
        %v1424 = vmul.f32 %v1375, 1.442695
        %v1425 = vpow.pop %v1424
        %v1426 = vmul.f32 %v1376, 1.442695
        %v1427 = vpow.pop %v1426
        %v1428 = vmul.f32 %v1377, 1.442695
        %v1429 = vpow.pop %v1428
        %v1430 = vmul.f32 %v1378, 1.442695
        %v1431 = vpow.pop %v1430
        %v1432 = vmul.f32 %v1379, 1.442695
        %v1433 = vpow.pop %v1432
        %v1434 = vmul.f32 %v1380, 1.442695
        %v1435 = vpow.pop %v1434
        %v1436 = vmul.f32 %v1381, 1.442695
        %v1437 = vpow.pop %v1436
        %v1438 = vmul.f32 %v1382, 1.442695
        %v1439 = vpow.pop %v1438
        %v1440 = vmul.f32 %v1383, 1.442695
        %v1441 = vpow.pop %v1440
        %v1442 = vmul.f32 %v1384, 1.442695
        %v1443 = vpow.pop %v1442
        %v1444 = vmul.f32 %v1385, 1.442695
        %v1445 = vpow.pop %v1444
        %v1446 = vmul.f32 %v1386, 1.442695
        %v1447 = vpow.pop %v1446
        %v1448 = vmul.f32 %v1387, 1.442695
        %v1449 = vpow.pop %v1448
        %v1450 = vmul.f32 %v1388, 1.442695
        %v1451 = vpow.pop %v1450
        %v1452 = vmul.f32 %v1389, 1.442695
        %v1453 = vpow.pop %v1452
        %1454 = vadd.xlane.f32.xlu0 %v1391
        %v1455 = vpop.xlane.xlu0 %1454
        %1456 = vadd.xlane.f32.xlu0 %v1393
        %v1457 = vpop.xlane.xlu0 %1456
        %1458 = vadd.xlane.f32.xlu0 %v1395
        %v1459 = vpop.xlane.xlu0 %1458
        %1460 = vadd.xlane.f32.xlu0 %v1397
        %v1461 = vpop.xlane.xlu0 %1460
        %1462 = vadd.xlane.f32.xlu0 %v1399
        %v1463 = vpop.xlane.xlu0 %1462
        %1464 = vadd.xlane.f32.xlu0 %v1401
        %v1465 = vpop.xlane.xlu0 %1464
        %1466 = vadd.xlane.f32.xlu0 %v1403
        %v1467 = vpop.xlane.xlu0 %1466
        %1468 = vadd.xlane.f32.xlu0 %v1405
        %v1469 = vpop.xlane.xlu0 %1468
        %1470 = vadd.xlane.f32.xlu0 %v1407
        %v1471 = vpop.xlane.xlu0 %1470
        %1472 = vadd.xlane.f32.xlu0 %v1409
        %v1473 = vpop.xlane.xlu0 %1472
        %1474 = vadd.xlane.f32.xlu0 %v1411
        %v1475 = vpop.xlane.xlu0 %1474
        %1476 = vadd.xlane.f32.xlu0 %v1413
        %v1477 = vpop.xlane.xlu0 %1476
        %1478 = vadd.xlane.f32.xlu0 %v1415
        %v1479 = vpop.xlane.xlu0 %1478
        %1480 = vadd.xlane.f32.xlu0 %v1417
        %v1481 = vpop.xlane.xlu0 %1480
        %1482 = vadd.xlane.f32.xlu0 %v1419
        %v1483 = vpop.xlane.xlu0 %1482
        %1484 = vadd.xlane.f32.xlu0 %v1421
        %v1485 = vpop.xlane.xlu0 %1484
        %1486 = vadd.xlane.f32.xlu0 %v1423
        %v1487 = vpop.xlane.xlu0 %1486
        %1488 = vadd.xlane.f32.xlu0 %v1425
        %v1489 = vpop.xlane.xlu0 %1488
        %1490 = vadd.xlane.f32.xlu0 %v1427
        %v1491 = vpop.xlane.xlu0 %1490
        %1492 = vadd.xlane.f32.xlu0 %v1429
        %v1493 = vpop.xlane.xlu0 %1492
        %1494 = vadd.xlane.f32.xlu0 %v1431
        %v1495 = vpop.xlane.xlu0 %1494
        %1496 = vadd.xlane.f32.xlu0 %v1433
        %v1497 = vpop.xlane.xlu0 %1496
        %1498 = vadd.xlane.f32.xlu0 %v1435
        %v1499 = vpop.xlane.xlu0 %1498
        %1500 = vadd.xlane.f32.xlu0 %v1437
        %v1501 = vpop.xlane.xlu0 %1500
        %1502 = vadd.xlane.f32.xlu0 %v1439
        %v1503 = vpop.xlane.xlu0 %1502
        %1504 = vadd.xlane.f32.xlu0 %v1441
        %v1505 = vpop.xlane.xlu0 %1504
        %1506 = vadd.xlane.f32.xlu0 %v1443
        %v1507 = vpop.xlane.xlu0 %1506
        %1508 = vadd.xlane.f32.xlu0 %v1445
        %v1509 = vpop.xlane.xlu0 %1508
        %1510 = vadd.xlane.f32.xlu0 %v1447
        %v1511 = vpop.xlane.xlu0 %1510
        %1512 = vadd.xlane.f32.xlu0 %v1449
        %v1513 = vpop.xlane.xlu0 %1512
        %1514 = vadd.xlane.f32.xlu0 %v1451
        %v1515 = vpop.xlane.xlu0 %1514
        %1516 = vadd.xlane.f32.xlu0 %v1453
        %v1517 = vpop.xlane.xlu0 %1516
        %v1518 = vrcp.pop %v1455
        %v1519 = vrcp.pop %v1457
        %v1520 = vrcp.pop %v1459
        %v1521 = vrcp.pop %v1461
        %v1522 = vrcp.pop %v1463
        %v1523 = vrcp.pop %v1465
        %v1524 = vrcp.pop %v1467
        %v1525 = vrcp.pop %v1469
        %v1526 = vrcp.pop %v1471
        %v1527 = vrcp.pop %v1473
        %v1528 = vrcp.pop %v1475
        %v1529 = vrcp.pop %v1477
        %v1530 = vrcp.pop %v1479
        %v1531 = vrcp.pop %v1481
        %v1532 = vrcp.pop %v1483
        %v1533 = vrcp.pop %v1485
        %v1534 = vrcp.pop %v1487
        %v1535 = vrcp.pop %v1489
        %v1536 = vrcp.pop %v1491
        %v1537 = vrcp.pop %v1493
        %v1538 = vrcp.pop %v1495
        %v1539 = vrcp.pop %v1497
        %v1540 = vrcp.pop %v1499
        %v1541 = vrcp.pop %v1501
        %v1542 = vrcp.pop %v1503
        %v1543 = vrcp.pop %v1505
        %v1544 = vrcp.pop %v1507
        %v1545 = vrcp.pop %v1509
        %v1546 = vrcp.pop %v1511
        %v1547 = vrcp.pop %v1513
        %v1548 = vrcp.pop %v1515
        %v1549 = vrcp.pop %v1517
        %v1550 = vmul.f32 %v1391, %v1518
        %v1551 = vmul.f32 %v1393, %v1519
        %v1552 = vmul.f32 %v1395, %v1520
        %v1553 = vmul.f32 %v1397, %v1521
        %v1554 = vmul.f32 %v1399, %v1522
        %v1555 = vmul.f32 %v1401, %v1523
        %v1556 = vmul.f32 %v1403, %v1524
        %v1557 = vmul.f32 %v1405, %v1525
        %v1558 = vmul.f32 %v1407, %v1526
        %v1559 = vmul.f32 %v1409, %v1527
        %v1560 = vmul.f32 %v1411, %v1528
        %v1561 = vmul.f32 %v1413, %v1529
        %v1562 = vmul.f32 %v1415, %v1530
        %v1563 = vmul.f32 %v1417, %v1531
        %v1564 = vmul.f32 %v1419, %v1532
        %v1565 = vmul.f32 %v1421, %v1533
        %v1566 = vmul.f32 %v1423, %v1534
        %v1567 = vmul.f32 %v1425, %v1535
        %v1568 = vmul.f32 %v1427, %v1536
        %v1569 = vmul.f32 %v1429, %v1537
        %v1570 = vmul.f32 %v1431, %v1538
        %v1571 = vmul.f32 %v1433, %v1539
        %v1572 = vmul.f32 %v1435, %v1540
        %v1573 = vmul.f32 %v1437, %v1541
        %v1574 = vmul.f32 %v1439, %v1542
        %v1575 = vmul.f32 %v1441, %v1543
        %v1576 = vmul.f32 %v1443, %v1544
        %v1577 = vmul.f32 %v1445, %v1545
        %v1578 = vmul.f32 %v1447, %v1546
        %v1579 = vmul.f32 %v1449, %v1547
        %v1580 = vmul.f32 %v1451, %v1548
        %v1581 = vmul.f32 %v1453, %v1549
        %v1582 = vpack.c.bf16 %v1551, %v1550
        %v1583 = vpack.c.bf16 %v1553, %v1552
        %v1584 = vpack.c.bf16 %v1555, %v1554
        %v1585 = vpack.c.bf16 %v1557, %v1556
        %v1586 = vpack.c.bf16 %v1559, %v1558
        %v1587 = vpack.c.bf16 %v1561, %v1560
        %v1588 = vpack.c.bf16 %v1563, %v1562
        %v1589 = vpack.c.bf16 %v1565, %v1564
        %v1590 = vpack.c.bf16 %v1567, %v1566
        %v1591 = vpack.c.bf16 %v1569, %v1568
        %v1592 = vpack.c.bf16 %v1571, %v1570
        %v1593 = vpack.c.bf16 %v1573, %v1572
        %v1594 = vpack.c.bf16 %v1575, %v1574
        %v1595 = vpack.c.bf16 %v1577, %v1576
        %v1596 = vpack.c.bf16 %v1579, %v1578
        %v1597 = vpack.c.bf16 %v1581, %v1580
        %v1614 = vunpack.c.l.b16 %v1582
        %v1615 = vunpack.c.h.b16 %v1582
        %v1616 = vunpack.c.l.b16 %v1583
        %v1617 = vunpack.c.h.b16 %v1583
        %v1618 = vunpack.c.l.b16 %v1584
        %v1619 = vunpack.c.h.b16 %v1584
        %v1620 = vunpack.c.l.b16 %v1585
        %v1621 = vunpack.c.h.b16 %v1585
        %v1622 = vunpack.c.l.b16 %v1586
        %v1623 = vunpack.c.h.b16 %v1586
        %v1624 = vunpack.c.l.b16 %v1587
        %v1625 = vunpack.c.h.b16 %v1587
        %v1626 = vunpack.c.l.b16 %v1588
        %v1627 = vunpack.c.h.b16 %v1588
        %v1628 = vunpack.c.l.b16 %v1589
        %v1629 = vunpack.c.h.b16 %v1589
        %v1630 = vunpack.c.l.b16 %v1590
        %v1631 = vunpack.c.h.b16 %v1590
        %v1632 = vunpack.c.l.b16 %v1591
        %v1633 = vunpack.c.h.b16 %v1591
        %v1634 = vunpack.c.l.b16 %v1592
        %v1635 = vunpack.c.h.b16 %v1592
        %v1636 = vunpack.c.l.b16 %v1593
        %v1637 = vunpack.c.h.b16 %v1593
        %v1638 = vunpack.c.l.b16 %v1594
        %v1639 = vunpack.c.h.b16 %v1594
        %v1640 = vunpack.c.l.b16 %v1595
        %v1641 = vunpack.c.h.b16 %v1595
        %v1642 = vunpack.c.l.b16 %v1596
        %v1643 = vunpack.c.h.b16 %v1596
        %v1644 = vunpack.c.l.b16 %v1597
        %v1645 = vunpack.c.h.b16 %v1597
        %v1646 = vpack.c.b16 %v1614, %v1614
        %v1647 = vpack.c.b16 %v1615, %v1615
        %v1648 = vpack.c.b16 %v1616, %v1616
        %v1649 = vpack.c.b16 %v1617, %v1617
        %v1650 = vpack.c.b16 %v1618, %v1618
        %v1651 = vpack.c.b16 %v1619, %v1619
        %v1652 = vpack.c.b16 %v1620, %v1620
        %v1653 = vpack.c.b16 %v1621, %v1621
        %v1654 = vpack.c.b16 %v1622, %v1622
        %v1655 = vpack.c.b16 %v1623, %v1623
        %v1656 = vpack.c.b16 %v1624, %v1624
        %v1657 = vpack.c.b16 %v1625, %v1625
        %v1658 = vpack.c.b16 %v1626, %v1626
        %v1659 = vpack.c.b16 %v1627, %v1627
        %v1660 = vpack.c.b16 %v1628, %v1628
        %v1661 = vpack.c.b16 %v1629, %v1629
        %v1662 = vpack.c.b16 %v1630, %v1630
        %v1663 = vpack.c.b16 %v1631, %v1631
        %v1664 = vpack.c.b16 %v1632, %v1632
        %v1665 = vpack.c.b16 %v1633, %v1633
        %v1666 = vpack.c.b16 %v1634, %v1634
        %v1667 = vpack.c.b16 %v1635, %v1635
        %v1668 = vpack.c.b16 %v1636, %v1636
        %v1669 = vpack.c.b16 %v1637, %v1637
        %v1670 = vpack.c.b16 %v1638, %v1638
        %v1671 = vpack.c.b16 %v1639, %v1639
        %v1672 = vpack.c.b16 %v1640, %v1640
        %v1673 = vpack.c.b16 %v1641, %v1641
        %v1674 = vpack.c.b16 %v1642, %v1642
        %v1675 = vpack.c.b16 %v1643, %v1643
        %v1676 = vpack.c.b16 %v1644, %v1644
        %v1677 = vpack.c.b16 %v1645, %v1645
        %1710 = vst [vmem:[%s311] sm:$0xf] %v1646
        %1711 = vst [vmem:[%s311 + $0x4] sm:$0xf] %v1647
        %1712 = vst [vmem:[%s311 + $0x8] sm:$0xf] %v1648
        %1713 = vst [vmem:[%s311 + $0xc] sm:$0xf] %v1649
        %1714 = vst [vmem:[%s311 + $0x10] sm:$0xf] %v1650
        %1715 = vst [vmem:[%s311 + $0x14] sm:$0xf] %v1651
        %1716 = vst [vmem:[%s311 + $0x18] sm:$0xf] %v1652
        %1717 = vst [vmem:[%s311 + $0x1c] sm:$0xf] %v1653
        %1718 = vst [vmem:[%s311 + $0x20] sm:$0xf] %v1654
        %1719 = vst [vmem:[%s311 + $0x24] sm:$0xf] %v1655
        %1720 = vst [vmem:[%s311 + $0x28] sm:$0xf] %v1656
        %1721 = vst [vmem:[%s311 + $0x2c] sm:$0xf] %v1657
        %1722 = vst [vmem:[%s311 + $0x30] sm:$0xf] %v1658
        %1723 = vst [vmem:[%s311 + $0x34] sm:$0xf] %v1659
        %1724 = vst [vmem:[%s311 + $0x38] sm:$0xf] %v1660
        %1725 = vst [vmem:[%s311 + $0x3c] sm:$0xf] %v1661
        %1726 = vst [vmem:[%s311 + $0x40] sm:$0xf] %v1662
        %1727 = vst [vmem:[%s311 + $0x44] sm:$0xf] %v1663
        %1728 = vst [vmem:[%s311 + $0x48] sm:$0xf] %v1664
        %1729 = vst [vmem:[%s311 + $0x4c] sm:$0xf] %v1665
        %1730 = vst [vmem:[%s311 + $0x50] sm:$0xf] %v1666
        %1731 = vst [vmem:[%s311 + $0x54] sm:$0xf] %v1667
        %1732 = vst [vmem:[%s311 + $0x58] sm:$0xf] %v1668
        %1733 = vst [vmem:[%s311 + $0x5c] sm:$0xf] %v1669
        %1734 = vst [vmem:[%s311 + $0x60] sm:$0xf] %v1670
        %1735 = vst [vmem:[%s311 + $0x64] sm:$0xf] %v1671
        %1736 = vst [vmem:[%s311 + $0x68] sm:$0xf] %v1672
        %1737 = vst [vmem:[%s311 + $0x6c] sm:$0xf] %v1673
        %1738 = vst [vmem:[%s311 + $0x70] sm:$0xf] %v1674
        %1739 = vst [vmem:[%s311 + $0x74] sm:$0xf] %v1675
        %1740 = vst [vmem:[%s311 + $0x78] sm:$0xf] %v1676
        %1741 = vst [vmem:[%s311 + $0x7c] sm:$0xf] %v1677
        %s1742 = sand.u32 %s202, 1
        %s1743 = scalar_lea.sflag [#allocation3], %s1742
        %s1744 = sand.u32 %s202, 1
        %s1745 = smul.addr %s1744, 128
        %s1746 = scalar_lea.vmem [#allocation2], %s1745
        // Predicated region
        $region49: #{tpu_custom_call.1} parent=47 // pred_check
          %p1747 = pneg %p212
        $region50: #{tpu_custom_call.1} parent=47 // pred_check_branch
          %1749 = sbr.rel (%p1747) target = $region52
        $region51: #{tpu_custom_call.1} parent=47 // pred_region
          %s1750 = smul.u32 32, %s26
          %s1752 = ssub.s32 2048, 2048
          %1753 = vsyncadd %s1743, %s1752
          %s1754 = smul.addr %s25, 32
          %s1755 = sadd.s32 %s1750, %s1754
          %s1756 = smul.addr %s1755, 64
          %s1757 = scalar_lea.hbm %s7, %s1756
          %s1758 = sshll.u32 %s1746, 4
          %s1759 = int_to_ptr.vmem [resolvable:$true] %s1758
          %1764 = dma.vmem_to_hbm [thread:$0]  %s1759, 2048, %s1757, %s1743, 64, 64, 4
        $region52: #{tpu_custom_call.1} parent=47 // pred_fallthru
          _
      $region48: #{tpu_custom_call.1} parent=5 // pred_fallthru
        _
      %p1765 = scmp.le.s32.totalorder 2, %s16
      // Predicated region
      $region53: #{tpu_custom_call.1} parent=5 // pred_check
        %p1766 = pneg %p1765
      $region54: #{tpu_custom_call.1} parent=5 // pred_check_branch
        %1768 = sbr.rel (%p1766) target = $region56
      $region55: #{tpu_custom_call.1} parent=5 // pred_region
        %s1769 = ssub.s32 %s16, 2
        // Predicated region
        $region57: #{tpu_custom_call.1} parent=55 // pred_check
          %p1770 = pneg %p218
        $region58: #{tpu_custom_call.1} parent=55 // pred_check_branch
          %1772 = sbr.rel (%p1770) target = $region60
        $region59: #{tpu_custom_call.1} parent=55 // pred_region
          %s1773 = sand.u32 %s203, 1
          %s1774 = scalar_lea.sflag [#allocation3], %s1773
          %s1775 = sand.u32 %s203, 1
          %s1776 = smul.addr %s1775, 128
          %s1777 = scalar_lea.vmem [#allocation2], %s1776
          %1778 = dma.done %s1774, 2048
        $region60: #{tpu_custom_call.1} parent=55 // pred_fallthru
          _
      $region56: #{tpu_custom_call.1} parent=5 // pred_fallthru
        _
    $region6: #{tpu_custom_call.1} parent=1 // loop_footer
      %s20 = sadd.s32 1, %s16
    $region7: #{tpu_custom_call.1} parent=1 // loop_footer_branch
      %15 = sbr.rel target = $region3
    $region8: #{tpu_custom_call.1} parent=1 // loop_exit
      _
    %1779 = vsyncpa [#allocation3], 1
    %s1780 = scalar_lea.sflag [#allocation3], 1
    %1781 = vsyncpa %s1780, 1

</llo_original>
